<compile_context>
chip_gen: v6e
topology: v6e:2x2x1
jax: 0.10.0
libtpu: 0.0.40
codegen_flags: <defaults>
</compile_context>

<pallas_src>
import functools

import jax
import jax.numpy as jnp
from jax import lax
from jax.experimental import pallas as pl
from jax.experimental.pallas import tpu as pltpu


def middle_block_kernel(x_ref, w1t_ref, s1_ref, b1_ref,
                        w2t_ref, s2_ref, b2_ref,
                        sew1_ref, seb1_ref, sew2t_ref, seb2_ref,
                        out_ref,
                        pad_ref, p_ref,
                        *, H, W, Bt, Cin, C1, C2):
    bf16 = jnp.bfloat16
    HW = H * W
    pad_w = W + 1
    Cmax = pad_ref.shape[1]

    # Lane masks for the 3x3 taps that wrap across image rows in the flattened
    # (C, H*W) layout: dx==0 reads garbage at x==0, dx==2 at x==W-1.
    col = lax.broadcasted_iota(jnp.int32, (1, HW), 1) % W
    keep_l = col != 0
    keep_r = col != (W - 1)

    # Zero both halo bands of every padded image band once per step.  The
    # interiors are fully overwritten below and never touch the halo, so the
    # same zeroed halos serve both convs.  (Re-zeroing every step keeps the
    # kernel correct when the parallel batch axis is sharded across cores.)
    zeros_halo = jnp.zeros((Bt, Cmax, pad_w), bf16)
    pad_ref[:, :, 0:pad_w] = zeros_halo
    pad_ref[:, :, pad_w + HW:pad_w + HW + pad_w] = zeros_halo

    def conv3x3_bn_relu(C, get_interior, wt_ref, scale_ref, shift_ref):
        # Fill the per-image padded bands and the (9*C, Bt*HW) im2col buffer:
        # each tap is a shifted lane window of the flattened padded image;
        # left/right row-wrap taps are masked to zero with selects.
        for b in range(Bt):
            pad_ref[b, 0:C, pad_w:pad_w + HW] = get_interior(b)
            for t in range(9):
                dy, dx = divmod(t, 3)
                off = dy * W + dx
                tap = pad_ref[b, 0:C, off:off + HW]
                if dx == 0:
                    tap = jnp.where(keep_l, tap, jnp.zeros_like(tap))
                elif dx == 2:
                    tap = jnp.where(keep_r, tap, jnp.zeros_like(tap))
                p_ref[t * C:(t + 1) * C, b * HW:(b + 1) * HW] = tap

        # Single MXU matmul per conv: (Cout, 9*C) x (9*C, Bt*HW).
        acc = jnp.dot(wt_ref[...], p_ref[0:9 * C, :],
                      preferred_element_type=jnp.float32)
        # Folded conv-bias + BatchNorm (inference) + ReLU epilogue in f32.
        return jnp.maximum(acc * scale_ref[...] + shift_ref[...], 0.0)

    # conv1 + BN1 + ReLU, then conv2 + BN2 + ReLU (bf16 MXU inputs, f32 acc).
    h1 = conv3x3_bn_relu(Cin, lambda b: x_ref[b], w1t_ref, s1_ref, b1_ref)
    h1 = h1.astype(bf16)
    h2 = conv3x3_bn_relu(C1, lambda b: h1[:, b * HW:(b + 1) * HW],
                         w2t_ref, s2_ref, b2_ref)          # (C2, Bt*HW) f32

    # SqueezeExcitation per image (global avg pool -> FC -> ReLU -> FC ->
    # sigmoid), fused with the single lane-dense output store per image.
    # Tiny (C2 x C2/8) MLP, done in f32 on the VPU/XLU (no MXU needed).
    for b in range(Bt):
        h2b = h2[:, b * HW:(b + 1) * HW]                                     # (C2, HW)
        y = jnp.mean(h2b, axis=1, keepdims=True)                             # (C2, 1)
        z = jnp.sum(sew1_ref[...] * y, axis=0, keepdims=True) + seb1_ref[...]
        z = jnp.maximum(z, 0.0)                                              # (1, Ch)
        s = jnp.sum(sew2t_ref[...] * z, axis=1, keepdims=True) + seb2_ref[...]
        s = jax.nn.sigmoid(s)                                                # (C2, 1)
        out_ref[b] = h2b * s


def _pick_block_batch(B, HW, target_lanes=1024):
    """Largest divisor of B such that Bt*HW is ~target lanes, keeping >=2 grid
    steps when possible so the parallel axis can use both v7x TensorCores."""
    want = max(1, target_lanes // HW)
    cap = max(1, min(want, B // 2 if B >= 2 else 1))
    for bt in range(cap, 0, -1):
        if B % bt == 0:
            return bt
    return 1


def middle_block_pallas(x_nchw, params, *, block_batch=None):
    """MiddleBlock.forward: returns (conv_out in NCHW, None)."""
    (w1, s1, b1, w2, s2, b2, sew1, seb1, sew2, seb2) = params
    B, Cin, H, W = x_nchw.shape
    C1 = w1.shape[-1]
    C2 = w2.shape[-1]
    Ch = sew1.shape[-1]
    HW = H * W
    PW = (H + 2) * W + 2            # flattened padded image width per band
    Cmax = max(Cin, C1)
    bf16 = jnp.bfloat16

    Bt = block_batch if block_batch is not None else _pick_block_batch(B, HW)
    assert B % Bt == 0, (B, Bt)

    # Channels-on-sublanes / pixels-on-lanes layout: x stays NCHW (flattened +
    # cast to bf16); conv weights are reshaped/transposed on the host for the
    # (Cout, 9*Cin) x (9*Cin, Bt*HW) im2col matmul.
    x_flat = x_nchw.reshape(B, Cin, HW).astype(bf16)
    w1t = jnp.transpose(w1.reshape(9 * Cin, C1)).astype(bf16)    # (C1, 9*Cin)
    w2t = jnp.transpose(w2.reshape(9 * C1, C2)).astype(bf16)     # (C2, 9*C1)
    s1c, b1c = jnp.transpose(s1), jnp.transpose(b1)              # (C1, 1) f32
    s2c, b2c = jnp.transpose(s2), jnp.transpose(b2)              # (C2, 1) f32
    sew2t = jnp.transpose(sew2)                                  # (C2, Ch) f32
    seb2c = jnp.transpose(seb2)                                  # (C2, 1) f32

    kernel = functools.partial(middle_block_kernel,
                               H=H, W=W, Bt=Bt, Cin=Cin, C1=C1, C2=C2)

    def full(*shape):
        return pl.BlockSpec(shape, lambda b: (0,) * len(shape))

    cost = pl.CostEstimate(
        flops=2 * B * HW * 9 * (Cin * C1 + C1 * C2) + 4 * B * C2 * Ch,
        transcendentals=B * C2,
        bytes_accessed=(x_flat.size * 2 + w1t.size * 2 + w2t.size * 2
                        + B * C2 * HW * 4),
    )

    # VMEM budget (double-buffered input/output blocks + weights + scratch),
    # with headroom; capped so it also fits v7x's 64 MiB physical VMEM.
    in_block = Bt * Cin * HW * 2
    out_block = Bt * C2 * HW * 4
    w_bytes = (w1t.size + w2t.size) * 2 + (s1c.size + b1c.size + s2c.size
               + b2c.size + sew1.size + seb1.size + sew2t.size + seb2c.size) * 4
    scratch_bytes = Bt * Cmax * PW * 2 + 9 * Cmax * Bt * HW * 2
    vmem_needed = 2 * (in_block + out_block + w_bytes) + scratch_bytes
    vmem_limit = int(min(32 * 2**20, max(16 * 2**20, 4 * vmem_needed)))

    out = pl.pallas_call(
        kernel,
        out_shape=jax.ShapeDtypeStruct((B, C2, HW), jnp.float32),
        grid=(B // Bt,),
        in_specs=[
            pl.BlockSpec((Bt, Cin, HW), lambda b: (b, 0, 0)),  # x, Bt images/step
            full(C1, 9 * Cin),                                 # conv1 weight (im2col, transposed)
            full(C1, 1), full(C1, 1),                          # BN1 scale / shift
            full(C2, 9 * C1),                                  # conv2 weight
            full(C2, 1), full(C2, 1),                          # BN2 scale / shift
            full(C2, Ch), full(1, Ch),                         # SE fc1 W, b
            full(C2, Ch), full(C2, 1),                         # SE fc2 W^T, b^T
        ],
        out_specs=pl.BlockSpec((Bt, C2, HW), lambda b: (b, 0, 0)),
        scratch_shapes=[
            pltpu.VMEM((Bt, Cmax, PW), bf16),       # shared flattened padded bands
            pltpu.VMEM((9 * Cmax, Bt * HW), bf16),  # shared im2col patch buffer
        ],
        compiler_params=pltpu.CompilerParams(
            dimension_semantics=("parallel",),
            vmem_limit_bytes=vmem_limit),
        cost_estimate=cost,
    )(x_flat, w1t, s1c, b1c, w2t, s2c, b2c, sew1, seb1, sew2t, seb2c)

    return out.reshape(B, C2, H, W), None


# ---------------------------------------------------------------------------
# Deterministic parameter construction (shapes follow the PyTorch __init__).
# ---------------------------------------------------------------------------
def make_params(key, in_size, out_size, ratio=8, eps=1e-5):
    ks = jax.random.split(key, 16)
    kidx = iter(range(16))

    def nrm(shape, scale=0.1):
        return scale * jax.random.normal(ks[next(kidx)], shape, jnp.float32)

    def pos(shape):
        return 0.5 + jax.random.uniform(ks[next(kidx)], shape, jnp.float32)

    def fold_bn(conv_bias, gamma, beta, mean, var):
        scale = gamma / jnp.sqrt(var + eps)
        shift = (conv_bias - mean) * scale + beta
        return scale.reshape(1, -1), shift.reshape(1, -1)

    # conv1: Conv2d(in_size, out_size, 3) + BatchNorm2d(out_size)
    w1 = nrm((3, 3, in_size, out_size))          # HWIO
    b1 = nrm((out_size,))
    s1, sh1 = fold_bn(b1, pos((out_size,)), nrm((out_size,)),
                      nrm((out_size,)), pos((out_size,)))

    # conv2: Conv2d(out_size, out_size, 3) + BatchNorm2d(out_size)
    w2 = nrm((3, 3, out_size, out_size))
    b2 = nrm((out_size,))
    s2, sh2 = fold_bn(b2, pos((out_size,)), nrm((out_size,)),
                      nrm((out_size,)), pos((out_size,)))

    # SqueezeExcitation(out_size, 8): Linear(C, C//8), Linear(C//8, C)
    hid = out_size // ratio
    sew1 = nrm((out_size, hid), 0.3)
    seb1 = nrm((hid,), 0.3).reshape(1, hid)
    sew2 = nrm((hid, out_size), 0.3)
    seb2 = nrm((out_size,), 0.3).reshape(1, out_size)

    return (w1, s1, sh1, w2, s2, sh2, sew1, seb1, sew2, seb2)


# ---------------------------------------------------------------------------
# Plain-JAX reference (mirrors the kernel's bf16 rounding of MXU inputs).
# ---------------------------------------------------------------------------
def _q(a):
    return a.astype(jnp.bfloat16).astype(jnp.float32)


def middle_block_ref(x_nchw, params):
    (w1, s1, b1, w2, s2, b2, sew1, seb1, sew2, seb2) = params
    x = jnp.transpose(x_nchw, (0, 2, 3, 1))
    dn = ('NHWC', 'HWIO', 'NHWC')

    h = lax.conv_general_dilated(_q(x), _q(w1), (1, 1), 'SAME',
                                 dimension_numbers=dn,
                                 precision=lax.Precision.HIGHEST)
    h = jnp.maximum(h * s1[0] + b1[0], 0.0)
    h = lax.conv_general_dilated(_q(h), _q(w2), (1, 1), 'SAME',
                                 dimension_numbers=dn,
                                 precision=lax.Precision.HIGHEST)
    h = jnp.maximum(h * s2[0] + b2[0], 0.0)

    y = jnp.mean(h, axis=(1, 2))
    y = jnp.maximum(jnp.matmul(y, sew1, precision='highest') + seb1[0], 0.0)
    y = jax.nn.sigmoid(jnp.matmul(y, sew2, precision='highest') + seb2[0])
    h = h * y[:, None, None, :]
    return jnp.transpose(h, (0, 3, 1, 2)), None


if __name__ == "__main__":
    key = jax.random.PRNGKey(0)
    k_x, k_p = jax.random.split(key)

    B, Cin, Cout, H, W = 8, 4, 16, 16, 16
    x = jax.random.normal(k_x, (B, Cin, H, W), jnp.float32)
    params = make_params(k_p, Cin, Cout)

    out, aux = jax.jit(middle_block_pallas)(x, params)
    out = jax.block_until_ready(out)
    assert aux is None
    assert out.shape == (B, Cout, H, W)

    ref, _ = middle_block_ref(x, params)
    max_err = float(jnp.max(jnp.abs(out - ref)))
    assert jnp.allclose(out, ref, atol=2e-3, rtol=2e-3), max_err

    print("KERNEL_OK")
</pallas_src>

<mosaic_0001>
module attributes {stable_mosaic.version = 11 : i64} {
  func.func @middle_block_kernel(%arg0: i32, %arg1: memref<4x4x256xbf16, #tpu.memory_space<vmem>>, %arg2: memref<16x36xbf16, #tpu.memory_space<vmem>>, %arg3: memref<16x1xf32, #tpu.memory_space<vmem>>, %arg4: memref<16x1xf32, #tpu.memory_space<vmem>>, %arg5: memref<16x144xbf16, #tpu.memory_space<vmem>>, %arg6: memref<16x1xf32, #tpu.memory_space<vmem>>, %arg7: memref<16x1xf32, #tpu.memory_space<vmem>>, %arg8: memref<16x2xf32, #tpu.memory_space<vmem>>, %arg9: memref<1x2xf32, #tpu.memory_space<vmem>>, %arg10: memref<16x2xf32, #tpu.memory_space<vmem>>, %arg11: memref<16x1xf32, #tpu.memory_space<vmem>>, %arg12: memref<4x16x256xf32, #tpu.memory_space<vmem>>, %arg13: memref<4x16x290xbf16, #tpu.memory_space<vmem>>, %arg14: memref<144x1024xbf16, #tpu.memory_space<vmem>>) attributes {dimension_semantics = [#tpu.dimension_semantics<parallel>], iteration_bounds = array<i64: 2>, scalar_prefetch = 0 : i64, scratch_operands = 2 : i64, tpu.core_type = #tpu.core_type<tc>, window_params = [{transform_indices = @transform_0, window_bounds = array<i64: 4, 4, 256>}, {pipeline_mode = #tpu.pipeline_mode<synchronous>, transform_indices = @transform_1, window_bounds = array<i64: 16, 36>}, {pipeline_mode = #tpu.pipeline_mode<synchronous>, transform_indices = @transform_2, window_bounds = array<i64: 16, 1>}, {pipeline_mode = #tpu.pipeline_mode<synchronous>, transform_indices = @transform_3, window_bounds = array<i64: 16, 1>}, {pipeline_mode = #tpu.pipeline_mode<synchronous>, transform_indices = @transform_4, window_bounds = array<i64: 16, 144>}, {pipeline_mode = #tpu.pipeline_mode<synchronous>, transform_indices = @transform_5, window_bounds = array<i64: 16, 1>}, {pipeline_mode = #tpu.pipeline_mode<synchronous>, transform_indices = @transform_6, window_bounds = array<i64: 16, 1>}, {pipeline_mode = #tpu.pipeline_mode<synchronous>, transform_indices = @transform_7, window_bounds = array<i64: 16, 2>}, {pipeline_mode = #tpu.pipeline_mode<synchronous>, transform_indices = @transform_8, window_bounds = array<i64: 1, 2>}, {pipeline_mode = #tpu.pipeline_mode<synchronous>, transform_indices = @transform_9, window_bounds = array<i64: 16, 2>}, {pipeline_mode = #tpu.pipeline_mode<synchronous>, transform_indices = @transform_10, window_bounds = array<i64: 16, 1>}, {transform_indices = @transform_11, window_bounds = array<i64: 4, 16, 256>}]} {
    %0 = tpu.iota {dimensions = array<i32: 1>} : vector<1x256xi32>
    %c16_i32 = arith.constant 16 : i32
    %c0_i32 = arith.constant 0 : i32
    %1 = arith.cmpi eq, %c16_i32, %c0_i32 : i32
    %c1_i32 = arith.constant 1 : i32
    %2 = arith.select %1, %c1_i32, %c16_i32 : i32
    %3 = vector.broadcast %2 : i32 to vector<1x256xi32>
    %4 = arith.remsi %0, %3 : vector<1x256xi32>
    %c0_i32_0 = arith.constant 0 : i32
    %5 = vector.broadcast %c0_i32_0 : i32 to vector<1x256xi32>
    %6 = arith.cmpi ne, %4, %5 : vector<1x256xi32>
    %c0_i32_1 = arith.constant 0 : i32
    %7 = vector.broadcast %c0_i32_1 : i32 to vector<1x256xi32>
    %8 = arith.cmpi slt, %4, %7 : vector<1x256xi32>
    %c0_i32_2 = arith.constant 0 : i32
    %9 = arith.cmpi slt, %2, %c0_i32_2 : i32
    %10 = vector.broadcast %9 : i1 to vector<1x256xi1>
    %11 = vector.broadcast %10 : vector<1x256xi1> to vector<1x256xi1>
    %12 = arith.xori %8, %11 : vector<1x256xi1>
    %13 = arith.andi %12, %6 : vector<1x256xi1>
    %14 = vector.broadcast %2 : i32 to vector<1x256xi32>
    %15 = arith.addi %4, %14 : vector<1x256xi32>
    %16 = arith.select %13, %15, %4 : vector<1x256xi1>, vector<1x256xi32>
    %c0_i32_3 = arith.constant 0 : i32
    %17 = vector.broadcast %c0_i32_3 : i32 to vector<1x256xi32>
    %18 = arith.cmpi ne, %16, %17 : vector<1x256xi32>
    %c15_i32 = arith.constant 15 : i32
    %19 = vector.broadcast %c15_i32 : i32 to vector<1x256xi32>
    %20 = arith.cmpi ne, %16, %19 : vector<1x256xi32>
    %cst = arith.constant 0.000000e+00 : bf16
    %21 = vector.broadcast %cst : bf16 to vector<4x16x17xbf16>
    %c0 = arith.constant 0 : index
    %c0_4 = arith.constant 0 : index
    %c0_5 = arith.constant 0 : index
    %22 = vector.load %arg13[%c0, %c0_4, %c0_5] : memref<4x16x290xbf16, #tpu.memory_space<vmem>>, vector<4x16x17xbf16>
    tpu.vector_store %arg13[%c0, %c0_4, %c0_5], %21 {strides = array<i32>} : memref<4x16x290xbf16, #tpu.memory_space<vmem>>, vector<4x16x17xbf16>,
    %c0_6 = arith.constant 0 : index
    %c0_7 = arith.constant 0 : index
    %c273 = arith.constant 273 : index
    %23 = vector.load %arg13[%c0_6, %c0_7, %c273] : memref<4x16x290xbf16, #tpu.memory_space<vmem>>, vector<4x16x17xbf16>
    tpu.vector_store %arg13[%c0_6, %c0_7, %c273], %21 {strides = array<i32>} : memref<4x16x290xbf16, #tpu.memory_space<vmem>>, vector<4x16x17xbf16>,
    %c0_8 = arith.constant 0 : index
    %c0_9 = arith.constant 0 : index
    %c0_10 = arith.constant 0 : index
    %24 = vector.load %arg1[%c0_8, %c0_9, %c0_10] : memref<4x4x256xbf16, #tpu.memory_space<vmem>>, vector<1x4x256xbf16>
    %25 = vector.shape_cast %24 : vector<1x4x256xbf16> to vector<4x256xbf16>
    %c0_11 = arith.constant 0 : index
    %c0_12 = arith.constant 0 : index
    %c17 = arith.constant 17 : index
    %26 = vector.load %arg13[%c0_11, %c0_12, %c17] : memref<4x16x290xbf16, #tpu.memory_space<vmem>>, vector<1x4x256xbf16>
    %27 = vector.shape_cast %26 : vector<1x4x256xbf16> to vector<4x256xbf16>
    %28 = vector.shape_cast %25 : vector<4x256xbf16> to vector<1x4x256xbf16>
    tpu.vector_store %arg13[%c0_11, %c0_12, %c17], %28 {strides = array<i32>} : memref<4x16x290xbf16, #tpu.memory_space<vmem>>, vector<1x4x256xbf16>,
    %c0_13 = arith.constant 0 : index
    %c0_14 = arith.constant 0 : index
    %c0_15 = arith.constant 0 : index
    %29 = vector.load %arg13[%c0_13, %c0_14, %c0_15] : memref<4x16x290xbf16, #tpu.memory_space<vmem>>, vector<1x4x256xbf16>
    %30 = vector.shape_cast %29 : vector<1x4x256xbf16> to vector<4x256xbf16>
    %cst_16 = arith.constant 0.000000e+00 : bf16
    %31 = vector.broadcast %cst_16 : bf16 to vector<4x256xbf16>
    %32 = vector.shape_cast %18 : vector<1x256xi1> to vector<1x256xi1>
    %33 = vector.broadcast %32 : vector<1x256xi1> to vector<4x256xi1>
    %34 = arith.select %33, %30, %31 : vector<4x256xi1>, vector<4x256xbf16>
    %c0_17 = arith.constant 0 : index
    %c0_18 = arith.constant 0 : index
    %35 = vector.load %arg14[%c0_17, %c0_18] : memref<144x1024xbf16, #tpu.memory_space<vmem>>, vector<4x256xbf16>
    tpu.vector_store %arg14[%c0_17, %c0_18], %34 {strides = array<i32>} : memref<144x1024xbf16, #tpu.memory_space<vmem>>, vector<4x256xbf16>,
    %c0_19 = arith.constant 0 : index
    %c0_20 = arith.constant 0 : index
    %c1 = arith.constant 1 : index
    %36 = vector.load %arg13[%c0_19, %c0_20, %c1] : memref<4x16x290xbf16, #tpu.memory_space<vmem>>, vector<1x4x256xbf16>
    %37 = vector.shape_cast %36 : vector<1x4x256xbf16> to vector<4x256xbf16>
    %c4 = arith.constant 4 : index
    %c0_21 = arith.constant 0 : index
    %38 = vector.load %arg14[%c4, %c0_21] : memref<144x1024xbf16, #tpu.memory_space<vmem>>, vector<4x256xbf16>
    tpu.vector_store %arg14[%c4, %c0_21], %37 {strides = array<i32>} : memref<144x1024xbf16, #tpu.memory_space<vmem>>, vector<4x256xbf16>,
    %c0_22 = arith.constant 0 : index
    %c0_23 = arith.constant 0 : index
    %c2 = arith.constant 2 : index
    %39 = vector.load %arg13[%c0_22, %c0_23, %c2] : memref<4x16x290xbf16, #tpu.memory_space<vmem>>, vector<1x4x256xbf16>
    %40 = vector.shape_cast %39 : vector<1x4x256xbf16> to vector<4x256xbf16>
    %cst_24 = arith.constant 0.000000e+00 : bf16
    %41 = vector.broadcast %cst_24 : bf16 to vector<4x256xbf16>
    %42 = vector.shape_cast %20 : vector<1x256xi1> to vector<1x256xi1>
    %43 = vector.broadcast %42 : vector<1x256xi1> to vector<4x256xi1>
    %44 = arith.select %43, %40, %41 : vector<4x256xi1>, vector<4x256xbf16>
    %c8 = arith.constant 8 : index
    %c0_25 = arith.constant 0 : index
    %45 = vector.load %arg14[%c8, %c0_25] : memref<144x1024xbf16, #tpu.memory_space<vmem>>, vector<4x256xbf16>
    tpu.vector_store %arg14[%c8, %c0_25], %44 {strides = array<i32>} : memref<144x1024xbf16, #tpu.memory_space<vmem>>, vector<4x256xbf16>,
    %c0_26 = arith.constant 0 : index
    %c0_27 = arith.constant 0 : index
    %c16 = arith.constant 16 : index
    %46 = vector.load %arg13[%c0_26, %c0_27, %c16] : memref<4x16x290xbf16, #tpu.memory_space<vmem>>, vector<1x4x256xbf16>
    %47 = vector.shape_cast %46 : vector<1x4x256xbf16> to vector<4x256xbf16>
    %cst_28 = arith.constant 0.000000e+00 : bf16
    %48 = vector.broadcast %cst_28 : bf16 to vector<4x256xbf16>
    %49 = vector.shape_cast %18 : vector<1x256xi1> to vector<1x256xi1>
    %50 = vector.broadcast %49 : vector<1x256xi1> to vector<4x256xi1>
    %51 = arith.select %50, %47, %48 : vector<4x256xi1>, vector<4x256xbf16>
    %c12 = arith.constant 12 : index
    %c0_29 = arith.constant 0 : index
    %52 = vector.load %arg14[%c12, %c0_29] : memref<144x1024xbf16, #tpu.memory_space<vmem>>, vector<4x256xbf16>
    tpu.vector_store %arg14[%c12, %c0_29], %51 {strides = array<i32>} : memref<144x1024xbf16, #tpu.memory_space<vmem>>, vector<4x256xbf16>,
    %c0_30 = arith.constant 0 : index
    %c0_31 = arith.constant 0 : index
    %c17_32 = arith.constant 17 : index
    %53 = vector.load %arg13[%c0_30, %c0_31, %c17_32] : memref<4x16x290xbf16, #tpu.memory_space<vmem>>, vector<1x4x256xbf16>
    %54 = vector.shape_cast %53 : vector<1x4x256xbf16> to vector<4x256xbf16>
    %c16_33 = arith.constant 16 : index
    %c0_34 = arith.constant 0 : index
    %55 = vector.load %arg14[%c16_33, %c0_34] : memref<144x1024xbf16, #tpu.memory_space<vmem>>, vector<4x256xbf16>
    tpu.vector_store %arg14[%c16_33, %c0_34], %54 {strides = array<i32>} : memref<144x1024xbf16, #tpu.memory_space<vmem>>, vector<4x256xbf16>,
    %c0_35 = arith.constant 0 : index
    %c0_36 = arith.constant 0 : index
    %c18 = arith.constant 18 : index
    %56 = vector.load %arg13[%c0_35, %c0_36, %c18] : memref<4x16x290xbf16, #tpu.memory_space<vmem>>, vector<1x4x256xbf16>
    %57 = vector.shape_cast %56 : vector<1x4x256xbf16> to vector<4x256xbf16>
    %cst_37 = arith.constant 0.000000e+00 : bf16
    %58 = vector.broadcast %cst_37 : bf16 to vector<4x256xbf16>
    %59 = vector.shape_cast %20 : vector<1x256xi1> to vector<1x256xi1>
    %60 = vector.broadcast %59 : vector<1x256xi1> to vector<4x256xi1>
    %61 = arith.select %60, %57, %58 : vector<4x256xi1>, vector<4x256xbf16>
    %c20 = arith.constant 20 : index
    %c0_38 = arith.constant 0 : index
    %62 = vector.load %arg14[%c20, %c0_38] : memref<144x1024xbf16, #tpu.memory_space<vmem>>, vector<4x256xbf16>
    tpu.vector_store %arg14[%c20, %c0_38], %61 {strides = array<i32>} : memref<144x1024xbf16, #tpu.memory_space<vmem>>, vector<4x256xbf16>,
    %c0_39 = arith.constant 0 : index
    %c0_40 = arith.constant 0 : index
    %c32 = arith.constant 32 : index
    %63 = vector.load %arg13[%c0_39, %c0_40, %c32] : memref<4x16x290xbf16, #tpu.memory_space<vmem>>, vector<1x4x256xbf16>
    %64 = vector.shape_cast %63 : vector<1x4x256xbf16> to vector<4x256xbf16>
    %cst_41 = arith.constant 0.000000e+00 : bf16
    %65 = vector.broadcast %cst_41 : bf16 to vector<4x256xbf16>
    %66 = vector.shape_cast %18 : vector<1x256xi1> to vector<1x256xi1>
    %67 = vector.broadcast %66 : vector<1x256xi1> to vector<4x256xi1>
    %68 = arith.select %67, %64, %65 : vector<4x256xi1>, vector<4x256xbf16>
    %c24 = arith.constant 24 : index
    %c0_42 = arith.constant 0 : index
    %69 = vector.load %arg14[%c24, %c0_42] : memref<144x1024xbf16, #tpu.memory_space<vmem>>, vector<4x256xbf16>
    tpu.vector_store %arg14[%c24, %c0_42], %68 {strides = array<i32>} : memref<144x1024xbf16, #tpu.memory_space<vmem>>, vector<4x256xbf16>,
    %c0_43 = arith.constant 0 : index
    %c0_44 = arith.constant 0 : index
    %c33 = arith.constant 33 : index
    %70 = vector.load %arg13[%c0_43, %c0_44, %c33] : memref<4x16x290xbf16, #tpu.memory_space<vmem>>, vector<1x4x256xbf16>
    %71 = vector.shape_cast %70 : vector<1x4x256xbf16> to vector<4x256xbf16>
    %c28 = arith.constant 28 : index
    %c0_45 = arith.constant 0 : index
    %72 = vector.load %arg14[%c28, %c0_45] : memref<144x1024xbf16, #tpu.memory_space<vmem>>, vector<4x256xbf16>
    tpu.vector_store %arg14[%c28, %c0_45], %71 {strides = array<i32>} : memref<144x1024xbf16, #tpu.memory_space<vmem>>, vector<4x256xbf16>,
    %c0_46 = arith.constant 0 : index
    %c0_47 = arith.constant 0 : index
    %c34 = arith.constant 34 : index
    %73 = vector.load %arg13[%c0_46, %c0_47, %c34] : memref<4x16x290xbf16, #tpu.memory_space<vmem>>, vector<1x4x256xbf16>
    %74 = vector.shape_cast %73 : vector<1x4x256xbf16> to vector<4x256xbf16>
    %cst_48 = arith.constant 0.000000e+00 : bf16
    %75 = vector.broadcast %cst_48 : bf16 to vector<4x256xbf16>
    %76 = vector.shape_cast %20 : vector<1x256xi1> to vector<1x256xi1>
    %77 = vector.broadcast %76 : vector<1x256xi1> to vector<4x256xi1>
    %78 = arith.select %77, %74, %75 : vector<4x256xi1>, vector<4x256xbf16>
    %c32_49 = arith.constant 32 : index
    %c0_50 = arith.constant 0 : index
    %79 = vector.load %arg14[%c32_49, %c0_50] : memref<144x1024xbf16, #tpu.memory_space<vmem>>, vector<4x256xbf16>
    tpu.vector_store %arg14[%c32_49, %c0_50], %78 {strides = array<i32>} : memref<144x1024xbf16, #tpu.memory_space<vmem>>, vector<4x256xbf16>,
    %c1_51 = arith.constant 1 : index
    %c0_52 = arith.constant 0 : index
    %c0_53 = arith.constant 0 : index
    %80 = vector.load %arg1[%c1_51, %c0_52, %c0_53] : memref<4x4x256xbf16, #tpu.memory_space<vmem>>, vector<1x4x256xbf16>
    %81 = vector.shape_cast %80 : vector<1x4x256xbf16> to vector<4x256xbf16>
    %c1_54 = arith.constant 1 : index
    %c0_55 = arith.constant 0 : index
    %c17_56 = arith.constant 17 : index
    %82 = vector.load %arg13[%c1_54, %c0_55, %c17_56] : memref<4x16x290xbf16, #tpu.memory_space<vmem>>, vector<1x4x256xbf16>
    %83 = vector.shape_cast %82 : vector<1x4x256xbf16> to vector<4x256xbf16>
    %84 = vector.shape_cast %81 : vector<4x256xbf16> to vector<1x4x256xbf16>
    tpu.vector_store %arg13[%c1_54, %c0_55, %c17_56], %84 {strides = array<i32>} : memref<4x16x290xbf16, #tpu.memory_space<vmem>>, vector<1x4x256xbf16>,
    %c1_57 = arith.constant 1 : index
    %c0_58 = arith.constant 0 : index
    %c0_59 = arith.constant 0 : index
    %85 = vector.load %arg13[%c1_57, %c0_58, %c0_59] : memref<4x16x290xbf16, #tpu.memory_space<vmem>>, vector<1x4x256xbf16>
    %86 = vector.shape_cast %85 : vector<1x4x256xbf16> to vector<4x256xbf16>
    %cst_60 = arith.constant 0.000000e+00 : bf16
    %87 = vector.broadcast %cst_60 : bf16 to vector<4x256xbf16>
    %88 = vector.shape_cast %18 : vector<1x256xi1> to vector<1x256xi1>
    %89 = vector.broadcast %88 : vector<1x256xi1> to vector<4x256xi1>
    %90 = arith.select %89, %86, %87 : vector<4x256xi1>, vector<4x256xbf16>
    %c0_61 = arith.constant 0 : index
    %c256 = arith.constant 256 : index
    %91 = vector.load %arg14[%c0_61, %c256] : memref<144x1024xbf16, #tpu.memory_space<vmem>>, vector<4x256xbf16>
    tpu.vector_store %arg14[%c0_61, %c256], %90 {strides = array<i32>} : memref<144x1024xbf16, #tpu.memory_space<vmem>>, vector<4x256xbf16>,
    %c1_62 = arith.constant 1 : index
    %c0_63 = arith.constant 0 : index
    %c1_64 = arith.constant 1 : index
    %92 = vector.load %arg13[%c1_62, %c0_63, %c1_64] : memref<4x16x290xbf16, #tpu.memory_space<vmem>>, vector<1x4x256xbf16>
    %93 = vector.shape_cast %92 : vector<1x4x256xbf16> to vector<4x256xbf16>
    %c4_65 = arith.constant 4 : index
    %c256_66 = arith.constant 256 : index
    %94 = vector.load %arg14[%c4_65, %c256_66] : memref<144x1024xbf16, #tpu.memory_space<vmem>>, vector<4x256xbf16>
    tpu.vector_store %arg14[%c4_65, %c256_66], %93 {strides = array<i32>} : memref<144x1024xbf16, #tpu.memory_space<vmem>>, vector<4x256xbf16>,
    %c1_67 = arith.constant 1 : index
    %c0_68 = arith.constant 0 : index
    %c2_69 = arith.constant 2 : index
    %95 = vector.load %arg13[%c1_67, %c0_68, %c2_69] : memref<4x16x290xbf16, #tpu.memory_space<vmem>>, vector<1x4x256xbf16>
    %96 = vector.shape_cast %95 : vector<1x4x256xbf16> to vector<4x256xbf16>
    %cst_70 = arith.constant 0.000000e+00 : bf16
    %97 = vector.broadcast %cst_70 : bf16 to vector<4x256xbf16>
    %98 = vector.shape_cast %20 : vector<1x256xi1> to vector<1x256xi1>
    %99 = vector.broadcast %98 : vector<1x256xi1> to vector<4x256xi1>
    %100 = arith.select %99, %96, %97 : vector<4x256xi1>, vector<4x256xbf16>
    %c8_71 = arith.constant 8 : index
    %c256_72 = arith.constant 256 : index
    %101 = vector.load %arg14[%c8_71, %c256_72] : memref<144x1024xbf16, #tpu.memory_space<vmem>>, vector<4x256xbf16>
    tpu.vector_store %arg14[%c8_71, %c256_72], %100 {strides = array<i32>} : memref<144x1024xbf16, #tpu.memory_space<vmem>>, vector<4x256xbf16>,
    %c1_73 = arith.constant 1 : index
    %c0_74 = arith.constant 0 : index
    %c16_75 = arith.constant 16 : index
    %102 = vector.load %arg13[%c1_73, %c0_74, %c16_75] : memref<4x16x290xbf16, #tpu.memory_space<vmem>>, vector<1x4x256xbf16>
    %103 = vector.shape_cast %102 : vector<1x4x256xbf16> to vector<4x256xbf16>
    %cst_76 = arith.constant 0.000000e+00 : bf16
    %104 = vector.broadcast %cst_76 : bf16 to vector<4x256xbf16>
    %105 = vector.shape_cast %18 : vector<1x256xi1> to vector<1x256xi1>
    %106 = vector.broadcast %105 : vector<1x256xi1> to vector<4x256xi1>
    %107 = arith.select %106, %103, %104 : vector<4x256xi1>, vector<4x256xbf16>
    %c12_77 = arith.constant 12 : index
    %c256_78 = arith.constant 256 : index
    %108 = vector.load %arg14[%c12_77, %c256_78] : memref<144x1024xbf16, #tpu.memory_space<vmem>>, vector<4x256xbf16>
    tpu.vector_store %arg14[%c12_77, %c256_78], %107 {strides = array<i32>} : memref<144x1024xbf16, #tpu.memory_space<vmem>>, vector<4x256xbf16>,
    %c1_79 = arith.constant 1 : index
    %c0_80 = arith.constant 0 : index
    %c17_81 = arith.constant 17 : index
    %109 = vector.load %arg13[%c1_79, %c0_80, %c17_81] : memref<4x16x290xbf16, #tpu.memory_space<vmem>>, vector<1x4x256xbf16>
    %110 = vector.shape_cast %109 : vector<1x4x256xbf16> to vector<4x256xbf16>
    %c16_82 = arith.constant 16 : index
    %c256_83 = arith.constant 256 : index
    %111 = vector.load %arg14[%c16_82, %c256_83] : memref<144x1024xbf16, #tpu.memory_space<vmem>>, vector<4x256xbf16>
    tpu.vector_store %arg14[%c16_82, %c256_83], %110 {strides = array<i32>} : memref<144x1024xbf16, #tpu.memory_space<vmem>>, vector<4x256xbf16>,
    %c1_84 = arith.constant 1 : index
    %c0_85 = arith.constant 0 : index
    %c18_86 = arith.constant 18 : index
    %112 = vector.load %arg13[%c1_84, %c0_85, %c18_86] : memref<4x16x290xbf16, #tpu.memory_space<vmem>>, vector<1x4x256xbf16>
    %113 = vector.shape_cast %112 : vector<1x4x256xbf16> to vector<4x256xbf16>
    %cst_87 = arith.constant 0.000000e+00 : bf16
    %114 = vector.broadcast %cst_87 : bf16 to vector<4x256xbf16>
    %115 = vector.shape_cast %20 : vector<1x256xi1> to vector<1x256xi1>
    %116 = vector.broadcast %115 : vector<1x256xi1> to vector<4x256xi1>
    %117 = arith.select %116, %113, %114 : vector<4x256xi1>, vector<4x256xbf16>
    %c20_88 = arith.constant 20 : index
    %c256_89 = arith.constant 256 : index
    %118 = vector.load %arg14[%c20_88, %c256_89] : memref<144x1024xbf16, #tpu.memory_space<vmem>>, vector<4x256xbf16>
    tpu.vector_store %arg14[%c20_88, %c256_89], %117 {strides = array<i32>} : memref<144x1024xbf16, #tpu.memory_space<vmem>>, vector<4x256xbf16>,
    %c1_90 = arith.constant 1 : index
    %c0_91 = arith.constant 0 : index
    %c32_92 = arith.constant 32 : index
    %119 = vector.load %arg13[%c1_90, %c0_91, %c32_92] : memref<4x16x290xbf16, #tpu.memory_space<vmem>>, vector<1x4x256xbf16>
    %120 = vector.shape_cast %119 : vector<1x4x256xbf16> to vector<4x256xbf16>
    %cst_93 = arith.constant 0.000000e+00 : bf16
    %121 = vector.broadcast %cst_93 : bf16 to vector<4x256xbf16>
    %122 = vector.shape_cast %18 : vector<1x256xi1> to vector<1x256xi1>
    %123 = vector.broadcast %122 : vector<1x256xi1> to vector<4x256xi1>
    %124 = arith.select %123, %120, %121 : vector<4x256xi1>, vector<4x256xbf16>
    %c24_94 = arith.constant 24 : index
    %c256_95 = arith.constant 256 : index
    %125 = vector.load %arg14[%c24_94, %c256_95] : memref<144x1024xbf16, #tpu.memory_space<vmem>>, vector<4x256xbf16>
    tpu.vector_store %arg14[%c24_94, %c256_95], %124 {strides = array<i32>} : memref<144x1024xbf16, #tpu.memory_space<vmem>>, vector<4x256xbf16>,
    %c1_96 = arith.constant 1 : index
    %c0_97 = arith.constant 0 : index
    %c33_98 = arith.constant 33 : index
    %126 = vector.load %arg13[%c1_96, %c0_97, %c33_98] : memref<4x16x290xbf16, #tpu.memory_space<vmem>>, vector<1x4x256xbf16>
    %127 = vector.shape_cast %126 : vector<1x4x256xbf16> to vector<4x256xbf16>
    %c28_99 = arith.constant 28 : index
    %c256_100 = arith.constant 256 : index
    %128 = vector.load %arg14[%c28_99, %c256_100] : memref<144x1024xbf16, #tpu.memory_space<vmem>>, vector<4x256xbf16>
    tpu.vector_store %arg14[%c28_99, %c256_100], %127 {strides = array<i32>} : memref<144x1024xbf16, #tpu.memory_space<vmem>>, vector<4x256xbf16>,
    %c1_101 = arith.constant 1 : index
    %c0_102 = arith.constant 0 : index
    %c34_103 = arith.constant 34 : index
    %129 = vector.load %arg13[%c1_101, %c0_102, %c34_103] : memref<4x16x290xbf16, #tpu.memory_space<vmem>>, vector<1x4x256xbf16>
    %130 = vector.shape_cast %129 : vector<1x4x256xbf16> to vector<4x256xbf16>
    %cst_104 = arith.constant 0.000000e+00 : bf16
    %131 = vector.broadcast %cst_104 : bf16 to vector<4x256xbf16>
    %132 = vector.shape_cast %20 : vector<1x256xi1> to vector<1x256xi1>
    %133 = vector.broadcast %132 : vector<1x256xi1> to vector<4x256xi1>
    %134 = arith.select %133, %130, %131 : vector<4x256xi1>, vector<4x256xbf16>
    %c32_105 = arith.constant 32 : index
    %c256_106 = arith.constant 256 : index
    %135 = vector.load %arg14[%c32_105, %c256_106] : memref<144x1024xbf16, #tpu.memory_space<vmem>>, vector<4x256xbf16>
    tpu.vector_store %arg14[%c32_105, %c256_106], %134 {strides = array<i32>} : memref<144x1024xbf16, #tpu.memory_space<vmem>>, vector<4x256xbf16>,
    %c2_107 = arith.constant 2 : index
    %c0_108 = arith.constant 0 : index
    %c0_109 = arith.constant 0 : index
    %136 = vector.load %arg1[%c2_107, %c0_108, %c0_109] : memref<4x4x256xbf16, #tpu.memory_space<vmem>>, vector<1x4x256xbf16>
    %137 = vector.shape_cast %136 : vector<1x4x256xbf16> to vector<4x256xbf16>
    %c2_110 = arith.constant 2 : index
    %c0_111 = arith.constant 0 : index
    %c17_112 = arith.constant 17 : index
    %138 = vector.load %arg13[%c2_110, %c0_111, %c17_112] : memref<4x16x290xbf16, #tpu.memory_space<vmem>>, vector<1x4x256xbf16>
    %139 = vector.shape_cast %138 : vector<1x4x256xbf16> to vector<4x256xbf16>
    %140 = vector.shape_cast %137 : vector<4x256xbf16> to vector<1x4x256xbf16>
    tpu.vector_store %arg13[%c2_110, %c0_111, %c17_112], %140 {strides = array<i32>} : memref<4x16x290xbf16, #tpu.memory_space<vmem>>, vector<1x4x256xbf16>,
    %c2_113 = arith.constant 2 : index
    %c0_114 = arith.constant 0 : index
    %c0_115 = arith.constant 0 : index
    %141 = vector.load %arg13[%c2_113, %c0_114, %c0_115] : memref<4x16x290xbf16, #tpu.memory_space<vmem>>, vector<1x4x256xbf16>
    %142 = vector.shape_cast %141 : vector<1x4x256xbf16> to vector<4x256xbf16>
    %cst_116 = arith.constant 0.000000e+00 : bf16
    %143 = vector.broadcast %cst_116 : bf16 to vector<4x256xbf16>
    %144 = vector.shape_cast %18 : vector<1x256xi1> to vector<1x256xi1>
    %145 = vector.broadcast %144 : vector<1x256xi1> to vector<4x256xi1>
    %146 = arith.select %145, %142, %143 : vector<4x256xi1>, vector<4x256xbf16>
    %c0_117 = arith.constant 0 : index
    %c512 = arith.constant 512 : index
    %147 = vector.load %arg14[%c0_117, %c512] : memref<144x1024xbf16, #tpu.memory_space<vmem>>, vector<4x256xbf16>
    tpu.vector_store %arg14[%c0_117, %c512], %146 {strides = array<i32>} : memref<144x1024xbf16, #tpu.memory_space<vmem>>, vector<4x256xbf16>,
    %c2_118 = arith.constant 2 : index
    %c0_119 = arith.constant 0 : index
    %c1_120 = arith.constant 1 : index
    %148 = vector.load %arg13[%c2_118, %c0_119, %c1_120] : memref<4x16x290xbf16, #tpu.memory_space<vmem>>, vector<1x4x256xbf16>
    %149 = vector.shape_cast %148 : vector<1x4x256xbf16> to vector<4x256xbf16>
    %c4_121 = arith.constant 4 : index
    %c512_122 = arith.constant 512 : index
    %150 = vector.load %arg14[%c4_121, %c512_122] : memref<144x1024xbf16, #tpu.memory_space<vmem>>, vector<4x256xbf16>
    tpu.vector_store %arg14[%c4_121, %c512_122], %149 {strides = array<i32>} : memref<144x1024xbf16, #tpu.memory_space<vmem>>, vector<4x256xbf16>,
    %c2_123 = arith.constant 2 : index
    %c0_124 = arith.constant 0 : index
    %c2_125 = arith.constant 2 : index
    %151 = vector.load %arg13[%c2_123, %c0_124, %c2_125] : memref<4x16x290xbf16, #tpu.memory_space<vmem>>, vector<1x4x256xbf16>
    %152 = vector.shape_cast %151 : vector<1x4x256xbf16> to vector<4x256xbf16>
    %cst_126 = arith.constant 0.000000e+00 : bf16
    %153 = vector.broadcast %cst_126 : bf16 to vector<4x256xbf16>
    %154 = vector.shape_cast %20 : vector<1x256xi1> to vector<1x256xi1>
    %155 = vector.broadcast %154 : vector<1x256xi1> to vector<4x256xi1>
    %156 = arith.select %155, %152, %153 : vector<4x256xi1>, vector<4x256xbf16>
    %c8_127 = arith.constant 8 : index
    %c512_128 = arith.constant 512 : index
    %157 = vector.load %arg14[%c8_127, %c512_128] : memref<144x1024xbf16, #tpu.memory_space<vmem>>, vector<4x256xbf16>
    tpu.vector_store %arg14[%c8_127, %c512_128], %156 {strides = array<i32>} : memref<144x1024xbf16, #tpu.memory_space<vmem>>, vector<4x256xbf16>,
    %c2_129 = arith.constant 2 : index
    %c0_130 = arith.constant 0 : index
    %c16_131 = arith.constant 16 : index
    %158 = vector.load %arg13[%c2_129, %c0_130, %c16_131] : memref<4x16x290xbf16, #tpu.memory_space<vmem>>, vector<1x4x256xbf16>
    %159 = vector.shape_cast %158 : vector<1x4x256xbf16> to vector<4x256xbf16>
    %cst_132 = arith.constant 0.000000e+00 : bf16
    %160 = vector.broadcast %cst_132 : bf16 to vector<4x256xbf16>
    %161 = vector.shape_cast %18 : vector<1x256xi1> to vector<1x256xi1>
    %162 = vector.broadcast %161 : vector<1x256xi1> to vector<4x256xi1>
    %163 = arith.select %162, %159, %160 : vector<4x256xi1>, vector<4x256xbf16>
    %c12_133 = arith.constant 12 : index
    %c512_134 = arith.constant 512 : index
    %164 = vector.load %arg14[%c12_133, %c512_134] : memref<144x1024xbf16, #tpu.memory_space<vmem>>, vector<4x256xbf16>
    tpu.vector_store %arg14[%c12_133, %c512_134], %163 {strides = array<i32>} : memref<144x1024xbf16, #tpu.memory_space<vmem>>, vector<4x256xbf16>,
    %c2_135 = arith.constant 2 : index
    %c0_136 = arith.constant 0 : index
    %c17_137 = arith.constant 17 : index
    %165 = vector.load %arg13[%c2_135, %c0_136, %c17_137] : memref<4x16x290xbf16, #tpu.memory_space<vmem>>, vector<1x4x256xbf16>
    %166 = vector.shape_cast %165 : vector<1x4x256xbf16> to vector<4x256xbf16>
    %c16_138 = arith.constant 16 : index
    %c512_139 = arith.constant 512 : index
    %167 = vector.load %arg14[%c16_138, %c512_139] : memref<144x1024xbf16, #tpu.memory_space<vmem>>, vector<4x256xbf16>
    tpu.vector_store %arg14[%c16_138, %c512_139], %166 {strides = array<i32>} : memref<144x1024xbf16, #tpu.memory_space<vmem>>, vector<4x256xbf16>,
    %c2_140 = arith.constant 2 : index
    %c0_141 = arith.constant 0 : index
    %c18_142 = arith.constant 18 : index
    %168 = vector.load %arg13[%c2_140, %c0_141, %c18_142] : memref<4x16x290xbf16, #tpu.memory_space<vmem>>, vector<1x4x256xbf16>
    %169 = vector.shape_cast %168 : vector<1x4x256xbf16> to vector<4x256xbf16>
    %cst_143 = arith.constant 0.000000e+00 : bf16
    %170 = vector.broadcast %cst_143 : bf16 to vector<4x256xbf16>
    %171 = vector.shape_cast %20 : vector<1x256xi1> to vector<1x256xi1>
    %172 = vector.broadcast %171 : vector<1x256xi1> to vector<4x256xi1>
    %173 = arith.select %172, %169, %170 : vector<4x256xi1>, vector<4x256xbf16>
    %c20_144 = arith.constant 20 : index
    %c512_145 = arith.constant 512 : index
    %174 = vector.load %arg14[%c20_144, %c512_145] : memref<144x1024xbf16, #tpu.memory_space<vmem>>, vector<4x256xbf16>
    tpu.vector_store %arg14[%c20_144, %c512_145], %173 {strides = array<i32>} : memref<144x1024xbf16, #tpu.memory_space<vmem>>, vector<4x256xbf16>,
    %c2_146 = arith.constant 2 : index
    %c0_147 = arith.constant 0 : index
    %c32_148 = arith.constant 32 : index
    %175 = vector.load %arg13[%c2_146, %c0_147, %c32_148] : memref<4x16x290xbf16, #tpu.memory_space<vmem>>, vector<1x4x256xbf16>
    %176 = vector.shape_cast %175 : vector<1x4x256xbf16> to vector<4x256xbf16>
    %cst_149 = arith.constant 0.000000e+00 : bf16
    %177 = vector.broadcast %cst_149 : bf16 to vector<4x256xbf16>
    %178 = vector.shape_cast %18 : vector<1x256xi1> to vector<1x256xi1>
    %179 = vector.broadcast %178 : vector<1x256xi1> to vector<4x256xi1>
    %180 = arith.select %179, %176, %177 : vector<4x256xi1>, vector<4x256xbf16>
    %c24_150 = arith.constant 24 : index
    %c512_151 = arith.constant 512 : index
    %181 = vector.load %arg14[%c24_150, %c512_151] : memref<144x1024xbf16, #tpu.memory_space<vmem>>, vector<4x256xbf16>
    tpu.vector_store %arg14[%c24_150, %c512_151], %180 {strides = array<i32>} : memref<144x1024xbf16, #tpu.memory_space<vmem>>, vector<4x256xbf16>,
    %c2_152 = arith.constant 2 : index
    %c0_153 = arith.constant 0 : index
    %c33_154 = arith.constant 33 : index
    %182 = vector.load %arg13[%c2_152, %c0_153, %c33_154] : memref<4x16x290xbf16, #tpu.memory_space<vmem>>, vector<1x4x256xbf16>
    %183 = vector.shape_cast %182 : vector<1x4x256xbf16> to vector<4x256xbf16>
    %c28_155 = arith.constant 28 : index
    %c512_156 = arith.constant 512 : index
    %184 = vector.load %arg14[%c28_155, %c512_156] : memref<144x1024xbf16, #tpu.memory_space<vmem>>, vector<4x256xbf16>
    tpu.vector_store %arg14[%c28_155, %c512_156], %183 {strides = array<i32>} : memref<144x1024xbf16, #tpu.memory_space<vmem>>, vector<4x256xbf16>,
    %c2_157 = arith.constant 2 : index
    %c0_158 = arith.constant 0 : index
    %c34_159 = arith.constant 34 : index
    %185 = vector.load %arg13[%c2_157, %c0_158, %c34_159] : memref<4x16x290xbf16, #tpu.memory_space<vmem>>, vector<1x4x256xbf16>
    %186 = vector.shape_cast %185 : vector<1x4x256xbf16> to vector<4x256xbf16>
    %cst_160 = arith.constant 0.000000e+00 : bf16
    %187 = vector.broadcast %cst_160 : bf16 to vector<4x256xbf16>
    %188 = vector.shape_cast %20 : vector<1x256xi1> to vector<1x256xi1>
    %189 = vector.broadcast %188 : vector<1x256xi1> to vector<4x256xi1>
    %190 = arith.select %189, %186, %187 : vector<4x256xi1>, vector<4x256xbf16>
    %c32_161 = arith.constant 32 : index
    %c512_162 = arith.constant 512 : index
    %191 = vector.load %arg14[%c32_161, %c512_162] : memref<144x1024xbf16, #tpu.memory_space<vmem>>, vector<4x256xbf16>
    tpu.vector_store %arg14[%c32_161, %c512_162], %190 {strides = array<i32>} : memref<144x1024xbf16, #tpu.memory_space<vmem>>, vector<4x256xbf16>,
    %c3 = arith.constant 3 : index
    %c0_163 = arith.constant 0 : index
    %c0_164 = arith.constant 0 : index
    %192 = vector.load %arg1[%c3, %c0_163, %c0_164] : memref<4x4x256xbf16, #tpu.memory_space<vmem>>, vector<1x4x256xbf16>
    %193 = vector.shape_cast %192 : vector<1x4x256xbf16> to vector<4x256xbf16>
    %c3_165 = arith.constant 3 : index
    %c0_166 = arith.constant 0 : index
    %c17_167 = arith.constant 17 : index
    %194 = vector.load %arg13[%c3_165, %c0_166, %c17_167] : memref<4x16x290xbf16, #tpu.memory_space<vmem>>, vector<1x4x256xbf16>
    %195 = vector.shape_cast %194 : vector<1x4x256xbf16> to vector<4x256xbf16>
    %196 = vector.shape_cast %193 : vector<4x256xbf16> to vector<1x4x256xbf16>
    tpu.vector_store %arg13[%c3_165, %c0_166, %c17_167], %196 {strides = array<i32>} : memref<4x16x290xbf16, #tpu.memory_space<vmem>>, vector<1x4x256xbf16>,
    %c3_168 = arith.constant 3 : index
    %c0_169 = arith.constant 0 : index
    %c0_170 = arith.constant 0 : index
    %197 = vector.load %arg13[%c3_168, %c0_169, %c0_170] : memref<4x16x290xbf16, #tpu.memory_space<vmem>>, vector<1x4x256xbf16>
    %198 = vector.shape_cast %197 : vector<1x4x256xbf16> to vector<4x256xbf16>
    %cst_171 = arith.constant 0.000000e+00 : bf16
    %199 = vector.broadcast %cst_171 : bf16 to vector<4x256xbf16>
    %200 = vector.shape_cast %18 : vector<1x256xi1> to vector<1x256xi1>
    %201 = vector.broadcast %200 : vector<1x256xi1> to vector<4x256xi1>
    %202 = arith.select %201, %198, %199 : vector<4x256xi1>, vector<4x256xbf16>
    %c0_172 = arith.constant 0 : index
    %c768 = arith.constant 768 : index
    %203 = vector.load %arg14[%c0_172, %c768] : memref<144x1024xbf16, #tpu.memory_space<vmem>>, vector<4x256xbf16>
    tpu.vector_store %arg14[%c0_172, %c768], %202 {strides = array<i32>} : memref<144x1024xbf16, #tpu.memory_space<vmem>>, vector<4x256xbf16>,
    %c3_173 = arith.constant 3 : index
    %c0_174 = arith.constant 0 : index
    %c1_175 = arith.constant 1 : index
    %204 = vector.load %arg13[%c3_173, %c0_174, %c1_175] : memref<4x16x290xbf16, #tpu.memory_space<vmem>>, vector<1x4x256xbf16>
    %205 = vector.shape_cast %204 : vector<1x4x256xbf16> to vector<4x256xbf16>
    %c4_176 = arith.constant 4 : index
    %c768_177 = arith.constant 768 : index
    %206 = vector.load %arg14[%c4_176, %c768_177] : memref<144x1024xbf16, #tpu.memory_space<vmem>>, vector<4x256xbf16>
    tpu.vector_store %arg14[%c4_176, %c768_177], %205 {strides = array<i32>} : memref<144x1024xbf16, #tpu.memory_space<vmem>>, vector<4x256xbf16>,
    %c3_178 = arith.constant 3 : index
    %c0_179 = arith.constant 0 : index
    %c2_180 = arith.constant 2 : index
    %207 = vector.load %arg13[%c3_178, %c0_179, %c2_180] : memref<4x16x290xbf16, #tpu.memory_space<vmem>>, vector<1x4x256xbf16>
    %208 = vector.shape_cast %207 : vector<1x4x256xbf16> to vector<4x256xbf16>
    %cst_181 = arith.constant 0.000000e+00 : bf16
    %209 = vector.broadcast %cst_181 : bf16 to vector<4x256xbf16>
    %210 = vector.shape_cast %20 : vector<1x256xi1> to vector<1x256xi1>
    %211 = vector.broadcast %210 : vector<1x256xi1> to vector<4x256xi1>
    %212 = arith.select %211, %208, %209 : vector<4x256xi1>, vector<4x256xbf16>
    %c8_182 = arith.constant 8 : index
    %c768_183 = arith.constant 768 : index
    %213 = vector.load %arg14[%c8_182, %c768_183] : memref<144x1024xbf16, #tpu.memory_space<vmem>>, vector<4x256xbf16>
    tpu.vector_store %arg14[%c8_182, %c768_183], %212 {strides = array<i32>} : memref<144x1024xbf16, #tpu.memory_space<vmem>>, vector<4x256xbf16>,
    %c3_184 = arith.constant 3 : index
    %c0_185 = arith.constant 0 : index
    %c16_186 = arith.constant 16 : index
    %214 = vector.load %arg13[%c3_184, %c0_185, %c16_186] : memref<4x16x290xbf16, #tpu.memory_space<vmem>>, vector<1x4x256xbf16>
    %215 = vector.shape_cast %214 : vector<1x4x256xbf16> to vector<4x256xbf16>
    %cst_187 = arith.constant 0.000000e+00 : bf16
    %216 = vector.broadcast %cst_187 : bf16 to vector<4x256xbf16>
    %217 = vector.shape_cast %18 : vector<1x256xi1> to vector<1x256xi1>
    %218 = vector.broadcast %217 : vector<1x256xi1> to vector<4x256xi1>
    %219 = arith.select %218, %215, %216 : vector<4x256xi1>, vector<4x256xbf16>
    %c12_188 = arith.constant 12 : index
    %c768_189 = arith.constant 768 : index
    %220 = vector.load %arg14[%c12_188, %c768_189] : memref<144x1024xbf16, #tpu.memory_space<vmem>>, vector<4x256xbf16>
    tpu.vector_store %arg14[%c12_188, %c768_189], %219 {strides = array<i32>} : memref<144x1024xbf16, #tpu.memory_space<vmem>>, vector<4x256xbf16>,
    %c3_190 = arith.constant 3 : index
    %c0_191 = arith.constant 0 : index
    %c17_192 = arith.constant 17 : index
    %221 = vector.load %arg13[%c3_190, %c0_191, %c17_192] : memref<4x16x290xbf16, #tpu.memory_space<vmem>>, vector<1x4x256xbf16>
    %222 = vector.shape_cast %221 : vector<1x4x256xbf16> to vector<4x256xbf16>
    %c16_193 = arith.constant 16 : index
    %c768_194 = arith.constant 768 : index
    %223 = vector.load %arg14[%c16_193, %c768_194] : memref<144x1024xbf16, #tpu.memory_space<vmem>>, vector<4x256xbf16>
    tpu.vector_store %arg14[%c16_193, %c768_194], %222 {strides = array<i32>} : memref<144x1024xbf16, #tpu.memory_space<vmem>>, vector<4x256xbf16>,
    %c3_195 = arith.constant 3 : index
    %c0_196 = arith.constant 0 : index
    %c18_197 = arith.constant 18 : index
    %224 = vector.load %arg13[%c3_195, %c0_196, %c18_197] : memref<4x16x290xbf16, #tpu.memory_space<vmem>>, vector<1x4x256xbf16>
    %225 = vector.shape_cast %224 : vector<1x4x256xbf16> to vector<4x256xbf16>
    %cst_198 = arith.constant 0.000000e+00 : bf16
    %226 = vector.broadcast %cst_198 : bf16 to vector<4x256xbf16>
    %227 = vector.shape_cast %20 : vector<1x256xi1> to vector<1x256xi1>
    %228 = vector.broadcast %227 : vector<1x256xi1> to vector<4x256xi1>
    %229 = arith.select %228, %225, %226 : vector<4x256xi1>, vector<4x256xbf16>
    %c20_199 = arith.constant 20 : index
    %c768_200 = arith.constant 768 : index
    %230 = vector.load %arg14[%c20_199, %c768_200] : memref<144x1024xbf16, #tpu.memory_space<vmem>>, vector<4x256xbf16>
    tpu.vector_store %arg14[%c20_199, %c768_200], %229 {strides = array<i32>} : memref<144x1024xbf16, #tpu.memory_space<vmem>>, vector<4x256xbf16>,
    %c3_201 = arith.constant 3 : index
    %c0_202 = arith.constant 0 : index
    %c32_203 = arith.constant 32 : index
    %231 = vector.load %arg13[%c3_201, %c0_202, %c32_203] : memref<4x16x290xbf16, #tpu.memory_space<vmem>>, vector<1x4x256xbf16>
    %232 = vector.shape_cast %231 : vector<1x4x256xbf16> to vector<4x256xbf16>
    %cst_204 = arith.constant 0.000000e+00 : bf16
    %233 = vector.broadcast %cst_204 : bf16 to vector<4x256xbf16>
    %234 = vector.shape_cast %18 : vector<1x256xi1> to vector<1x256xi1>
    %235 = vector.broadcast %234 : vector<1x256xi1> to vector<4x256xi1>
    %236 = arith.select %235, %232, %233 : vector<4x256xi1>, vector<4x256xbf16>
    %c24_205 = arith.constant 24 : index
    %c768_206 = arith.constant 768 : index
    %237 = vector.load %arg14[%c24_205, %c768_206] : memref<144x1024xbf16, #tpu.memory_space<vmem>>, vector<4x256xbf16>
    tpu.vector_store %arg14[%c24_205, %c768_206], %236 {strides = array<i32>} : memref<144x1024xbf16, #tpu.memory_space<vmem>>, vector<4x256xbf16>,
    %c3_207 = arith.constant 3 : index
    %c0_208 = arith.constant 0 : index
    %c33_209 = arith.constant 33 : index
    %238 = vector.load %arg13[%c3_207, %c0_208, %c33_209] : memref<4x16x290xbf16, #tpu.memory_space<vmem>>, vector<1x4x256xbf16>
    %239 = vector.shape_cast %238 : vector<1x4x256xbf16> to vector<4x256xbf16>
    %c28_210 = arith.constant 28 : index
    %c768_211 = arith.constant 768 : index
    %240 = vector.load %arg14[%c28_210, %c768_211] : memref<144x1024xbf16, #tpu.memory_space<vmem>>, vector<4x256xbf16>
    tpu.vector_store %arg14[%c28_210, %c768_211], %239 {strides = array<i32>} : memref<144x1024xbf16, #tpu.memory_space<vmem>>, vector<4x256xbf16>,
    %c3_212 = arith.constant 3 : index
    %c0_213 = arith.constant 0 : index
    %c34_214 = arith.constant 34 : index
    %241 = vector.load %arg13[%c3_212, %c0_213, %c34_214] : memref<4x16x290xbf16, #tpu.memory_space<vmem>>, vector<1x4x256xbf16>
    %242 = vector.shape_cast %241 : vector<1x4x256xbf16> to vector<4x256xbf16>
    %cst_215 = arith.constant 0.000000e+00 : bf16
    %243 = vector.broadcast %cst_215 : bf16 to vector<4x256xbf16>
    %244 = vector.shape_cast %20 : vector<1x256xi1> to vector<1x256xi1>
    %245 = vector.broadcast %244 : vector<1x256xi1> to vector<4x256xi1>
    %246 = arith.select %245, %242, %243 : vector<4x256xi1>, vector<4x256xbf16>
    %c32_216 = arith.constant 32 : index
    %c768_217 = arith.constant 768 : index
    %247 = vector.load %arg14[%c32_216, %c768_217] : memref<144x1024xbf16, #tpu.memory_space<vmem>>, vector<4x256xbf16>
    tpu.vector_store %arg14[%c32_216, %c768_217], %246 {strides = array<i32>} : memref<144x1024xbf16, #tpu.memory_space<vmem>>, vector<4x256xbf16>,
    %c0_218 = arith.constant 0 : index
    %c0_219 = arith.constant 0 : index
    %248 = vector.load %arg2[%c0_218, %c0_219] : memref<16x36xbf16, #tpu.memory_space<vmem>>, vector<16x36xbf16>
    %c0_220 = arith.constant 0 : index
    %c0_221 = arith.constant 0 : index
    %249 = vector.load %arg14[%c0_220, %c0_221] : memref<144x1024xbf16, #tpu.memory_space<vmem>>, vector<36x1024xbf16>
    %cst_222 = arith.constant dense<0.000000e+00> : vector<16x1024xf32>
    %250 = tpu.matmul %248, %249, %cst_222 {dimension_numbers = #tpu.dot_dimension_numbers<[1], [0], [0], [1], [0, 0, 1, 1], [], []>} : vector<16x36xbf16>, vector<36x1024xbf16>, vector<16x1024xf32> -> vector<16x1024xf32>
    %c0_223 = arith.constant 0 : index
    %c0_224 = arith.constant 0 : index
    %251 = vector.load %arg3[%c0_223, %c0_224] : memref<16x1xf32, #tpu.memory_space<vmem>>, vector<16x1xf32>
    %252 = vector.broadcast %251 : vector<16x1xf32> to vector<16x1024xf32>
    %253 = arith.mulf %250, %252 : vector<16x1024xf32>
    %c0_225 = arith.constant 0 : index
    %c0_226 = arith.constant 0 : index
    %254 = vector.load %arg4[%c0_225, %c0_226] : memref<16x1xf32, #tpu.memory_space<vmem>>, vector<16x1xf32>
    %255 = vector.broadcast %254 : vector<16x1xf32> to vector<16x1024xf32>
    %256 = arith.addf %253, %255 : vector<16x1024xf32>
    %cst_227 = arith.constant 0.000000e+00 : f32
    %257 = vector.broadcast %cst_227 : f32 to vector<16x1024xf32>
    %258 = arith.maximumf %256, %257 : vector<16x1024xf32>
    %259 = arith.truncf %258 : vector<16x1024xf32> to vector<16x1024xbf16>
    %260 = vector.extract_strided_slice %259 {offsets = [0, 0], sizes = [16, 256], strides = [1, 1]} : vector<16x1024xbf16> to vector<16x256xbf16>
    %c0_228 = arith.constant 0 : index
    %c0_229 = arith.constant 0 : index
    %c17_230 = arith.constant 17 : index
    %261 = vector.load %arg13[%c0_228, %c0_229, %c17_230] : memref<4x16x290xbf16, #tpu.memory_space<vmem>>, vector<1x16x256xbf16>
    %262 = vector.shape_cast %261 : vector<1x16x256xbf16> to vector<16x256xbf16>
    %263 = vector.shape_cast %260 : vector<16x256xbf16> to vector<1x16x256xbf16>
    tpu.vector_store %arg13[%c0_228, %c0_229, %c17_230], %263 {strides = array<i32>} : memref<4x16x290xbf16, #tpu.memory_space<vmem>>, vector<1x16x256xbf16>,
    %c0_231 = arith.constant 0 : index
    %c0_232 = arith.constant 0 : index
    %c0_233 = arith.constant 0 : index
    %264 = vector.load %arg13[%c0_231, %c0_232, %c0_233] : memref<4x16x290xbf16, #tpu.memory_space<vmem>>, vector<1x16x256xbf16>
    %265 = vector.shape_cast %264 : vector<1x16x256xbf16> to vector<16x256xbf16>
    %cst_234 = arith.constant 0.000000e+00 : bf16
    %266 = vector.broadcast %cst_234 : bf16 to vector<16x256xbf16>
    %267 = vector.shape_cast %18 : vector<1x256xi1> to vector<1x256xi1>
    %268 = vector.broadcast %267 : vector<1x256xi1> to vector<16x256xi1>
    %269 = arith.select %268, %265, %266 : vector<16x256xi1>, vector<16x256xbf16>
    %c0_235 = arith.constant 0 : index
    %c0_236 = arith.constant 0 : index
    %270 = vector.load %arg14[%c0_235, %c0_236] : memref<144x1024xbf16, #tpu.memory_space<vmem>>, vector<16x256xbf16>
    tpu.vector_store %arg14[%c0_235, %c0_236], %269 {strides = array<i32>} : memref<144x1024xbf16, #tpu.memory_space<vmem>>, vector<16x256xbf16>,
    %c0_237 = arith.constant 0 : index
    %c0_238 = arith.constant 0 : index
    %c1_239 = arith.constant 1 : index
    %271 = vector.load %arg13[%c0_237, %c0_238, %c1_239] : memref<4x16x290xbf16, #tpu.memory_space<vmem>>, vector<1x16x256xbf16>
    %272 = vector.shape_cast %271 : vector<1x16x256xbf16> to vector<16x256xbf16>
    %c16_240 = arith.constant 16 : index
    %c0_241 = arith.constant 0 : index
    %273 = vector.load %arg14[%c16_240, %c0_241] : memref<144x1024xbf16, #tpu.memory_space<vmem>>, vector<16x256xbf16>
    tpu.vector_store %arg14[%c16_240, %c0_241], %272 {strides = array<i32>} : memref<144x1024xbf16, #tpu.memory_space<vmem>>, vector<16x256xbf16>,
    %c0_242 = arith.constant 0 : index
    %c0_243 = arith.constant 0 : index
    %c2_244 = arith.constant 2 : index
    %274 = vector.load %arg13[%c0_242, %c0_243, %c2_244] : memref<4x16x290xbf16, #tpu.memory_space<vmem>>, vector<1x16x256xbf16>
    %275 = vector.shape_cast %274 : vector<1x16x256xbf16> to vector<16x256xbf16>
    %cst_245 = arith.constant 0.000000e+00 : bf16
    %276 = vector.broadcast %cst_245 : bf16 to vector<16x256xbf16>
    %277 = vector.shape_cast %20 : vector<1x256xi1> to vector<1x256xi1>
    %278 = vector.broadcast %277 : vector<1x256xi1> to vector<16x256xi1>
    %279 = arith.select %278, %275, %276 : vector<16x256xi1>, vector<16x256xbf16>
    %c32_246 = arith.constant 32 : index
    %c0_247 = arith.constant 0 : index
    %280 = vector.load %arg14[%c32_246, %c0_247] : memref<144x1024xbf16, #tpu.memory_space<vmem>>, vector<16x256xbf16>
    tpu.vector_store %arg14[%c32_246, %c0_247], %279 {strides = array<i32>} : memref<144x1024xbf16, #tpu.memory_space<vmem>>, vector<16x256xbf16>,
    %c0_248 = arith.constant 0 : index
    %c0_249 = arith.constant 0 : index
    %c16_250 = arith.constant 16 : index
    %281 = vector.load %arg13[%c0_248, %c0_249, %c16_250] : memref<4x16x290xbf16, #tpu.memory_space<vmem>>, vector<1x16x256xbf16>
    %282 = vector.shape_cast %281 : vector<1x16x256xbf16> to vector<16x256xbf16>
    %cst_251 = arith.constant 0.000000e+00 : bf16
    %283 = vector.broadcast %cst_251 : bf16 to vector<16x256xbf16>
    %284 = vector.shape_cast %18 : vector<1x256xi1> to vector<1x256xi1>
    %285 = vector.broadcast %284 : vector<1x256xi1> to vector<16x256xi1>
    %286 = arith.select %285, %282, %283 : vector<16x256xi1>, vector<16x256xbf16>
    %c48 = arith.constant 48 : index
    %c0_252 = arith.constant 0 : index
    %287 = vector.load %arg14[%c48, %c0_252] : memref<144x1024xbf16, #tpu.memory_space<vmem>>, vector<16x256xbf16>
    tpu.vector_store %arg14[%c48, %c0_252], %286 {strides = array<i32>} : memref<144x1024xbf16, #tpu.memory_space<vmem>>, vector<16x256xbf16>,
    %c0_253 = arith.constant 0 : index
    %c0_254 = arith.constant 0 : index
    %c17_255 = arith.constant 17 : index
    %288 = vector.load %arg13[%c0_253, %c0_254, %c17_255] : memref<4x16x290xbf16, #tpu.memory_space<vmem>>, vector<1x16x256xbf16>
    %289 = vector.shape_cast %288 : vector<1x16x256xbf16> to vector<16x256xbf16>
    %c64 = arith.constant 64 : index
    %c0_256 = arith.constant 0 : index
    %290 = vector.load %arg14[%c64, %c0_256] : memref<144x1024xbf16, #tpu.memory_space<vmem>>, vector<16x256xbf16>
    tpu.vector_store %arg14[%c64, %c0_256], %289 {strides = array<i32>} : memref<144x1024xbf16, #tpu.memory_space<vmem>>, vector<16x256xbf16>,
    %c0_257 = arith.constant 0 : index
    %c0_258 = arith.constant 0 : index
    %c18_259 = arith.constant 18 : index
    %291 = vector.load %arg13[%c0_257, %c0_258, %c18_259] : memref<4x16x290xbf16, #tpu.memory_space<vmem>>, vector<1x16x256xbf16>
    %292 = vector.shape_cast %291 : vector<1x16x256xbf16> to vector<16x256xbf16>
    %cst_260 = arith.constant 0.000000e+00 : bf16
    %293 = vector.broadcast %cst_260 : bf16 to vector<16x256xbf16>
    %294 = vector.shape_cast %20 : vector<1x256xi1> to vector<1x256xi1>
    %295 = vector.broadcast %294 : vector<1x256xi1> to vector<16x256xi1>
    %296 = arith.select %295, %292, %293 : vector<16x256xi1>, vector<16x256xbf16>
    %c80 = arith.constant 80 : index
    %c0_261 = arith.constant 0 : index
    %297 = vector.load %arg14[%c80, %c0_261] : memref<144x1024xbf16, #tpu.memory_space<vmem>>, vector<16x256xbf16>
    tpu.vector_store %arg14[%c80, %c0_261], %296 {strides = array<i32>} : memref<144x1024xbf16, #tpu.memory_space<vmem>>, vector<16x256xbf16>,
    %c0_262 = arith.constant 0 : index
    %c0_263 = arith.constant 0 : index
    %c32_264 = arith.constant 32 : index
    %298 = vector.load %arg13[%c0_262, %c0_263, %c32_264] : memref<4x16x290xbf16, #tpu.memory_space<vmem>>, vector<1x16x256xbf16>
    %299 = vector.shape_cast %298 : vector<1x16x256xbf16> to vector<16x256xbf16>
    %cst_265 = arith.constant 0.000000e+00 : bf16
    %300 = vector.broadcast %cst_265 : bf16 to vector<16x256xbf16>
    %301 = vector.shape_cast %18 : vector<1x256xi1> to vector<1x256xi1>
    %302 = vector.broadcast %301 : vector<1x256xi1> to vector<16x256xi1>
    %303 = arith.select %302, %299, %300 : vector<16x256xi1>, vector<16x256xbf16>
    %c96 = arith.constant 96 : index
    %c0_266 = arith.constant 0 : index
    %304 = vector.load %arg14[%c96, %c0_266] : memref<144x1024xbf16, #tpu.memory_space<vmem>>, vector<16x256xbf16>
    tpu.vector_store %arg14[%c96, %c0_266], %303 {strides = array<i32>} : memref<144x1024xbf16, #tpu.memory_space<vmem>>, vector<16x256xbf16>,
    %c0_267 = arith.constant 0 : index
    %c0_268 = arith.constant 0 : index
    %c33_269 = arith.constant 33 : index
    %305 = vector.load %arg13[%c0_267, %c0_268, %c33_269] : memref<4x16x290xbf16, #tpu.memory_space<vmem>>, vector<1x16x256xbf16>
    %306 = vector.shape_cast %305 : vector<1x16x256xbf16> to vector<16x256xbf16>
    %c112 = arith.constant 112 : index
    %c0_270 = arith.constant 0 : index
    %307 = vector.load %arg14[%c112, %c0_270] : memref<144x1024xbf16, #tpu.memory_space<vmem>>, vector<16x256xbf16>
    tpu.vector_store %arg14[%c112, %c0_270], %306 {strides = array<i32>} : memref<144x1024xbf16, #tpu.memory_space<vmem>>, vector<16x256xbf16>,
    %c0_271 = arith.constant 0 : index
    %c0_272 = arith.constant 0 : index
    %c34_273 = arith.constant 34 : index
    %308 = vector.load %arg13[%c0_271, %c0_272, %c34_273] : memref<4x16x290xbf16, #tpu.memory_space<vmem>>, vector<1x16x256xbf16>
    %309 = vector.shape_cast %308 : vector<1x16x256xbf16> to vector<16x256xbf16>
    %cst_274 = arith.constant 0.000000e+00 : bf16
    %310 = vector.broadcast %cst_274 : bf16 to vector<16x256xbf16>
    %311 = vector.shape_cast %20 : vector<1x256xi1> to vector<1x256xi1>
    %312 = vector.broadcast %311 : vector<1x256xi1> to vector<16x256xi1>
    %313 = arith.select %312, %309, %310 : vector<16x256xi1>, vector<16x256xbf16>
    %c128 = arith.constant 128 : index
    %c0_275 = arith.constant 0 : index
    %314 = vector.load %arg14[%c128, %c0_275] : memref<144x1024xbf16, #tpu.memory_space<vmem>>, vector<16x256xbf16>
    tpu.vector_store %arg14[%c128, %c0_275], %313 {strides = array<i32>} : memref<144x1024xbf16, #tpu.memory_space<vmem>>, vector<16x256xbf16>,
    %315 = vector.extract_strided_slice %259 {offsets = [0, 256], sizes = [16, 256], strides = [1, 1]} : vector<16x1024xbf16> to vector<16x256xbf16>
    %c1_276 = arith.constant 1 : index
    %c0_277 = arith.constant 0 : index
    %c17_278 = arith.constant 17 : index
    %316 = vector.load %arg13[%c1_276, %c0_277, %c17_278] : memref<4x16x290xbf16, #tpu.memory_space<vmem>>, vector<1x16x256xbf16>
    %317 = vector.shape_cast %316 : vector<1x16x256xbf16> to vector<16x256xbf16>
    %318 = vector.shape_cast %315 : vector<16x256xbf16> to vector<1x16x256xbf16>
    tpu.vector_store %arg13[%c1_276, %c0_277, %c17_278], %318 {strides = array<i32>} : memref<4x16x290xbf16, #tpu.memory_space<vmem>>, vector<1x16x256xbf16>,
    %c1_279 = arith.constant 1 : index
    %c0_280 = arith.constant 0 : index
    %c0_281 = arith.constant 0 : index
    %319 = vector.load %arg13[%c1_279, %c0_280, %c0_281] : memref<4x16x290xbf16, #tpu.memory_space<vmem>>, vector<1x16x256xbf16>
    %320 = vector.shape_cast %319 : vector<1x16x256xbf16> to vector<16x256xbf16>
    %cst_282 = arith.constant 0.000000e+00 : bf16
    %321 = vector.broadcast %cst_282 : bf16 to vector<16x256xbf16>
    %322 = vector.shape_cast %18 : vector<1x256xi1> to vector<1x256xi1>
    %323 = vector.broadcast %322 : vector<1x256xi1> to vector<16x256xi1>
    %324 = arith.select %323, %320, %321 : vector<16x256xi1>, vector<16x256xbf16>
    %c0_283 = arith.constant 0 : index
    %c256_284 = arith.constant 256 : index
    %325 = vector.load %arg14[%c0_283, %c256_284] : memref<144x1024xbf16, #tpu.memory_space<vmem>>, vector<16x256xbf16>
    tpu.vector_store %arg14[%c0_283, %c256_284], %324 {strides = array<i32>} : memref<144x1024xbf16, #tpu.memory_space<vmem>>, vector<16x256xbf16>,
    %c1_285 = arith.constant 1 : index
    %c0_286 = arith.constant 0 : index
    %c1_287 = arith.constant 1 : index
    %326 = vector.load %arg13[%c1_285, %c0_286, %c1_287] : memref<4x16x290xbf16, #tpu.memory_space<vmem>>, vector<1x16x256xbf16>
    %327 = vector.shape_cast %326 : vector<1x16x256xbf16> to vector<16x256xbf16>
    %c16_288 = arith.constant 16 : index
    %c256_289 = arith.constant 256 : index
    %328 = vector.load %arg14[%c16_288, %c256_289] : memref<144x1024xbf16, #tpu.memory_space<vmem>>, vector<16x256xbf16>
    tpu.vector_store %arg14[%c16_288, %c256_289], %327 {strides = array<i32>} : memref<144x1024xbf16, #tpu.memory_space<vmem>>, vector<16x256xbf16>,
    %c1_290 = arith.constant 1 : index
    %c0_291 = arith.constant 0 : index
    %c2_292 = arith.constant 2 : index
    %329 = vector.load %arg13[%c1_290, %c0_291, %c2_292] : memref<4x16x290xbf16, #tpu.memory_space<vmem>>, vector<1x16x256xbf16>
    %330 = vector.shape_cast %329 : vector<1x16x256xbf16> to vector<16x256xbf16>
    %cst_293 = arith.constant 0.000000e+00 : bf16
    %331 = vector.broadcast %cst_293 : bf16 to vector<16x256xbf16>
    %332 = vector.shape_cast %20 : vector<1x256xi1> to vector<1x256xi1>
    %333 = vector.broadcast %332 : vector<1x256xi1> to vector<16x256xi1>
    %334 = arith.select %333, %330, %331 : vector<16x256xi1>, vector<16x256xbf16>
    %c32_294 = arith.constant 32 : index
    %c256_295 = arith.constant 256 : index
    %335 = vector.load %arg14[%c32_294, %c256_295] : memref<144x1024xbf16, #tpu.memory_space<vmem>>, vector<16x256xbf16>
    tpu.vector_store %arg14[%c32_294, %c256_295], %334 {strides = array<i32>} : memref<144x1024xbf16, #tpu.memory_space<vmem>>, vector<16x256xbf16>,
    %c1_296 = arith.constant 1 : index
    %c0_297 = arith.constant 0 : index
    %c16_298 = arith.constant 16 : index
    %336 = vector.load %arg13[%c1_296, %c0_297, %c16_298] : memref<4x16x290xbf16, #tpu.memory_space<vmem>>, vector<1x16x256xbf16>
    %337 = vector.shape_cast %336 : vector<1x16x256xbf16> to vector<16x256xbf16>
    %cst_299 = arith.constant 0.000000e+00 : bf16
    %338 = vector.broadcast %cst_299 : bf16 to vector<16x256xbf16>
    %339 = vector.shape_cast %18 : vector<1x256xi1> to vector<1x256xi1>
    %340 = vector.broadcast %339 : vector<1x256xi1> to vector<16x256xi1>
    %341 = arith.select %340, %337, %338 : vector<16x256xi1>, vector<16x256xbf16>
    %c48_300 = arith.constant 48 : index
    %c256_301 = arith.constant 256 : index
    %342 = vector.load %arg14[%c48_300, %c256_301] : memref<144x1024xbf16, #tpu.memory_space<vmem>>, vector<16x256xbf16>
    tpu.vector_store %arg14[%c48_300, %c256_301], %341 {strides = array<i32>} : memref<144x1024xbf16, #tpu.memory_space<vmem>>, vector<16x256xbf16>,
    %c1_302 = arith.constant 1 : index
    %c0_303 = arith.constant 0 : index
    %c17_304 = arith.constant 17 : index
    %343 = vector.load %arg13[%c1_302, %c0_303, %c17_304] : memref<4x16x290xbf16, #tpu.memory_space<vmem>>, vector<1x16x256xbf16>
    %344 = vector.shape_cast %343 : vector<1x16x256xbf16> to vector<16x256xbf16>
    %c64_305 = arith.constant 64 : index
    %c256_306 = arith.constant 256 : index
    %345 = vector.load %arg14[%c64_305, %c256_306] : memref<144x1024xbf16, #tpu.memory_space<vmem>>, vector<16x256xbf16>
    tpu.vector_store %arg14[%c64_305, %c256_306], %344 {strides = array<i32>} : memref<144x1024xbf16, #tpu.memory_space<vmem>>, vector<16x256xbf16>,
    %c1_307 = arith.constant 1 : index
    %c0_308 = arith.constant 0 : index
    %c18_309 = arith.constant 18 : index
    %346 = vector.load %arg13[%c1_307, %c0_308, %c18_309] : memref<4x16x290xbf16, #tpu.memory_space<vmem>>, vector<1x16x256xbf16>
    %347 = vector.shape_cast %346 : vector<1x16x256xbf16> to vector<16x256xbf16>
    %cst_310 = arith.constant 0.000000e+00 : bf16
    %348 = vector.broadcast %cst_310 : bf16 to vector<16x256xbf16>
    %349 = vector.shape_cast %20 : vector<1x256xi1> to vector<1x256xi1>
    %350 = vector.broadcast %349 : vector<1x256xi1> to vector<16x256xi1>
    %351 = arith.select %350, %347, %348 : vector<16x256xi1>, vector<16x256xbf16>
    %c80_311 = arith.constant 80 : index
    %c256_312 = arith.constant 256 : index
    %352 = vector.load %arg14[%c80_311, %c256_312] : memref<144x1024xbf16, #tpu.memory_space<vmem>>, vector<16x256xbf16>
    tpu.vector_store %arg14[%c80_311, %c256_312], %351 {strides = array<i32>} : memref<144x1024xbf16, #tpu.memory_space<vmem>>, vector<16x256xbf16>,
    %c1_313 = arith.constant 1 : index
    %c0_314 = arith.constant 0 : index
    %c32_315 = arith.constant 32 : index
    %353 = vector.load %arg13[%c1_313, %c0_314, %c32_315] : memref<4x16x290xbf16, #tpu.memory_space<vmem>>, vector<1x16x256xbf16>
    %354 = vector.shape_cast %353 : vector<1x16x256xbf16> to vector<16x256xbf16>
    %cst_316 = arith.constant 0.000000e+00 : bf16
    %355 = vector.broadcast %cst_316 : bf16 to vector<16x256xbf16>
    %356 = vector.shape_cast %18 : vector<1x256xi1> to vector<1x256xi1>
    %357 = vector.broadcast %356 : vector<1x256xi1> to vector<16x256xi1>
    %358 = arith.select %357, %354, %355 : vector<16x256xi1>, vector<16x256xbf16>
    %c96_317 = arith.constant 96 : index
    %c256_318 = arith.constant 256 : index
    %359 = vector.load %arg14[%c96_317, %c256_318] : memref<144x1024xbf16, #tpu.memory_space<vmem>>, vector<16x256xbf16>
    tpu.vector_store %arg14[%c96_317, %c256_318], %358 {strides = array<i32>} : memref<144x1024xbf16, #tpu.memory_space<vmem>>, vector<16x256xbf16>,
    %c1_319 = arith.constant 1 : index
    %c0_320 = arith.constant 0 : index
    %c33_321 = arith.constant 33 : index
    %360 = vector.load %arg13[%c1_319, %c0_320, %c33_321] : memref<4x16x290xbf16, #tpu.memory_space<vmem>>, vector<1x16x256xbf16>
    %361 = vector.shape_cast %360 : vector<1x16x256xbf16> to vector<16x256xbf16>
    %c112_322 = arith.constant 112 : index
    %c256_323 = arith.constant 256 : index
    %362 = vector.load %arg14[%c112_322, %c256_323] : memref<144x1024xbf16, #tpu.memory_space<vmem>>, vector<16x256xbf16>
    tpu.vector_store %arg14[%c112_322, %c256_323], %361 {strides = array<i32>} : memref<144x1024xbf16, #tpu.memory_space<vmem>>, vector<16x256xbf16>,
    %c1_324 = arith.constant 1 : index
    %c0_325 = arith.constant 0 : index
    %c34_326 = arith.constant 34 : index
    %363 = vector.load %arg13[%c1_324, %c0_325, %c34_326] : memref<4x16x290xbf16, #tpu.memory_space<vmem>>, vector<1x16x256xbf16>
    %364 = vector.shape_cast %363 : vector<1x16x256xbf16> to vector<16x256xbf16>
    %cst_327 = arith.constant 0.000000e+00 : bf16
    %365 = vector.broadcast %cst_327 : bf16 to vector<16x256xbf16>
    %366 = vector.shape_cast %20 : vector<1x256xi1> to vector<1x256xi1>
    %367 = vector.broadcast %366 : vector<1x256xi1> to vector<16x256xi1>
    %368 = arith.select %367, %364, %365 : vector<16x256xi1>, vector<16x256xbf16>
    %c128_328 = arith.constant 128 : index
    %c256_329 = arith.constant 256 : index
    %369 = vector.load %arg14[%c128_328, %c256_329] : memref<144x1024xbf16, #tpu.memory_space<vmem>>, vector<16x256xbf16>
    tpu.vector_store %arg14[%c128_328, %c256_329], %368 {strides = array<i32>} : memref<144x1024xbf16, #tpu.memory_space<vmem>>, vector<16x256xbf16>,
    %370 = vector.extract_strided_slice %259 {offsets = [0, 512], sizes = [16, 256], strides = [1, 1]} : vector<16x1024xbf16> to vector<16x256xbf16>
    %c2_330 = arith.constant 2 : index
    %c0_331 = arith.constant 0 : index
    %c17_332 = arith.constant 17 : index
    %371 = vector.load %arg13[%c2_330, %c0_331, %c17_332] : memref<4x16x290xbf16, #tpu.memory_space<vmem>>, vector<1x16x256xbf16>
    %372 = vector.shape_cast %371 : vector<1x16x256xbf16> to vector<16x256xbf16>
    %373 = vector.shape_cast %370 : vector<16x256xbf16> to vector<1x16x256xbf16>
    tpu.vector_store %arg13[%c2_330, %c0_331, %c17_332], %373 {strides = array<i32>} : memref<4x16x290xbf16, #tpu.memory_space<vmem>>, vector<1x16x256xbf16>,
    %c2_333 = arith.constant 2 : index
    %c0_334 = arith.constant 0 : index
    %c0_335 = arith.constant 0 : index
    %374 = vector.load %arg13[%c2_333, %c0_334, %c0_335] : memref<4x16x290xbf16, #tpu.memory_space<vmem>>, vector<1x16x256xbf16>
    %375 = vector.shape_cast %374 : vector<1x16x256xbf16> to vector<16x256xbf16>
    %cst_336 = arith.constant 0.000000e+00 : bf16
    %376 = vector.broadcast %cst_336 : bf16 to vector<16x256xbf16>
    %377 = vector.shape_cast %18 : vector<1x256xi1> to vector<1x256xi1>
    %378 = vector.broadcast %377 : vector<1x256xi1> to vector<16x256xi1>
    %379 = arith.select %378, %375, %376 : vector<16x256xi1>, vector<16x256xbf16>
    %c0_337 = arith.constant 0 : index
    %c512_338 = arith.constant 512 : index
    %380 = vector.load %arg14[%c0_337, %c512_338] : memref<144x1024xbf16, #tpu.memory_space<vmem>>, vector<16x256xbf16>
    tpu.vector_store %arg14[%c0_337, %c512_338], %379 {strides = array<i32>} : memref<144x1024xbf16, #tpu.memory_space<vmem>>, vector<16x256xbf16>,
    %c2_339 = arith.constant 2 : index
    %c0_340 = arith.constant 0 : index
    %c1_341 = arith.constant 1 : index
    %381 = vector.load %arg13[%c2_339, %c0_340, %c1_341] : memref<4x16x290xbf16, #tpu.memory_space<vmem>>, vector<1x16x256xbf16>
    %382 = vector.shape_cast %381 : vector<1x16x256xbf16> to vector<16x256xbf16>
    %c16_342 = arith.constant 16 : index
    %c512_343 = arith.constant 512 : index
    %383 = vector.load %arg14[%c16_342, %c512_343] : memref<144x1024xbf16, #tpu.memory_space<vmem>>, vector<16x256xbf16>
    tpu.vector_store %arg14[%c16_342, %c512_343], %382 {strides = array<i32>} : memref<144x1024xbf16, #tpu.memory_space<vmem>>, vector<16x256xbf16>,
    %c2_344 = arith.constant 2 : index
    %c0_345 = arith.constant 0 : index
    %c2_346 = arith.constant 2 : index
    %384 = vector.load %arg13[%c2_344, %c0_345, %c2_346] : memref<4x16x290xbf16, #tpu.memory_space<vmem>>, vector<1x16x256xbf16>
    %385 = vector.shape_cast %384 : vector<1x16x256xbf16> to vector<16x256xbf16>
    %cst_347 = arith.constant 0.000000e+00 : bf16
    %386 = vector.broadcast %cst_347 : bf16 to vector<16x256xbf16>
    %387 = vector.shape_cast %20 : vector<1x256xi1> to vector<1x256xi1>
    %388 = vector.broadcast %387 : vector<1x256xi1> to vector<16x256xi1>
    %389 = arith.select %388, %385, %386 : vector<16x256xi1>, vector<16x256xbf16>
    %c32_348 = arith.constant 32 : index
    %c512_349 = arith.constant 512 : index
    %390 = vector.load %arg14[%c32_348, %c512_349] : memref<144x1024xbf16, #tpu.memory_space<vmem>>, vector<16x256xbf16>
    tpu.vector_store %arg14[%c32_348, %c512_349], %389 {strides = array<i32>} : memref<144x1024xbf16, #tpu.memory_space<vmem>>, vector<16x256xbf16>,
    %c2_350 = arith.constant 2 : index
    %c0_351 = arith.constant 0 : index
    %c16_352 = arith.constant 16 : index
    %391 = vector.load %arg13[%c2_350, %c0_351, %c16_352] : memref<4x16x290xbf16, #tpu.memory_space<vmem>>, vector<1x16x256xbf16>
    %392 = vector.shape_cast %391 : vector<1x16x256xbf16> to vector<16x256xbf16>
    %cst_353 = arith.constant 0.000000e+00 : bf16
    %393 = vector.broadcast %cst_353 : bf16 to vector<16x256xbf16>
    %394 = vector.shape_cast %18 : vector<1x256xi1> to vector<1x256xi1>
    %395 = vector.broadcast %394 : vector<1x256xi1> to vector<16x256xi1>
    %396 = arith.select %395, %392, %393 : vector<16x256xi1>, vector<16x256xbf16>
    %c48_354 = arith.constant 48 : index
    %c512_355 = arith.constant 512 : index
    %397 = vector.load %arg14[%c48_354, %c512_355] : memref<144x1024xbf16, #tpu.memory_space<vmem>>, vector<16x256xbf16>
    tpu.vector_store %arg14[%c48_354, %c512_355], %396 {strides = array<i32>} : memref<144x1024xbf16, #tpu.memory_space<vmem>>, vector<16x256xbf16>,
    %c2_356 = arith.constant 2 : index
    %c0_357 = arith.constant 0 : index
    %c17_358 = arith.constant 17 : index
    %398 = vector.load %arg13[%c2_356, %c0_357, %c17_358] : memref<4x16x290xbf16, #tpu.memory_space<vmem>>, vector<1x16x256xbf16>
    %399 = vector.shape_cast %398 : vector<1x16x256xbf16> to vector<16x256xbf16>
    %c64_359 = arith.constant 64 : index
    %c512_360 = arith.constant 512 : index
    %400 = vector.load %arg14[%c64_359, %c512_360] : memref<144x1024xbf16, #tpu.memory_space<vmem>>, vector<16x256xbf16>
    tpu.vector_store %arg14[%c64_359, %c512_360], %399 {strides = array<i32>} : memref<144x1024xbf16, #tpu.memory_space<vmem>>, vector<16x256xbf16>,
    %c2_361 = arith.constant 2 : index
    %c0_362 = arith.constant 0 : index
    %c18_363 = arith.constant 18 : index
    %401 = vector.load %arg13[%c2_361, %c0_362, %c18_363] : memref<4x16x290xbf16, #tpu.memory_space<vmem>>, vector<1x16x256xbf16>
    %402 = vector.shape_cast %401 : vector<1x16x256xbf16> to vector<16x256xbf16>
    %cst_364 = arith.constant 0.000000e+00 : bf16
    %403 = vector.broadcast %cst_364 : bf16 to vector<16x256xbf16>
    %404 = vector.shape_cast %20 : vector<1x256xi1> to vector<1x256xi1>
    %405 = vector.broadcast %404 : vector<1x256xi1> to vector<16x256xi1>
    %406 = arith.select %405, %402, %403 : vector<16x256xi1>, vector<16x256xbf16>
    %c80_365 = arith.constant 80 : index
    %c512_366 = arith.constant 512 : index
    %407 = vector.load %arg14[%c80_365, %c512_366] : memref<144x1024xbf16, #tpu.memory_space<vmem>>, vector<16x256xbf16>
    tpu.vector_store %arg14[%c80_365, %c512_366], %406 {strides = array<i32>} : memref<144x1024xbf16, #tpu.memory_space<vmem>>, vector<16x256xbf16>,
    %c2_367 = arith.constant 2 : index
    %c0_368 = arith.constant 0 : index
    %c32_369 = arith.constant 32 : index
    %408 = vector.load %arg13[%c2_367, %c0_368, %c32_369] : memref<4x16x290xbf16, #tpu.memory_space<vmem>>, vector<1x16x256xbf16>
    %409 = vector.shape_cast %408 : vector<1x16x256xbf16> to vector<16x256xbf16>
    %cst_370 = arith.constant 0.000000e+00 : bf16
    %410 = vector.broadcast %cst_370 : bf16 to vector<16x256xbf16>
    %411 = vector.shape_cast %18 : vector<1x256xi1> to vector<1x256xi1>
    %412 = vector.broadcast %411 : vector<1x256xi1> to vector<16x256xi1>
    %413 = arith.select %412, %409, %410 : vector<16x256xi1>, vector<16x256xbf16>
    %c96_371 = arith.constant 96 : index
    %c512_372 = arith.constant 512 : index
    %414 = vector.load %arg14[%c96_371, %c512_372] : memref<144x1024xbf16, #tpu.memory_space<vmem>>, vector<16x256xbf16>
    tpu.vector_store %arg14[%c96_371, %c512_372], %413 {strides = array<i32>} : memref<144x1024xbf16, #tpu.memory_space<vmem>>, vector<16x256xbf16>,
    %c2_373 = arith.constant 2 : index
    %c0_374 = arith.constant 0 : index
    %c33_375 = arith.constant 33 : index
    %415 = vector.load %arg13[%c2_373, %c0_374, %c33_375] : memref<4x16x290xbf16, #tpu.memory_space<vmem>>, vector<1x16x256xbf16>
    %416 = vector.shape_cast %415 : vector<1x16x256xbf16> to vector<16x256xbf16>
    %c112_376 = arith.constant 112 : index
    %c512_377 = arith.constant 512 : index
    %417 = vector.load %arg14[%c112_376, %c512_377] : memref<144x1024xbf16, #tpu.memory_space<vmem>>, vector<16x256xbf16>
    tpu.vector_store %arg14[%c112_376, %c512_377], %416 {strides = array<i32>} : memref<144x1024xbf16, #tpu.memory_space<vmem>>, vector<16x256xbf16>,
    %c2_378 = arith.constant 2 : index
    %c0_379 = arith.constant 0 : index
    %c34_380 = arith.constant 34 : index
    %418 = vector.load %arg13[%c2_378, %c0_379, %c34_380] : memref<4x16x290xbf16, #tpu.memory_space<vmem>>, vector<1x16x256xbf16>
    %419 = vector.shape_cast %418 : vector<1x16x256xbf16> to vector<16x256xbf16>
    %cst_381 = arith.constant 0.000000e+00 : bf16
    %420 = vector.broadcast %cst_381 : bf16 to vector<16x256xbf16>
    %421 = vector.shape_cast %20 : vector<1x256xi1> to vector<1x256xi1>
    %422 = vector.broadcast %421 : vector<1x256xi1> to vector<16x256xi1>
    %423 = arith.select %422, %419, %420 : vector<16x256xi1>, vector<16x256xbf16>
    %c128_382 = arith.constant 128 : index
    %c512_383 = arith.constant 512 : index
    %424 = vector.load %arg14[%c128_382, %c512_383] : memref<144x1024xbf16, #tpu.memory_space<vmem>>, vector<16x256xbf16>
    tpu.vector_store %arg14[%c128_382, %c512_383], %423 {strides = array<i32>} : memref<144x1024xbf16, #tpu.memory_space<vmem>>, vector<16x256xbf16>,
    %425 = vector.extract_strided_slice %259 {offsets = [0, 768], sizes = [16, 256], strides = [1, 1]} : vector<16x1024xbf16> to vector<16x256xbf16>
    %c3_384 = arith.constant 3 : index
    %c0_385 = arith.constant 0 : index
    %c17_386 = arith.constant 17 : index
    %426 = vector.load %arg13[%c3_384, %c0_385, %c17_386] : memref<4x16x290xbf16, #tpu.memory_space<vmem>>, vector<1x16x256xbf16>
    %427 = vector.shape_cast %426 : vector<1x16x256xbf16> to vector<16x256xbf16>
    %428 = vector.shape_cast %425 : vector<16x256xbf16> to vector<1x16x256xbf16>
    tpu.vector_store %arg13[%c3_384, %c0_385, %c17_386], %428 {strides = array<i32>} : memref<4x16x290xbf16, #tpu.memory_space<vmem>>, vector<1x16x256xbf16>,
    %c3_387 = arith.constant 3 : index
    %c0_388 = arith.constant 0 : index
    %c0_389 = arith.constant 0 : index
    %429 = vector.load %arg13[%c3_387, %c0_388, %c0_389] : memref<4x16x290xbf16, #tpu.memory_space<vmem>>, vector<1x16x256xbf16>
    %430 = vector.shape_cast %429 : vector<1x16x256xbf16> to vector<16x256xbf16>
    %cst_390 = arith.constant 0.000000e+00 : bf16
    %431 = vector.broadcast %cst_390 : bf16 to vector<16x256xbf16>
    %432 = vector.shape_cast %18 : vector<1x256xi1> to vector<1x256xi1>
    %433 = vector.broadcast %432 : vector<1x256xi1> to vector<16x256xi1>
    %434 = arith.select %433, %430, %431 : vector<16x256xi1>, vector<16x256xbf16>
    %c0_391 = arith.constant 0 : index
    %c768_392 = arith.constant 768 : index
    %435 = vector.load %arg14[%c0_391, %c768_392] : memref<144x1024xbf16, #tpu.memory_space<vmem>>, vector<16x256xbf16>
    tpu.vector_store %arg14[%c0_391, %c768_392], %434 {strides = array<i32>} : memref<144x1024xbf16, #tpu.memory_space<vmem>>, vector<16x256xbf16>,
    %c3_393 = arith.constant 3 : index
    %c0_394 = arith.constant 0 : index
    %c1_395 = arith.constant 1 : index
    %436 = vector.load %arg13[%c3_393, %c0_394, %c1_395] : memref<4x16x290xbf16, #tpu.memory_space<vmem>>, vector<1x16x256xbf16>
    %437 = vector.shape_cast %436 : vector<1x16x256xbf16> to vector<16x256xbf16>
    %c16_396 = arith.constant 16 : index
    %c768_397 = arith.constant 768 : index
    %438 = vector.load %arg14[%c16_396, %c768_397] : memref<144x1024xbf16, #tpu.memory_space<vmem>>, vector<16x256xbf16>
    tpu.vector_store %arg14[%c16_396, %c768_397], %437 {strides = array<i32>} : memref<144x1024xbf16, #tpu.memory_space<vmem>>, vector<16x256xbf16>,
    %c3_398 = arith.constant 3 : index
    %c0_399 = arith.constant 0 : index
    %c2_400 = arith.constant 2 : index
    %439 = vector.load %arg13[%c3_398, %c0_399, %c2_400] : memref<4x16x290xbf16, #tpu.memory_space<vmem>>, vector<1x16x256xbf16>
    %440 = vector.shape_cast %439 : vector<1x16x256xbf16> to vector<16x256xbf16>
    %cst_401 = arith.constant 0.000000e+00 : bf16
    %441 = vector.broadcast %cst_401 : bf16 to vector<16x256xbf16>
    %442 = vector.shape_cast %20 : vector<1x256xi1> to vector<1x256xi1>
    %443 = vector.broadcast %442 : vector<1x256xi1> to vector<16x256xi1>
    %444 = arith.select %443, %440, %441 : vector<16x256xi1>, vector<16x256xbf16>
    %c32_402 = arith.constant 32 : index
    %c768_403 = arith.constant 768 : index
    %445 = vector.load %arg14[%c32_402, %c768_403] : memref<144x1024xbf16, #tpu.memory_space<vmem>>, vector<16x256xbf16>
    tpu.vector_store %arg14[%c32_402, %c768_403], %444 {strides = array<i32>} : memref<144x1024xbf16, #tpu.memory_space<vmem>>, vector<16x256xbf16>,
    %c3_404 = arith.constant 3 : index
    %c0_405 = arith.constant 0 : index
    %c16_406 = arith.constant 16 : index
    %446 = vector.load %arg13[%c3_404, %c0_405, %c16_406] : memref<4x16x290xbf16, #tpu.memory_space<vmem>>, vector<1x16x256xbf16>
    %447 = vector.shape_cast %446 : vector<1x16x256xbf16> to vector<16x256xbf16>
    %cst_407 = arith.constant 0.000000e+00 : bf16
    %448 = vector.broadcast %cst_407 : bf16 to vector<16x256xbf16>
    %449 = vector.shape_cast %18 : vector<1x256xi1> to vector<1x256xi1>
    %450 = vector.broadcast %449 : vector<1x256xi1> to vector<16x256xi1>
    %451 = arith.select %450, %447, %448 : vector<16x256xi1>, vector<16x256xbf16>
    %c48_408 = arith.constant 48 : index
    %c768_409 = arith.constant 768 : index
    %452 = vector.load %arg14[%c48_408, %c768_409] : memref<144x1024xbf16, #tpu.memory_space<vmem>>, vector<16x256xbf16>
    tpu.vector_store %arg14[%c48_408, %c768_409], %451 {strides = array<i32>} : memref<144x1024xbf16, #tpu.memory_space<vmem>>, vector<16x256xbf16>,
    %c3_410 = arith.constant 3 : index
    %c0_411 = arith.constant 0 : index
    %c17_412 = arith.constant 17 : index
    %453 = vector.load %arg13[%c3_410, %c0_411, %c17_412] : memref<4x16x290xbf16, #tpu.memory_space<vmem>>, vector<1x16x256xbf16>
    %454 = vector.shape_cast %453 : vector<1x16x256xbf16> to vector<16x256xbf16>
    %c64_413 = arith.constant 64 : index
    %c768_414 = arith.constant 768 : index
    %455 = vector.load %arg14[%c64_413, %c768_414] : memref<144x1024xbf16, #tpu.memory_space<vmem>>, vector<16x256xbf16>
    tpu.vector_store %arg14[%c64_413, %c768_414], %454 {strides = array<i32>} : memref<144x1024xbf16, #tpu.memory_space<vmem>>, vector<16x256xbf16>,
    %c3_415 = arith.constant 3 : index
    %c0_416 = arith.constant 0 : index
    %c18_417 = arith.constant 18 : index
    %456 = vector.load %arg13[%c3_415, %c0_416, %c18_417] : memref<4x16x290xbf16, #tpu.memory_space<vmem>>, vector<1x16x256xbf16>
    %457 = vector.shape_cast %456 : vector<1x16x256xbf16> to vector<16x256xbf16>
    %cst_418 = arith.constant 0.000000e+00 : bf16
    %458 = vector.broadcast %cst_418 : bf16 to vector<16x256xbf16>
    %459 = vector.shape_cast %20 : vector<1x256xi1> to vector<1x256xi1>
    %460 = vector.broadcast %459 : vector<1x256xi1> to vector<16x256xi1>
    %461 = arith.select %460, %457, %458 : vector<16x256xi1>, vector<16x256xbf16>
    %c80_419 = arith.constant 80 : index
    %c768_420 = arith.constant 768 : index
    %462 = vector.load %arg14[%c80_419, %c768_420] : memref<144x1024xbf16, #tpu.memory_space<vmem>>, vector<16x256xbf16>
    tpu.vector_store %arg14[%c80_419, %c768_420], %461 {strides = array<i32>} : memref<144x1024xbf16, #tpu.memory_space<vmem>>, vector<16x256xbf16>,
    %c3_421 = arith.constant 3 : index
    %c0_422 = arith.constant 0 : index
    %c32_423 = arith.constant 32 : index
    %463 = vector.load %arg13[%c3_421, %c0_422, %c32_423] : memref<4x16x290xbf16, #tpu.memory_space<vmem>>, vector<1x16x256xbf16>
    %464 = vector.shape_cast %463 : vector<1x16x256xbf16> to vector<16x256xbf16>
    %cst_424 = arith.constant 0.000000e+00 : bf16
    %465 = vector.broadcast %cst_424 : bf16 to vector<16x256xbf16>
    %466 = vector.shape_cast %18 : vector<1x256xi1> to vector<1x256xi1>
    %467 = vector.broadcast %466 : vector<1x256xi1> to vector<16x256xi1>
    %468 = arith.select %467, %464, %465 : vector<16x256xi1>, vector<16x256xbf16>
    %c96_425 = arith.constant 96 : index
    %c768_426 = arith.constant 768 : index
    %469 = vector.load %arg14[%c96_425, %c768_426] : memref<144x1024xbf16, #tpu.memory_space<vmem>>, vector<16x256xbf16>
    tpu.vector_store %arg14[%c96_425, %c768_426], %468 {strides = array<i32>} : memref<144x1024xbf16, #tpu.memory_space<vmem>>, vector<16x256xbf16>,
    %c3_427 = arith.constant 3 : index
    %c0_428 = arith.constant 0 : index
    %c33_429 = arith.constant 33 : index
    %470 = vector.load %arg13[%c3_427, %c0_428, %c33_429] : memref<4x16x290xbf16, #tpu.memory_space<vmem>>, vector<1x16x256xbf16>
    %471 = vector.shape_cast %470 : vector<1x16x256xbf16> to vector<16x256xbf16>
    %c112_430 = arith.constant 112 : index
    %c768_431 = arith.constant 768 : index
    %472 = vector.load %arg14[%c112_430, %c768_431] : memref<144x1024xbf16, #tpu.memory_space<vmem>>, vector<16x256xbf16>
    tpu.vector_store %arg14[%c112_430, %c768_431], %471 {strides = array<i32>} : memref<144x1024xbf16, #tpu.memory_space<vmem>>, vector<16x256xbf16>,
    %c3_432 = arith.constant 3 : index
    %c0_433 = arith.constant 0 : index
    %c34_434 = arith.constant 34 : index
    %473 = vector.load %arg13[%c3_432, %c0_433, %c34_434] : memref<4x16x290xbf16, #tpu.memory_space<vmem>>, vector<1x16x256xbf16>
    %474 = vector.shape_cast %473 : vector<1x16x256xbf16> to vector<16x256xbf16>
    %cst_435 = arith.constant 0.000000e+00 : bf16
    %475 = vector.broadcast %cst_435 : bf16 to vector<16x256xbf16>
    %476 = vector.shape_cast %20 : vector<1x256xi1> to vector<1x256xi1>
    %477 = vector.broadcast %476 : vector<1x256xi1> to vector<16x256xi1>
    %478 = arith.select %477, %474, %475 : vector<16x256xi1>, vector<16x256xbf16>
    %c128_436 = arith.constant 128 : index
    %c768_437 = arith.constant 768 : index
    %479 = vector.load %arg14[%c128_436, %c768_437] : memref<144x1024xbf16, #tpu.memory_space<vmem>>, vector<16x256xbf16>
    tpu.vector_store %arg14[%c128_436, %c768_437], %478 {strides = array<i32>} : memref<144x1024xbf16, #tpu.memory_space<vmem>>, vector<16x256xbf16>,
    %c0_438 = arith.constant 0 : index
    %c0_439 = arith.constant 0 : index
    %480 = vector.load %arg5[%c0_438, %c0_439] : memref<16x144xbf16, #tpu.memory_space<vmem>>, vector<16x144xbf16>
    %c0_440 = arith.constant 0 : index
    %c0_441 = arith.constant 0 : index
    %481 = vector.load %arg14[%c0_440, %c0_441] : memref<144x1024xbf16, #tpu.memory_space<vmem>>, vector<144x1024xbf16>
    %cst_442 = arith.constant dense<0.000000e+00> : vector<16x1024xf32>
    %482 = tpu.matmul %480, %481, %cst_442 {dimension_numbers = #tpu.dot_dimension_numbers<[1], [0], [0], [1], [0, 0, 1, 1], [], []>} : vector<16x144xbf16>, vector<144x1024xbf16>, vector<16x1024xf32> -> vector<16x1024xf32>
    %c0_443 = arith.constant 0 : index
    %c0_444 = arith.constant 0 : index
    %483 = vector.load %arg6[%c0_443, %c0_444] : memref<16x1xf32, #tpu.memory_space<vmem>>, vector<16x1xf32>
    %484 = vector.broadcast %483 : vector<16x1xf32> to vector<16x1024xf32>
    %485 = arith.mulf %482, %484 : vector<16x1024xf32>
    %c0_445 = arith.constant 0 : index
    %c0_446 = arith.constant 0 : index
    %486 = vector.load %arg7[%c0_445, %c0_446] : memref<16x1xf32, #tpu.memory_space<vmem>>, vector<16x1xf32>
    %487 = vector.broadcast %486 : vector<16x1xf32> to vector<16x1024xf32>
    %488 = arith.addf %485, %487 : vector<16x1024xf32>
    %cst_447 = arith.constant 0.000000e+00 : f32
    %489 = vector.broadcast %cst_447 : f32 to vector<16x1024xf32>
    %490 = arith.maximumf %488, %489 : vector<16x1024xf32>
    %491 = vector.extract_strided_slice %490 {offsets = [0, 0], sizes = [16, 256], strides = [1, 1]} : vector<16x1024xf32> to vector<16x256xf32>
    %cst_448 = arith.constant dense<0.000000e+00> : vector<16xf32>
    %492 = vector.multi_reduction <add>, %491, %cst_448 [1] : vector<16x256xf32> to vector<16xf32>
    %493 = vector.shape_cast %492 : vector<16xf32> to vector<16x1xf32>
    %cst_449 = arith.constant 2.560000e+02 : f32
    %494 = vector.broadcast %cst_449 : f32 to vector<16x1xf32>
    %495 = arith.divf %493, %494 : vector<16x1xf32>
    %c0_450 = arith.constant 0 : index
    %c0_451 = arith.constant 0 : index
    %496 = vector.load %arg8[%c0_450, %c0_451] : memref<16x2xf32, #tpu.memory_space<vmem>>, vector<16x2xf32>
    %497 = vector.broadcast %495 : vector<16x1xf32> to vector<16x2xf32>
    %498 = arith.mulf %496, %497 : vector<16x2xf32>
    %cst_452 = arith.constant dense<0.000000e+00> : vector<2xf32>
    %499 = vector.multi_reduction <add>, %498, %cst_452 [0] : vector<16x2xf32> to vector<2xf32>
    %500 = vector.shape_cast %499 : vector<2xf32> to vector<1x2xf32>
    %c0_453 = arith.constant 0 : index
    %c0_454 = arith.constant 0 : index
    %501 = vector.load %arg9[%c0_453, %c0_454] : memref<1x2xf32, #tpu.memory_space<vmem>>, vector<1x2xf32>
    %502 = arith.addf %500, %501 : vector<1x2xf32>
    %cst_455 = arith.constant 0.000000e+00 : f32
    %503 = vector.broadcast %cst_455 : f32 to vector<1x2xf32>
    %504 = arith.maximumf %502, %503 : vector<1x2xf32>
    %c0_456 = arith.constant 0 : index
    %c0_457 = arith.constant 0 : index
    %505 = vector.load %arg10[%c0_456, %c0_457] : memref<16x2xf32, #tpu.memory_space<vmem>>, vector<16x2xf32>
    %506 = vector.broadcast %504 : vector<1x2xf32> to vector<16x2xf32>
    %507 = arith.mulf %505, %506 : vector<16x2xf32>
    %cst_458 = arith.constant dense<0.000000e+00> : vector<16xf32>
    %508 = vector.multi_reduction <add>, %507, %cst_458 [1] : vector<16x2xf32> to vector<16xf32>
    %509 = vector.shape_cast %508 : vector<16xf32> to vector<16x1xf32>
    %c0_459 = arith.constant 0 : index
    %c0_460 = arith.constant 0 : index
    %510 = vector.load %arg11[%c0_459, %c0_460] : memref<16x1xf32, #tpu.memory_space<vmem>>, vector<16x1xf32>
    %511 = arith.addf %509, %510 : vector<16x1xf32>
    %512 = arith.negf %511 : vector<16x1xf32>
    %513 = math.exp %512 : vector<16x1xf32>
    %cst_461 = arith.constant 1.000000e+00 : f32
    %514 = vector.broadcast %cst_461 : f32 to vector<16x1xf32>
    %515 = arith.addf %514, %513 : vector<16x1xf32>
    %516 = arith.divf %514, %515 : vector<16x1xf32>
    %517 = vector.broadcast %516 : vector<16x1xf32> to vector<16x256xf32>
    %518 = arith.mulf %491, %517 : vector<16x256xf32>
    %c0_462 = arith.constant 0 : index
    %c0_463 = arith.constant 0 : index
    %c0_464 = arith.constant 0 : index
    %519 = vector.load %arg12[%c0_462, %c0_463, %c0_464] : memref<4x16x256xf32, #tpu.memory_space<vmem>>, vector<1x16x256xf32>
    %520 = vector.shape_cast %519 : vector<1x16x256xf32> to vector<16x256xf32>
    %521 = vector.shape_cast %518 : vector<16x256xf32> to vector<1x16x256xf32>
    tpu.vector_store %arg12[%c0_462, %c0_463, %c0_464], %521 {strides = array<i32>} : memref<4x16x256xf32, #tpu.memory_space<vmem>>, vector<1x16x256xf32>,
    %522 = vector.extract_strided_slice %490 {offsets = [0, 256], sizes = [16, 256], strides = [1, 1]} : vector<16x1024xf32> to vector<16x256xf32>
    %cst_465 = arith.constant dense<0.000000e+00> : vector<16xf32>
    %523 = vector.multi_reduction <add>, %522, %cst_465 [1] : vector<16x256xf32> to vector<16xf32>
    %524 = vector.shape_cast %523 : vector<16xf32> to vector<16x1xf32>
    %cst_466 = arith.constant 2.560000e+02 : f32
    %525 = vector.broadcast %cst_466 : f32 to vector<16x1xf32>
    %526 = arith.divf %524, %525 : vector<16x1xf32>
    %c0_467 = arith.constant 0 : index
    %c0_468 = arith.constant 0 : index
    %527 = vector.load %arg8[%c0_467, %c0_468] : memref<16x2xf32, #tpu.memory_space<vmem>>, vector<16x2xf32>
    %528 = vector.broadcast %526 : vector<16x1xf32> to vector<16x2xf32>
    %529 = arith.mulf %527, %528 : vector<16x2xf32>
    %cst_469 = arith.constant dense<0.000000e+00> : vector<2xf32>
    %530 = vector.multi_reduction <add>, %529, %cst_469 [0] : vector<16x2xf32> to vector<2xf32>
    %531 = vector.shape_cast %530 : vector<2xf32> to vector<1x2xf32>
    %c0_470 = arith.constant 0 : index
    %c0_471 = arith.constant 0 : index
    %532 = vector.load %arg9[%c0_470, %c0_471] : memref<1x2xf32, #tpu.memory_space<vmem>>, vector<1x2xf32>
    %533 = arith.addf %531, %532 : vector<1x2xf32>
    %cst_472 = arith.constant 0.000000e+00 : f32
    %534 = vector.broadcast %cst_472 : f32 to vector<1x2xf32>
    %535 = arith.maximumf %533, %534 : vector<1x2xf32>
    %c0_473 = arith.constant 0 : index
    %c0_474 = arith.constant 0 : index
    %536 = vector.load %arg10[%c0_473, %c0_474] : memref<16x2xf32, #tpu.memory_space<vmem>>, vector<16x2xf32>
    %537 = vector.broadcast %535 : vector<1x2xf32> to vector<16x2xf32>
    %538 = arith.mulf %536, %537 : vector<16x2xf32>
    %cst_475 = arith.constant dense<0.000000e+00> : vector<16xf32>
    %539 = vector.multi_reduction <add>, %538, %cst_475 [1] : vector<16x2xf32> to vector<16xf32>
    %540 = vector.shape_cast %539 : vector<16xf32> to vector<16x1xf32>
    %c0_476 = arith.constant 0 : index
    %c0_477 = arith.constant 0 : index
    %541 = vector.load %arg11[%c0_476, %c0_477] : memref<16x1xf32, #tpu.memory_space<vmem>>, vector<16x1xf32>
    %542 = arith.addf %540, %541 : vector<16x1xf32>
    %543 = arith.negf %542 : vector<16x1xf32>
    %544 = math.exp %543 : vector<16x1xf32>
    %cst_478 = arith.constant 1.000000e+00 : f32
    %545 = vector.broadcast %cst_478 : f32 to vector<16x1xf32>
    %546 = arith.addf %545, %544 : vector<16x1xf32>
    %547 = arith.divf %545, %546 : vector<16x1xf32>
    %548 = vector.broadcast %547 : vector<16x1xf32> to vector<16x256xf32>
    %549 = arith.mulf %522, %548 : vector<16x256xf32>
    %c1_479 = arith.constant 1 : index
    %c0_480 = arith.constant 0 : index
    %c0_481 = arith.constant 0 : index
    %550 = vector.load %arg12[%c1_479, %c0_480, %c0_481] : memref<4x16x256xf32, #tpu.memory_space<vmem>>, vector<1x16x256xf32>
    %551 = vector.shape_cast %550 : vector<1x16x256xf32> to vector<16x256xf32>
    %552 = vector.shape_cast %549 : vector<16x256xf32> to vector<1x16x256xf32>
    tpu.vector_store %arg12[%c1_479, %c0_480, %c0_481], %552 {strides = array<i32>} : memref<4x16x256xf32, #tpu.memory_space<vmem>>, vector<1x16x256xf32>,
    %553 = vector.extract_strided_slice %490 {offsets = [0, 512], sizes = [16, 256], strides = [1, 1]} : vector<16x1024xf32> to vector<16x256xf32>
    %cst_482 = arith.constant dense<0.000000e+00> : vector<16xf32>
    %554 = vector.multi_reduction <add>, %553, %cst_482 [1] : vector<16x256xf32> to vector<16xf32>
    %555 = vector.shape_cast %554 : vector<16xf32> to vector<16x1xf32>
    %cst_483 = arith.constant 2.560000e+02 : f32
    %556 = vector.broadcast %cst_483 : f32 to vector<16x1xf32>
    %557 = arith.divf %555, %556 : vector<16x1xf32>
    %c0_484 = arith.constant 0 : index
    %c0_485 = arith.constant 0 : index
    %558 = vector.load %arg8[%c0_484, %c0_485] : memref<16x2xf32, #tpu.memory_space<vmem>>, vector<16x2xf32>
    %559 = vector.broadcast %557 : vector<16x1xf32> to vector<16x2xf32>
    %560 = arith.mulf %558, %559 : vector<16x2xf32>
    %cst_486 = arith.constant dense<0.000000e+00> : vector<2xf32>
    %561 = vector.multi_reduction <add>, %560, %cst_486 [0] : vector<16x2xf32> to vector<2xf32>
    %562 = vector.shape_cast %561 : vector<2xf32> to vector<1x2xf32>
    %c0_487 = arith.constant 0 : index
    %c0_488 = arith.constant 0 : index
    %563 = vector.load %arg9[%c0_487, %c0_488] : memref<1x2xf32, #tpu.memory_space<vmem>>, vector<1x2xf32>
    %564 = arith.addf %562, %563 : vector<1x2xf32>
    %cst_489 = arith.constant 0.000000e+00 : f32
    %565 = vector.broadcast %cst_489 : f32 to vector<1x2xf32>
    %566 = arith.maximumf %564, %565 : vector<1x2xf32>
    %c0_490 = arith.constant 0 : index
    %c0_491 = arith.constant 0 : index
    %567 = vector.load %arg10[%c0_490, %c0_491] : memref<16x2xf32, #tpu.memory_space<vmem>>, vector<16x2xf32>
    %568 = vector.broadcast %566 : vector<1x2xf32> to vector<16x2xf32>
    %569 = arith.mulf %567, %568 : vector<16x2xf32>
    %cst_492 = arith.constant dense<0.000000e+00> : vector<16xf32>
    %570 = vector.multi_reduction <add>, %569, %cst_492 [1] : vector<16x2xf32> to vector<16xf32>
    %571 = vector.shape_cast %570 : vector<16xf32> to vector<16x1xf32>
    %c0_493 = arith.constant 0 : index
    %c0_494 = arith.constant 0 : index
    %572 = vector.load %arg11[%c0_493, %c0_494] : memref<16x1xf32, #tpu.memory_space<vmem>>, vector<16x1xf32>
    %573 = arith.addf %571, %572 : vector<16x1xf32>
    %574 = arith.negf %573 : vector<16x1xf32>
    %575 = math.exp %574 : vector<16x1xf32>
    %cst_495 = arith.constant 1.000000e+00 : f32
    %576 = vector.broadcast %cst_495 : f32 to vector<16x1xf32>
    %577 = arith.addf %576, %575 : vector<16x1xf32>
    %578 = arith.divf %576, %577 : vector<16x1xf32>
    %579 = vector.broadcast %578 : vector<16x1xf32> to vector<16x256xf32>
    %580 = arith.mulf %553, %579 : vector<16x256xf32>
    %c2_496 = arith.constant 2 : index
    %c0_497 = arith.constant 0 : index
    %c0_498 = arith.constant 0 : index
    %581 = vector.load %arg12[%c2_496, %c0_497, %c0_498] : memref<4x16x256xf32, #tpu.memory_space<vmem>>, vector<1x16x256xf32>
    %582 = vector.shape_cast %581 : vector<1x16x256xf32> to vector<16x256xf32>
    %583 = vector.shape_cast %580 : vector<16x256xf32> to vector<1x16x256xf32>
    tpu.vector_store %arg12[%c2_496, %c0_497, %c0_498], %583 {strides = array<i32>} : memref<4x16x256xf32, #tpu.memory_space<vmem>>, vector<1x16x256xf32>,
    %584 = vector.extract_strided_slice %490 {offsets = [0, 768], sizes = [16, 256], strides = [1, 1]} : vector<16x1024xf32> to vector<16x256xf32>
    %cst_499 = arith.constant dense<0.000000e+00> : vector<16xf32>
    %585 = vector.multi_reduction <add>, %584, %cst_499 [1] : vector<16x256xf32> to vector<16xf32>
    %586 = vector.shape_cast %585 : vector<16xf32> to vector<16x1xf32>
    %cst_500 = arith.constant 2.560000e+02 : f32
    %587 = vector.broadcast %cst_500 : f32 to vector<16x1xf32>
    %588 = arith.divf %586, %587 : vector<16x1xf32>
    %c0_501 = arith.constant 0 : index
    %c0_502 = arith.constant 0 : index
    %589 = vector.load %arg8[%c0_501, %c0_502] : memref<16x2xf32, #tpu.memory_space<vmem>>, vector<16x2xf32>
    %590 = vector.broadcast %588 : vector<16x1xf32> to vector<16x2xf32>
    %591 = arith.mulf %589, %590 : vector<16x2xf32>
    %cst_503 = arith.constant dense<0.000000e+00> : vector<2xf32>
    %592 = vector.multi_reduction <add>, %591, %cst_503 [0] : vector<16x2xf32> to vector<2xf32>
    %593 = vector.shape_cast %592 : vector<2xf32> to vector<1x2xf32>
    %c0_504 = arith.constant 0 : index
    %c0_505 = arith.constant 0 : index
    %594 = vector.load %arg9[%c0_504, %c0_505] : memref<1x2xf32, #tpu.memory_space<vmem>>, vector<1x2xf32>
    %595 = arith.addf %593, %594 : vector<1x2xf32>
    %cst_506 = arith.constant 0.000000e+00 : f32
    %596 = vector.broadcast %cst_506 : f32 to vector<1x2xf32>
    %597 = arith.maximumf %595, %596 : vector<1x2xf32>
    %c0_507 = arith.constant 0 : index
    %c0_508 = arith.constant 0 : index
    %598 = vector.load %arg10[%c0_507, %c0_508] : memref<16x2xf32, #tpu.memory_space<vmem>>, vector<16x2xf32>
    %599 = vector.broadcast %597 : vector<1x2xf32> to vector<16x2xf32>
    %600 = arith.mulf %598, %599 : vector<16x2xf32>
    %cst_509 = arith.constant dense<0.000000e+00> : vector<16xf32>
    %601 = vector.multi_reduction <add>, %600, %cst_509 [1] : vector<16x2xf32> to vector<16xf32>
    %602 = vector.shape_cast %601 : vector<16xf32> to vector<16x1xf32>
    %c0_510 = arith.constant 0 : index
    %c0_511 = arith.constant 0 : index
    %603 = vector.load %arg11[%c0_510, %c0_511] : memref<16x1xf32, #tpu.memory_space<vmem>>, vector<16x1xf32>
    %604 = arith.addf %602, %603 : vector<16x1xf32>
    %605 = arith.negf %604 : vector<16x1xf32>
    %606 = math.exp %605 : vector<16x1xf32>
    %cst_512 = arith.constant 1.000000e+00 : f32
    %607 = vector.broadcast %cst_512 : f32 to vector<16x1xf32>
    %608 = arith.addf %607, %606 : vector<16x1xf32>
    %609 = arith.divf %607, %608 : vector<16x1xf32>
    %610 = vector.broadcast %609 : vector<16x1xf32> to vector<16x256xf32>
    %611 = arith.mulf %584, %610 : vector<16x256xf32>
    %c3_513 = arith.constant 3 : index
    %c0_514 = arith.constant 0 : index
    %c0_515 = arith.constant 0 : index
    %612 = vector.load %arg12[%c3_513, %c0_514, %c0_515] : memref<4x16x256xf32, #tpu.memory_space<vmem>>, vector<1x16x256xf32>
    %613 = vector.shape_cast %612 : vector<1x16x256xf32> to vector<16x256xf32>
    %614 = vector.shape_cast %611 : vector<16x256xf32> to vector<1x16x256xf32>
    tpu.vector_store %arg12[%c3_513, %c0_514, %c0_515], %614 {strides = array<i32>} : memref<4x16x256xf32, #tpu.memory_space<vmem>>, vector<1x16x256xf32>,
    return
  }
  func.func @transform_0(%arg0: i32) -> (i32, i32, i32) {
    %c0_i32 = arith.constant 0 : i32
    %c0_i32_0 = arith.constant 0 : i32
    %c0_i32_1 = arith.constant 0 : i32
    return %arg0, %c0_i32, %c0_i32_0 : i32, i32, i32
  }
  func.func @transform_1(%arg0: i32) -> (i32, i32) {
    %c0_i32 = arith.constant 0 : i32
    %c0_i32_0 = arith.constant 0 : i32
    %c0_i32_1 = arith.constant 0 : i32
    return %c0_i32, %c0_i32_0 : i32, i32
  }
  func.func @transform_2(%arg0: i32) -> (i32, i32) {
    %c0_i32 = arith.constant 0 : i32
    %c0_i32_0 = arith.constant 0 : i32
    %c0_i32_1 = arith.constant 0 : i32
    return %c0_i32, %c0_i32_0 : i32, i32
  }
  func.func @transform_3(%arg0: i32) -> (i32, i32) {
    %c0_i32 = arith.constant 0 : i32
    %c0_i32_0 = arith.constant 0 : i32
    %c0_i32_1 = arith.constant 0 : i32
    return %c0_i32, %c0_i32_0 : i32, i32
  }
  func.func @transform_4(%arg0: i32) -> (i32, i32) {
    %c0_i32 = arith.constant 0 : i32
    %c0_i32_0 = arith.constant 0 : i32
    %c0_i32_1 = arith.constant 0 : i32
    return %c0_i32, %c0_i32_0 : i32, i32
  }
  func.func @transform_5(%arg0: i32) -> (i32, i32) {
    %c0_i32 = arith.constant 0 : i32
    %c0_i32_0 = arith.constant 0 : i32
    %c0_i32_1 = arith.constant 0 : i32
    return %c0_i32, %c0_i32_0 : i32, i32
  }
  func.func @transform_6(%arg0: i32) -> (i32, i32) {
    %c0_i32 = arith.constant 0 : i32
    %c0_i32_0 = arith.constant 0 : i32
    %c0_i32_1 = arith.constant 0 : i32
    return %c0_i32, %c0_i32_0 : i32, i32
  }
  func.func @transform_7(%arg0: i32) -> (i32, i32) {
    %c0_i32 = arith.constant 0 : i32
    %c0_i32_0 = arith.constant 0 : i32
    %c0_i32_1 = arith.constant 0 : i32
    return %c0_i32, %c0_i32_0 : i32, i32
  }
  func.func @transform_8(%arg0: i32) -> (i32, i32) {
    %c0_i32 = arith.constant 0 : i32
    %c0_i32_0 = arith.constant 0 : i32
    %c0_i32_1 = arith.constant 0 : i32
    return %c0_i32, %c0_i32_0 : i32, i32
  }
  func.func @transform_9(%arg0: i32) -> (i32, i32) {
    %c0_i32 = arith.constant 0 : i32
    %c0_i32_0 = arith.constant 0 : i32
    %c0_i32_1 = arith.constant 0 : i32
    return %c0_i32, %c0_i32_0 : i32, i32
  }
  func.func @transform_10(%arg0: i32) -> (i32, i32) {
    %c0_i32 = arith.constant 0 : i32
    %c0_i32_0 = arith.constant 0 : i32
    %c0_i32_1 = arith.constant 0 : i32
    return %c0_i32, %c0_i32_0 : i32, i32
  }
  func.func @transform_11(%arg0: i32) -> (i32, i32, i32) {
    %c0_i32 = arith.constant 0 : i32
    %c0_i32_0 = arith.constant 0 : i32
    %c0_i32_1 = arith.constant 0 : i32
    return %arg0, %c0_i32, %c0_i32_0 : i32, i32, i32
  }
}

</mosaic_0001>

<llo_original>
// kernel: middle_block_pallas.1
$region0: #{middle_block_pallas.1}
  #allocation0 [shape = 'u32[]', space=smem, size = 0x4, offset = 0x4, fixed_abs, tag = 'smem constant byte address 0x4 - core index']
  #allocation1 [shape = 'u32[144,128]{1,0:T(1,128)}', space=vmem, size = 0x12000, scoped, tag = 'internal scratch']
  #allocation2 [shape = 'bf16[4,16,290]{2,1,0:T(8,128)(2,1)}', space=vmem, size = 0xc000, scoped, tag = 'scratch operand']
  #allocation3 [shape = 'bf16[144,1024]{1,0:T(8,128)(2,1)}', space=vmem, size = 0x48000, scoped, tag = 'scratch operand']
  %s0 = inlined_call_operand.vmem [shape: bf16[8,4,256], index: 0, kind: input, shape index: {}]
  %s1 = inlined_call_operand.vmem [shape: bf16[16,36], index: 1, kind: input, shape index: {}]
  %s2 = inlined_call_operand.vmem [shape: f32[16,1], index: 2, kind: input, shape index: {}]
  %s3 = inlined_call_operand.vmem [shape: f32[16,1], index: 3, kind: input, shape index: {}]
  %s4 = inlined_call_operand.vmem [shape: bf16[16,144], index: 4, kind: input, shape index: {}]
  %s5 = inlined_call_operand.vmem [shape: f32[16,1], index: 5, kind: input, shape index: {}]
  %s6 = inlined_call_operand.vmem [shape: f32[16,1], index: 6, kind: input, shape index: {}]
  %s7 = inlined_call_operand.vmem [shape: f32[16,2], index: 7, kind: input, shape index: {}]
  %s8 = inlined_call_operand.vmem [shape: f32[1,2], index: 8, kind: input, shape index: {}]
  %s9 = inlined_call_operand.vmem [shape: f32[16,2], index: 9, kind: input, shape index: {}]
  %s10 = inlined_call_operand.vmem [shape: f32[16,1], index: 10, kind: input, shape index: {}]
  %s11 = inlined_call_operand.vmem [shape: f32[8,16,256], index: 11, kind: output, shape index: {}]
  %s12 = sld [smem:[#allocation0]]
  $region77: #{middle_block_pallas.1} parent=0
    _
  %s14 = ssub.s32 1, %s12
  %s15 = scalar_select 0, %s14, %s12
  loop: start=0, step=1, limit=4
  $region2: #{middle_block_pallas.1} parent=0 // loop_pre_header
    _
  $region3: #{middle_block_pallas.1} parent=0 // loop_header
    %s17 = sphi 0, %s21
    %p18 = scmp.ge.s32.totalorder %s17, 4
    %s27 = sphi 0, %s29
    %s30 = sphi 0, %s27
    %s31 = sphi 0, %s30
    %s47 = sphi 0, %s31
    %s51 = sphi 0, %s51
    %s53 = sphi 0, %s51
    %s54 = sphi 0, %s53
    %s68 = sphi 0, %s54
    %s72 = sphi 0, %s72
    %s74 = sphi 0, %s72
    %s75 = sphi 0, %s74
    %s89 = sphi 0, %s75
    %s93 = sphi 0, %s93
    %s95 = sphi 0, %s93
    %s96 = sphi 0, %s95
    %s110 = sphi 0, %s96
    %s114 = sphi 0, %s114
    %s116 = sphi 0, %s114
    %s117 = sphi 0, %s116
    %s131 = sphi 0, %s117
    %s135 = sphi 0, %s135
    %s137 = sphi 0, %s135
    %s138 = sphi 0, %s137
    %s152 = sphi 0, %s138
    %s156 = sphi 0, %s156
    %s158 = sphi 0, %s156
    %s159 = sphi 0, %s158
    %s173 = sphi 0, %s159
    %s177 = sphi 0, %s177
    %s179 = sphi 0, %s177
    %s180 = sphi 0, %s179
    %s194 = sphi 0, %s180
    %s198 = sphi 0, %s198
    %s200 = sphi 0, %s198
    %s201 = sphi 0, %s200
    %s215 = sphi 0, %s201
    %s219 = sphi 0, %s219
    %s221 = sphi 0, %s219
    %s222 = sphi 0, %s221
    %s236 = sphi 0, %s222
    %s240 = sphi 0, %s240
    %s242 = sphi 0, %s240
    %s243 = sphi 0, %s242
    %s257 = sphi 0, %s243
    %s263 = sphi 0, %s265
    %s266 = sphi 0, %s263
    %s267 = sphi 0, %s266
    %s283 = sphi 0, %s267
  $region4: #{middle_block_pallas.1} parent=0 // loop_header_branch
    %20 = sbr.rel (%p18) target = $region8
  $region5: #{middle_block_pallas.1} parent=0 // loop_body
    %s22 = ssub.s32 %s17, 1
    %s23 = ssub.s32 %s17, 2
    %s24 = sadd.s32 %s17, 1
    %s25 = ssub.s32 %s17, %s24
    %p26 = scmp.eq.s32.totalorder %s25, 0
    %s28 = sadd.s32 %s27, 1
    %s29 = scalar_select %p26, %s27, %s28
    %p32 = pneg %p26
    %p33 = scmp.eq.s32.totalorder %s17, 1
    %p34 = por %p32, %p33
    %p35 = scmp.ne.s32.totalorder %s27, %s30
    %p36 = scmp.eq.s32.totalorder %s17, 0
    %p37 = por %p35, %p36
    %p38 = scmp.ne.s32.totalorder %s27, %s30
    %p39 = scmp.eq.s32.totalorder %s22, 1
    %p40 = por %p38, %p39
    %p41 = scmp.ne.s32.totalorder %s30, %s31
    %p42 = scmp.eq.s32.totalorder %s22, 0
    %p43 = por %p41, %p42
    %p44 = scmp.ne.s32.totalorder %s30, %s31
    %p45 = scmp.eq.s32.totalorder %s23, 1
    %p46 = por %p44, %p45
    %p48 = scmp.ne.s32.totalorder %s31, %s47
    %p49 = scmp.eq.s32.totalorder %s23, 0
    %p50 = por %p48, %p49
    %s52 = sadd.s32 %s51, 1
    %p55 = scmp.eq.s32.totalorder %s17, 1
    %p56 = scmp.ne.s32.totalorder %s51, %s53
    %p57 = scmp.eq.s32.totalorder %s17, 0
    %p58 = por %p56, %p57
    %p59 = scmp.ne.s32.totalorder %s51, %s53
    %p60 = scmp.eq.s32.totalorder %s22, 1
    %p61 = por %p59, %p60
    %p62 = scmp.ne.s32.totalorder %s53, %s54
    %p63 = scmp.eq.s32.totalorder %s22, 0
    %p64 = por %p62, %p63
    %p65 = scmp.ne.s32.totalorder %s53, %s54
    %p66 = scmp.eq.s32.totalorder %s23, 1
    %p67 = por %p65, %p66
    %p69 = scmp.ne.s32.totalorder %s54, %s68
    %p70 = scmp.eq.s32.totalorder %s23, 0
    %p71 = por %p69, %p70
    %s73 = sadd.s32 %s72, 1
    %p76 = scmp.eq.s32.totalorder %s17, 1
    %p77 = scmp.ne.s32.totalorder %s72, %s74
    %p78 = scmp.eq.s32.totalorder %s17, 0
    %p79 = por %p77, %p78
    %p80 = scmp.ne.s32.totalorder %s72, %s74
    %p81 = scmp.eq.s32.totalorder %s22, 1
    %p82 = por %p80, %p81
    %p83 = scmp.ne.s32.totalorder %s74, %s75
    %p84 = scmp.eq.s32.totalorder %s22, 0
    %p85 = por %p83, %p84
    %p86 = scmp.ne.s32.totalorder %s74, %s75
    %p87 = scmp.eq.s32.totalorder %s23, 1
    %p88 = por %p86, %p87
    %p90 = scmp.ne.s32.totalorder %s75, %s89
    %p91 = scmp.eq.s32.totalorder %s23, 0
    %p92 = por %p90, %p91
    %s94 = sadd.s32 %s93, 1
    %p97 = scmp.eq.s32.totalorder %s17, 1
    %p98 = scmp.ne.s32.totalorder %s93, %s95
    %p99 = scmp.eq.s32.totalorder %s17, 0
    %p100 = por %p98, %p99
    %p101 = scmp.ne.s32.totalorder %s93, %s95
    %p102 = scmp.eq.s32.totalorder %s22, 1
    %p103 = por %p101, %p102
    %p104 = scmp.ne.s32.totalorder %s95, %s96
    %p105 = scmp.eq.s32.totalorder %s22, 0
    %p106 = por %p104, %p105
    %p107 = scmp.ne.s32.totalorder %s95, %s96
    %p108 = scmp.eq.s32.totalorder %s23, 1
    %p109 = por %p107, %p108
    %p111 = scmp.ne.s32.totalorder %s96, %s110
    %p112 = scmp.eq.s32.totalorder %s23, 0
    %p113 = por %p111, %p112
    %s115 = sadd.s32 %s114, 1
    %p118 = scmp.eq.s32.totalorder %s17, 1
    %p119 = scmp.ne.s32.totalorder %s114, %s116
    %p120 = scmp.eq.s32.totalorder %s17, 0
    %p121 = por %p119, %p120
    %p122 = scmp.ne.s32.totalorder %s114, %s116
    %p123 = scmp.eq.s32.totalorder %s22, 1
    %p124 = por %p122, %p123
    %p125 = scmp.ne.s32.totalorder %s116, %s117
    %p126 = scmp.eq.s32.totalorder %s22, 0
    %p127 = por %p125, %p126
    %p128 = scmp.ne.s32.totalorder %s116, %s117
    %p129 = scmp.eq.s32.totalorder %s23, 1
    %p130 = por %p128, %p129
    %p132 = scmp.ne.s32.totalorder %s117, %s131
    %p133 = scmp.eq.s32.totalorder %s23, 0
    %p134 = por %p132, %p133
    %s136 = sadd.s32 %s135, 1
    %p139 = scmp.eq.s32.totalorder %s17, 1
    %p140 = scmp.ne.s32.totalorder %s135, %s137
    %p141 = scmp.eq.s32.totalorder %s17, 0
    %p142 = por %p140, %p141
    %p143 = scmp.ne.s32.totalorder %s135, %s137
    %p144 = scmp.eq.s32.totalorder %s22, 1
    %p145 = por %p143, %p144
    %p146 = scmp.ne.s32.totalorder %s137, %s138
    %p147 = scmp.eq.s32.totalorder %s22, 0
    %p148 = por %p146, %p147
    %p149 = scmp.ne.s32.totalorder %s137, %s138
    %p150 = scmp.eq.s32.totalorder %s23, 1
    %p151 = por %p149, %p150
    %p153 = scmp.ne.s32.totalorder %s138, %s152
    %p154 = scmp.eq.s32.totalorder %s23, 0
    %p155 = por %p153, %p154
    %s157 = sadd.s32 %s156, 1
    %p160 = scmp.eq.s32.totalorder %s17, 1
    %p161 = scmp.ne.s32.totalorder %s156, %s158
    %p162 = scmp.eq.s32.totalorder %s17, 0
    %p163 = por %p161, %p162
    %p164 = scmp.ne.s32.totalorder %s156, %s158
    %p165 = scmp.eq.s32.totalorder %s22, 1
    %p166 = por %p164, %p165
    %p167 = scmp.ne.s32.totalorder %s158, %s159
    %p168 = scmp.eq.s32.totalorder %s22, 0
    %p169 = por %p167, %p168
    %p170 = scmp.ne.s32.totalorder %s158, %s159
    %p171 = scmp.eq.s32.totalorder %s23, 1
    %p172 = por %p170, %p171
    %p174 = scmp.ne.s32.totalorder %s159, %s173
    %p175 = scmp.eq.s32.totalorder %s23, 0
    %p176 = por %p174, %p175
    %s178 = sadd.s32 %s177, 1
    %p181 = scmp.eq.s32.totalorder %s17, 1
    %p182 = scmp.ne.s32.totalorder %s177, %s179
    %p183 = scmp.eq.s32.totalorder %s17, 0
    %p184 = por %p182, %p183
    %p185 = scmp.ne.s32.totalorder %s177, %s179
    %p186 = scmp.eq.s32.totalorder %s22, 1
    %p187 = por %p185, %p186
    %p188 = scmp.ne.s32.totalorder %s179, %s180
    %p189 = scmp.eq.s32.totalorder %s22, 0
    %p190 = por %p188, %p189
    %p191 = scmp.ne.s32.totalorder %s179, %s180
    %p192 = scmp.eq.s32.totalorder %s23, 1
    %p193 = por %p191, %p192
    %p195 = scmp.ne.s32.totalorder %s180, %s194
    %p196 = scmp.eq.s32.totalorder %s23, 0
    %p197 = por %p195, %p196
    %s199 = sadd.s32 %s198, 1
    %p202 = scmp.eq.s32.totalorder %s17, 1
    %p203 = scmp.ne.s32.totalorder %s198, %s200
    %p204 = scmp.eq.s32.totalorder %s17, 0
    %p205 = por %p203, %p204
    %p206 = scmp.ne.s32.totalorder %s198, %s200
    %p207 = scmp.eq.s32.totalorder %s22, 1
    %p208 = por %p206, %p207
    %p209 = scmp.ne.s32.totalorder %s200, %s201
    %p210 = scmp.eq.s32.totalorder %s22, 0
    %p211 = por %p209, %p210
    %p212 = scmp.ne.s32.totalorder %s200, %s201
    %p213 = scmp.eq.s32.totalorder %s23, 1
    %p214 = por %p212, %p213
    %p216 = scmp.ne.s32.totalorder %s201, %s215
    %p217 = scmp.eq.s32.totalorder %s23, 0
    %p218 = por %p216, %p217
    %s220 = sadd.s32 %s219, 1
    %p223 = scmp.eq.s32.totalorder %s17, 1
    %p224 = scmp.ne.s32.totalorder %s219, %s221
    %p225 = scmp.eq.s32.totalorder %s17, 0
    %p226 = por %p224, %p225
    %p227 = scmp.ne.s32.totalorder %s219, %s221
    %p228 = scmp.eq.s32.totalorder %s22, 1
    %p229 = por %p227, %p228
    %p230 = scmp.ne.s32.totalorder %s221, %s222
    %p231 = scmp.eq.s32.totalorder %s22, 0
    %p232 = por %p230, %p231
    %p233 = scmp.ne.s32.totalorder %s221, %s222
    %p234 = scmp.eq.s32.totalorder %s23, 1
    %p235 = por %p233, %p234
    %p237 = scmp.ne.s32.totalorder %s222, %s236
    %p238 = scmp.eq.s32.totalorder %s23, 0
    %p239 = por %p237, %p238
    %s241 = sadd.s32 %s240, 1
    %p244 = scmp.eq.s32.totalorder %s17, 1
    %p245 = scmp.ne.s32.totalorder %s240, %s242
    %p246 = scmp.eq.s32.totalorder %s17, 0
    %p247 = por %p245, %p246
    %p248 = scmp.ne.s32.totalorder %s240, %s242
    %p249 = scmp.eq.s32.totalorder %s22, 1
    %p250 = por %p248, %p249
    %p251 = scmp.ne.s32.totalorder %s242, %s243
    %p252 = scmp.eq.s32.totalorder %s22, 0
    %p253 = por %p251, %p252
    %p254 = scmp.ne.s32.totalorder %s242, %s243
    %p255 = scmp.eq.s32.totalorder %s23, 1
    %p256 = por %p254, %p255
    %p258 = scmp.ne.s32.totalorder %s243, %s257
    %p259 = scmp.eq.s32.totalorder %s23, 0
    %p260 = por %p258, %p259
    %s261 = ssub.s32 %s17, %s24
    %p262 = scmp.eq.s32.totalorder %s261, 0
    %s264 = sadd.s32 %s263, 1
    %s265 = scalar_select %p262, %s263, %s264
    %p268 = pneg %p262
    %p269 = scmp.eq.s32.totalorder %s17, 1
    %p270 = por %p268, %p269
    %p271 = scmp.ne.s32.totalorder %s263, %s266
    %p272 = scmp.eq.s32.totalorder %s17, 0
    %p273 = por %p271, %p272
    %p274 = scmp.ne.s32.totalorder %s263, %s266
    %p275 = scmp.eq.s32.totalorder %s22, 1
    %p276 = por %p274, %p275
    %p277 = scmp.ne.s32.totalorder %s266, %s267
    %p278 = scmp.eq.s32.totalorder %s22, 0
    %p279 = por %p277, %p278
    %p280 = scmp.ne.s32.totalorder %s266, %s267
    %p281 = scmp.eq.s32.totalorder %s23, 1
    %p282 = por %p280, %p281
    %p284 = scmp.ne.s32.totalorder %s267, %s283
    %p285 = scmp.eq.s32.totalorder %s23, 0
    %p286 = por %p284, %p285
    %p287 = scmp.le.s32.totalorder 1, %s17
    %p288 = scmp.lt.s32.totalorder %s17, 3
    %p289 = pnand %p287, %p288
    %p290 = pneg %p289
    // Predicated region
    $region9: #{middle_block_pallas.1} parent=5 // pred_check
      _
    $region10: #{middle_block_pallas.1} parent=5 // pred_check_branch
      %292 = sbr.rel (%p289) target = $region12
    $region11: #{middle_block_pallas.1} parent=5 // pred_region
      %s293 = ssub.s32 %s17, 1
      // Predicated region
      $region13: #{middle_block_pallas.1} parent=11 // pred_check
        %p294 = pneg %p64
      $region14: #{middle_block_pallas.1} parent=11 // pred_check_branch
        %296 = sbr.rel (%p294) target = $region16
      $region15: #{middle_block_pallas.1} parent=11 // pred_region
        _
      $region16: #{middle_block_pallas.1} parent=11 // pred_fallthru
        _
      // Predicated region
      $region17: #{middle_block_pallas.1} parent=11 // pred_check
        %p297 = pneg %p85
      $region18: #{middle_block_pallas.1} parent=11 // pred_check_branch
        %299 = sbr.rel (%p297) target = $region20
      $region19: #{middle_block_pallas.1} parent=11 // pred_region
        _
      $region20: #{middle_block_pallas.1} parent=11 // pred_fallthru
        _
      // Predicated region
      $region21: #{middle_block_pallas.1} parent=11 // pred_check
        %p300 = pneg %p106
      $region22: #{middle_block_pallas.1} parent=11 // pred_check_branch
        %302 = sbr.rel (%p300) target = $region24
      $region23: #{middle_block_pallas.1} parent=11 // pred_region
        _
      $region24: #{middle_block_pallas.1} parent=11 // pred_fallthru
        _
      // Predicated region
      $region25: #{middle_block_pallas.1} parent=11 // pred_check
        %p303 = pneg %p127
      $region26: #{middle_block_pallas.1} parent=11 // pred_check_branch
        %305 = sbr.rel (%p303) target = $region28
      $region27: #{middle_block_pallas.1} parent=11 // pred_region
        _
      $region28: #{middle_block_pallas.1} parent=11 // pred_fallthru
        _
      // Predicated region
      $region29: #{middle_block_pallas.1} parent=11 // pred_check
        %p306 = pneg %p148
      $region30: #{middle_block_pallas.1} parent=11 // pred_check_branch
        %308 = sbr.rel (%p306) target = $region32
      $region31: #{middle_block_pallas.1} parent=11 // pred_region
        _
      $region32: #{middle_block_pallas.1} parent=11 // pred_fallthru
        _
      // Predicated region
      $region33: #{middle_block_pallas.1} parent=11 // pred_check
        %p309 = pneg %p169
      $region34: #{middle_block_pallas.1} parent=11 // pred_check_branch
        %311 = sbr.rel (%p309) target = $region36
      $region35: #{middle_block_pallas.1} parent=11 // pred_region
        _
      $region36: #{middle_block_pallas.1} parent=11 // pred_fallthru
        _
      // Predicated region
      $region37: #{middle_block_pallas.1} parent=11 // pred_check
        %p312 = pneg %p190
      $region38: #{middle_block_pallas.1} parent=11 // pred_check_branch
        %314 = sbr.rel (%p312) target = $region40
      $region39: #{middle_block_pallas.1} parent=11 // pred_region
        _
      $region40: #{middle_block_pallas.1} parent=11 // pred_fallthru
        _
      // Predicated region
      $region41: #{middle_block_pallas.1} parent=11 // pred_check
        %p315 = pneg %p211
      $region42: #{middle_block_pallas.1} parent=11 // pred_check_branch
        %317 = sbr.rel (%p315) target = $region44
      $region43: #{middle_block_pallas.1} parent=11 // pred_region
        _
      $region44: #{middle_block_pallas.1} parent=11 // pred_fallthru
        _
      // Predicated region
      $region45: #{middle_block_pallas.1} parent=11 // pred_check
        %p318 = pneg %p232
      $region46: #{middle_block_pallas.1} parent=11 // pred_check_branch
        %320 = sbr.rel (%p318) target = $region48
      $region47: #{middle_block_pallas.1} parent=11 // pred_region
        _
      $region48: #{middle_block_pallas.1} parent=11 // pred_fallthru
        _
      // Predicated region
      $region49: #{middle_block_pallas.1} parent=11 // pred_check
        %p321 = pneg %p253
      $region50: #{middle_block_pallas.1} parent=11 // pred_check_branch
        %323 = sbr.rel (%p321) target = $region52
      $region51: #{middle_block_pallas.1} parent=11 // pred_region
        _
      $region52: #{middle_block_pallas.1} parent=11 // pred_fallthru
        _
    $region12: #{middle_block_pallas.1} parent=5 // pred_fallthru
      _
    %p324 = scmp.lt.s32.totalorder %s17, 2
    // Predicated region
    $region53: #{middle_block_pallas.1} parent=5 // pred_check
      %p325 = pneg %p324
    $region54: #{middle_block_pallas.1} parent=5 // pred_check_branch
      %327 = sbr.rel (%p325) target = $region56
    $region55: #{middle_block_pallas.1} parent=5 // pred_region
      // Predicated region
      $region57: #{middle_block_pallas.1} parent=55 // pred_check
        %p328 = pneg %p37
      $region58: #{middle_block_pallas.1} parent=55 // pred_check_branch
        %330 = sbr.rel (%p328) target = $region60
      $region59: #{middle_block_pallas.1} parent=55 // pred_region
        %s331 = smul.u32 4, %s17
        %p332 = scmp.lt.s32.totalorder %s331, 7
        %s333 = scalar_select %p332, %s331, 7
        %s334 = smul.addr %s333, 2
        %s335 = smul.addr %s334, 2
        %s336 = scalar_lea.vmem %s0, %s335
        %s337 = smul.u32 4, %s17
      $region60: #{middle_block_pallas.1} parent=55 // pred_fallthru
        _
    $region56: #{middle_block_pallas.1} parent=5 // pred_fallthru
      _
    %p338 = scmp.le.s32.totalorder 1, %s17
    %p339 = scmp.lt.s32.totalorder %s17, 3
    %p340 = pnand %p338, %p339
    %p341 = pneg %p340
    // Predicated region
    $region61: #{middle_block_pallas.1} parent=5 // pred_check
      _
    $region62: #{middle_block_pallas.1} parent=5 // pred_check_branch
      %343 = sbr.rel (%p340) target = $region64
    $region63: #{middle_block_pallas.1} parent=5 // pred_region
      %s344 = ssub.s32 %s17, 1
      %s345 = smul.u32 4, %s22
      %p346 = scmp.lt.s32.totalorder %s345, 7
      %s347 = scalar_select %p346, %s345, 7
      %s348 = smul.addr %s347, 2
      %s349 = smul.addr %s348, 2
      %s350 = scalar_lea.vmem %s0, %s349
      %p351 = pneg %p43
      %p352 = pneg %p40
      %p353 = pneg %p64
      %p354 = pneg %p61
      %p355 = pneg %p85
      %p356 = pneg %p82
      %p357 = pneg %p106
      %p358 = pneg %p103
      %p359 = pneg %p127
      %p360 = pneg %p124
      %p361 = pneg %p148
      %p362 = pneg %p145
      %p363 = pneg %p169
      %p364 = pneg %p166
      %p365 = pneg %p190
      %p366 = pneg %p187
      %p367 = pneg %p211
      %p368 = pneg %p208
      %p369 = pneg %p232
      %p370 = pneg %p229
      %p371 = pneg %p253
      %p372 = pneg %p250
      %p373 = pneg %p279
      %p374 = pneg %p276
      %s375 = smul.u32 4, %s22
      %p376 = scmp.lt.s32.totalorder %s375, 7
      %s377 = scalar_select %p376, %s375, 7
      %s378 = smul.addr %s377, 4
      %s379 = smul.addr %s378, 8
      %s380 = scalar_lea.vmem %s11, %s379
      %s381 = smul.u32 4, %s22
      %p382 = scmp.lt.s32.totalorder %s381, 7
      %s383 = scalar_select %p382, %s381, 7
      %s384 = smul.addr %s383, 2
      %s385 = smul.addr %s384, 2
      %s386 = scalar_lea.vmem %s0, %s385
      %s387 = smul.u32 4, %s22
      %s388 = smul.u32 4, %s22
      %p389 = scmp.lt.s32.totalorder %s388, 7
      %s390 = scalar_select %p389, %s388, 7
      %s391 = smul.addr %s390, 4
      %s392 = smul.addr %s391, 8
      %s393 = scalar_lea.vmem %s11, %s392
      %s394 = smul.u32 4, %s22
      %v398 = vlaneseq
      %v399 = vand.u32 %v398, 127
      %v400 = vadd.s32 %v399, 128
      %vm401 = vcmp.lt.s32.totalorder %v399, 0
      %v402 = vsub.s32 0, %v399
      %v403 = vsel %vm401, %v402, %v399
      %v404 = vshrl.u32 %v403, 4
      %v405 = vand.u32 %v403, 15
      %v406 = vsub.s32 0, %v405
      %v407 = vsel %vm401, %v406, %v405
      %vm408 = vcmp.lt.s32.totalorder %v400, 0
      %v409 = vsub.s32 0, %v400
      %v410 = vsel %vm408, %v409, %v400
      %v411 = vshrl.u32 %v410, 4
      %v412 = vand.u32 %v410, 15
      %v413 = vsub.s32 0, %v412
      %v414 = vsel %vm408, %v413, %v412
      %vm415 = vcmp.ne.s32.totalorder %v407, 0
      %vm416 = vcmp.ne.s32.totalorder %v414, 0
      %vm417 = vcmp.lt.s32.totalorder %v407, 0
      %vm418 = vcmp.lt.s32.totalorder %v414, 0
      %vm419 = vmand %vm417, %vm415
      %vm420 = vmand %vm418, %vm416
      %v421 = vadd.s32 %v407, 16
      %v422 = vadd.s32 %v414, 16
      %v423 = vsel %vm419, %v421, %v407
      %v424 = vsel %vm420, %v422, %v414
      %vm425 = vcmp.ne.s32.totalorder %v423, 0
      %vm426 = vcmp.ne.s32.totalorder %v424, 0
      %vm427 = vcmp.ne.s32.totalorder %v423, 15
      %vm428 = vcmp.ne.s32.totalorder %v424, 15
      %vm429 = vcmask 134144
      %430 = vst.msk [vmem:[#allocation2] sm:$0xf] %vm429, 0
      %431 = vst.msk [vmem:[#allocation2 + $0xc] sm:$0xf] %vm429, 0
      %432 = vst.msk [vmem:[#allocation2 + $0x18] sm:$0xf] %vm429, 0
      %433 = vst.msk [vmem:[#allocation2 + $0x24] sm:$0xf] %vm429, 0
      %434 = vst.msk [vmem:[#allocation2 + $0x30] sm:$0xf] %vm429, 0
      %435 = vst.msk [vmem:[#allocation2 + $0x3c] sm:$0xf] %vm429, 0
      %436 = vst.msk [vmem:[#allocation2 + $0x48] sm:$0xf] %vm429, 0
      %437 = vst.msk [vmem:[#allocation2 + $0x54] sm:$0xf] %vm429, 0
      %vm438 = vcmask 273544
      %439 = vst.msk [vmem:[#allocation2 + $0x8] sm:$0xf] %vm438, 0
      %440 = vst.msk [vmem:[#allocation2 + $0x14] sm:$0xf] %vm438, 0
      %441 = vst.msk [vmem:[#allocation2 + $0x20] sm:$0xf] %vm438, 0
      %442 = vst.msk [vmem:[#allocation2 + $0x2c] sm:$0xf] %vm438, 0
      %443 = vst.msk [vmem:[#allocation2 + $0x38] sm:$0xf] %vm438, 0
      %444 = vst.msk [vmem:[#allocation2 + $0x44] sm:$0xf] %vm438, 0
      %445 = vst.msk [vmem:[#allocation2 + $0x50] sm:$0xf] %vm438, 0
      %446 = vst.msk [vmem:[#allocation2 + $0x5c] sm:$0xf] %vm438, 0
      %v447 = vld [vmem:[%s386] sm:$0xf]
      %v450 = vunpack.c.l.s4 1983009808
      %v451 = vunpack.c.0.s8 %v450
      %v452 = vlaneseq
      %v453 = vshrl.u32 %v452, 7
      %v454 = vsub.s32 %v451, %v453
      %v455 = vrot.slane %v447, %v454
      %456 = vrot.lane.b32.xlu0 %v455, 17
      %v457 = vpop.permute.xlu0 %456
      %v458 = vrot.slane %v457, 4
      %vm459 = vcmask 138240
      %v460 = vsel %vm459, %v458, %v457
      %vm463 = vcmask 1041544
      %vm464 = vcmask 1045508
      %vm465 = vmor %vm464, %vm463
      %466 = vst.msk [vmem:[#allocation2] sm:$0x33] %vm465, %v460
      %vm467 = vcmask 132096
      %468 = vst.msk [vmem:[#allocation2 + $0x8] sm:$0x3] %vm467, %v458
      %v469 = vld [vmem:[#allocation2] sm:$0x33]
      %v470 = vsel %vm425, 1, 0
      %v471 = vsel %vm426, 1, 0
      %vm472 = vcmp.eq.s32.totalorder %v470, 1
      %vm473 = vcmp.eq.s32.totalorder %v471, 1
      %vm474 = vmpackc.low %vm473, %vm472
      %v475 = vsel %vm474, %v469, 0
      %476 = vst [vmem:[#allocation3] sm:$0x33] %v475
      %v477 = vld [vmem:[#allocation2] sm:$0x33]
      %v478 = vld [vmem:[#allocation2 + $0x8] sm:$0x3]
      %v481 = vrot.slane %v477, 6
      %v482 = vrot.slane %v478, 6
      %483 = vrot.lane.b32.xlu0 %v481, 127
      %v484 = vpop.permute.xlu0 %483
      %485 = vrot.lane.b32.xlu0 %v482, 127
      %v486 = vpop.permute.xlu0 %485
      %v487 = vrot.slane %v484, 4
      %v488 = vrot.slane %v486, 4
      %vm489 = vcmask 1043456
      %v490 = vsel %vm489, %v487, %v488
      %vm491 = vcmask 1039360
      %v492 = vsel %vm491, %v484, %v490
      %494 = vst [vmem:[#allocation3] sm:$0xcc] %v492
      %v495 = vld [vmem:[#allocation2] sm:$0x33]
      %v496 = vld [vmem:[#allocation2 + $0x8] sm:$0x3]
      %v497 = vsel %vm427, 1, 0
      %v498 = vsel %vm428, 1, 0
      %vm499 = vcmp.eq.s32.totalorder %v497, 1
      %vm500 = vcmp.eq.s32.totalorder %v498, 1
      %vm501 = vmpackc.low %vm500, %vm499
      %v502 = vsel %vm501, 65537, 0
      %503 = vrot.lane.b32.xlu0 %v502, 2
      %v504 = vpop.permute.xlu0 %503
      %v505 = vrot.slane %v504, 4
      %vm506 = vcmask 15360
      %v507 = vsel %vm506, %v505, %v504
      %vm508 = vcmp.ne.s16.totalorder %v507, 0
      %vm509 = vcmp.ne.s16.totalorder %v505, 0
      %v510 = vsel %vm508, %v495, 0
      %v511 = vsel %vm509, %v496, 0
      %514 = vrot.lane.b32.xlu0 %v510, 126
      %v515 = vpop.permute.xlu0 %514
      %516 = vrot.lane.b32.xlu0 %v511, 126
      %v517 = vpop.permute.xlu0 %516
      %v518 = vrot.slane %v515, 4
      %v519 = vrot.slane %v517, 4
      %v520 = vsel %vm489, %v518, %v519
      %vm521 = vcmask 1031168
      %v522 = vsel %vm521, %v515, %v520
      %524 = vst [vmem:[#allocation3 + $0x20] sm:$0x33] %v522
      %v525 = vld [vmem:[#allocation2] sm:$0x33]
      %v526 = vld [vmem:[#allocation2 + $0x8] sm:$0x3]
      %v527 = vsel %vm474, 65537, 0
      %528 = vrot.lane.b32.xlu0 %v527, 16
      %v529 = vpop.permute.xlu0 %528
      %v530 = vrot.slane %v529, 4
      %vm531 = vcmask 130048
      %v532 = vsel %vm531, %v530, %v529
      %vm533 = vcmp.ne.s16.totalorder %v532, 0
      %vm534 = vcmp.ne.s16.totalorder %v530, 0
      %v535 = vsel %vm533, %v525, 0
      %v536 = vsel %vm534, %v526, 0
      %v539 = vrot.slane %v535, 6
      %v540 = vrot.slane %v536, 6
      %541 = vrot.lane.b32.xlu0 %v539, 112
      %v542 = vpop.permute.xlu0 %541
      %543 = vrot.lane.b32.xlu0 %v540, 112
      %v544 = vpop.permute.xlu0 %543
      %v545 = vrot.slane %v542, 4
      %v546 = vrot.slane %v544, 4
      %v547 = vsel %vm489, %v545, %v546
      %vm548 = vcmask 916480
      %v549 = vsel %vm548, %v542, %v547
      %551 = vst [vmem:[#allocation3 + $0x20] sm:$0xcc] %v549
      %v552 = vld [vmem:[#allocation2] sm:$0x33]
      %v553 = vld [vmem:[#allocation2 + $0x8] sm:$0x3]
      %556 = vrot.lane.b32.xlu0 %v552, 111
      %v557 = vpop.permute.xlu0 %556
      %558 = vrot.lane.b32.xlu0 %v553, 111
      %v559 = vpop.permute.xlu0 %558
      %v560 = vrot.slane %v557, 4
      %v561 = vrot.slane %v559, 4
      %v562 = vsel %vm489, %v560, %v561
      %vm563 = vcmask 908288
      %v564 = vsel %vm563, %v557, %v562
      %566 = vst [vmem:[#allocation3 + $0x40] sm:$0x33] %v564
      %v567 = vld [vmem:[#allocation2] sm:$0x33]
      %v568 = vld [vmem:[#allocation2 + $0x8] sm:$0x3]
      %569 = vrot.lane.b32.xlu0 %v502, 18
      %v570 = vpop.permute.xlu0 %569
      %v571 = vrot.slane %v570, 4
      %vm572 = vcmask 146432
      %v573 = vsel %vm572, %v571, %v570
      %vm574 = vcmp.ne.s16.totalorder %v573, 0
      %vm575 = vcmp.ne.s16.totalorder %v571, 0
      %v576 = vsel %vm574, %v567, 0
      %v577 = vsel %vm575, %v568, 0
      %v580 = vrot.slane %v576, 6
      %v581 = vrot.slane %v577, 6
      %582 = vrot.lane.b32.xlu0 %v580, 110
      %v583 = vpop.permute.xlu0 %582
      %584 = vrot.lane.b32.xlu0 %v581, 110
      %v585 = vpop.permute.xlu0 %584
      %v586 = vrot.slane %v583, 4
      %v587 = vrot.slane %v585, 4
      %v588 = vsel %vm489, %v586, %v587
      %vm589 = vcmask 900096
      %v590 = vsel %vm589, %v583, %v588
      %592 = vst [vmem:[#allocation3 + $0x40] sm:$0xcc] %v590
      %v593 = vld [vmem:[#allocation2] sm:$0x33]
      %v594 = vld [vmem:[#allocation2 + $0x8] sm:$0x3]
      %595 = vrot.lane.b32.xlu0 %v527, 32
      %v596 = vpop.permute.xlu0 %595
      %v597 = vrot.slane %v596, 4
      %vm598 = vcmask 261120
      %v599 = vsel %vm598, %v597, %v596
      %vm600 = vcmp.ne.s16.totalorder %v599, 0
      %vm601 = vcmp.ne.s16.totalorder %v597, 0
      %v602 = vsel %vm600, %v593, 0
      %v603 = vsel %vm601, %v594, 0
      %606 = vrot.lane.b32.xlu0 %v602, 96
      %v607 = vpop.permute.xlu0 %606
      %608 = vrot.lane.b32.xlu0 %v603, 96
      %v609 = vpop.permute.xlu0 %608
      %v610 = vrot.slane %v607, 4
      %v611 = vrot.slane %v609, 4
      %v612 = vsel %vm489, %v610, %v611
      %vm613 = vcmask 785408
      %v614 = vsel %vm613, %v607, %v612
      %616 = vst [vmem:[#allocation3 + $0x60] sm:$0x33] %v614
      %v617 = vld [vmem:[#allocation2] sm:$0x33]
      %v618 = vld [vmem:[#allocation2 + $0x8] sm:$0x3]
      %v621 = vrot.slane %v617, 6
      %v622 = vrot.slane %v618, 6
      %623 = vrot.lane.b32.xlu0 %v621, 95
      %v624 = vpop.permute.xlu0 %623
      %625 = vrot.lane.b32.xlu0 %v622, 95
      %v626 = vpop.permute.xlu0 %625
      %v627 = vrot.slane %v624, 4
      %v628 = vrot.slane %v626, 4
      %v629 = vsel %vm489, %v627, %v628
      %vm630 = vcmask 777216
      %v631 = vsel %vm630, %v624, %v629
      %633 = vst [vmem:[#allocation3 + $0x60] sm:$0xcc] %v631
      %v634 = vld [vmem:[#allocation2] sm:$0x33]
      %v635 = vld [vmem:[#allocation2 + $0x8] sm:$0x3]
      %636 = vrot.lane.b32.xlu0 %v502, 34
      %v637 = vpop.permute.xlu0 %636
      %v638 = vrot.slane %v637, 4
      %vm639 = vcmask 277504
      %v640 = vsel %vm639, %v638, %v637
      %vm641 = vcmp.ne.s16.totalorder %v640, 0
      %vm642 = vcmp.ne.s16.totalorder %v638, 0
      %v643 = vsel %vm641, %v634, 0
      %v644 = vsel %vm642, %v635, 0
      %647 = vrot.lane.b32.xlu0 %v643, 94
      %v648 = vpop.permute.xlu0 %647
      %649 = vrot.lane.b32.xlu0 %v644, 94
      %v650 = vpop.permute.xlu0 %649
      %v651 = vrot.slane %v648, 4
      %v652 = vrot.slane %v650, 4
      %v653 = vsel %vm489, %v651, %v652
      %vm654 = vcmask 769024
      %v655 = vsel %vm654, %v648, %v653
      %657 = vst [vmem:[#allocation3 + $0x80] sm:$0x33] %v655
      %s658 = scalar_lea.vmem %s386, 4
      %v659 = vld [vmem:[%s658] sm:$0xf]
      %v662 = vunpack.c.l.s4 1983009808
      %v663 = vunpack.c.0.s8 %v662
      %v664 = vlaneseq
      %v665 = vshrl.u32 %v664, 7
      %v666 = vsub.s32 %v663, %v665
      %v667 = vrot.slane %v659, %v666
      %668 = vrot.lane.b32.xlu0 %v667, 17
      %v669 = vpop.permute.xlu0 %668
      %v670 = vrot.slane %v669, 4
      %v671 = vsel %vm459, %v670, %v669
      %s674 = scalar_lea.vmem [#allocation2], 24
      %675 = vst.msk [vmem:[%s674] sm:$0x33] %vm465, %v671
      %676 = vst.msk [vmem:[%s674 + $0x8] sm:$0x3] %vm467, %v670
      %v677 = vld [vmem:[%s674] sm:$0x33]
      %v678 = vsel %vm474, %v677, 0
      %679 = vst [vmem:[#allocation3 + $0x8] sm:$0x33] %v678
      %v680 = vld [vmem:[%s674] sm:$0x33]
      %v681 = vld [vmem:[%s674 + $0x8] sm:$0x3]
      %v684 = vrot.slane %v680, 6
      %v685 = vrot.slane %v681, 6
      %686 = vrot.lane.b32.xlu0 %v684, 127
      %v687 = vpop.permute.xlu0 %686
      %688 = vrot.lane.b32.xlu0 %v685, 127
      %v689 = vpop.permute.xlu0 %688
      %v690 = vrot.slane %v687, 4
      %v691 = vrot.slane %v689, 4
      %v692 = vsel %vm489, %v690, %v691
      %v693 = vsel %vm491, %v687, %v692
      %695 = vst [vmem:[#allocation3 + $0x8] sm:$0xcc] %v693
      %v696 = vld [vmem:[%s674] sm:$0x33]
      %v697 = vld [vmem:[%s674 + $0x8] sm:$0x3]
      %v698 = vsel %vm508, %v696, 0
      %v699 = vsel %vm509, %v697, 0
      %702 = vrot.lane.b32.xlu0 %v698, 126
      %v703 = vpop.permute.xlu0 %702
      %704 = vrot.lane.b32.xlu0 %v699, 126
      %v705 = vpop.permute.xlu0 %704
      %v706 = vrot.slane %v703, 4
      %v707 = vrot.slane %v705, 4
      %v708 = vsel %vm489, %v706, %v707
      %v709 = vsel %vm521, %v703, %v708
      %711 = vst [vmem:[#allocation3 + $0x28] sm:$0x33] %v709
      %v712 = vld [vmem:[%s674] sm:$0x33]
      %v713 = vld [vmem:[%s674 + $0x8] sm:$0x3]
      %v714 = vsel %vm533, %v712, 0
      %v715 = vsel %vm534, %v713, 0
      %v718 = vrot.slane %v714, 6
      %v719 = vrot.slane %v715, 6
      %720 = vrot.lane.b32.xlu0 %v718, 112
      %v721 = vpop.permute.xlu0 %720
      %722 = vrot.lane.b32.xlu0 %v719, 112
      %v723 = vpop.permute.xlu0 %722
      %v724 = vrot.slane %v721, 4
      %v725 = vrot.slane %v723, 4
      %v726 = vsel %vm489, %v724, %v725
      %v727 = vsel %vm548, %v721, %v726
      %729 = vst [vmem:[#allocation3 + $0x28] sm:$0xcc] %v727
      %v730 = vld [vmem:[%s674] sm:$0x33]
      %v731 = vld [vmem:[%s674 + $0x8] sm:$0x3]
      %734 = vrot.lane.b32.xlu0 %v730, 111
      %v735 = vpop.permute.xlu0 %734
      %736 = vrot.lane.b32.xlu0 %v731, 111
      %v737 = vpop.permute.xlu0 %736
      %v738 = vrot.slane %v735, 4
      %v739 = vrot.slane %v737, 4
      %v740 = vsel %vm489, %v738, %v739
      %v741 = vsel %vm563, %v735, %v740
      %743 = vst [vmem:[#allocation3 + $0x48] sm:$0x33] %v741
      %v744 = vld [vmem:[%s674] sm:$0x33]
      %v745 = vld [vmem:[%s674 + $0x8] sm:$0x3]
      %v746 = vsel %vm574, %v744, 0
      %v747 = vsel %vm575, %v745, 0
      %v750 = vrot.slane %v746, 6
      %v751 = vrot.slane %v747, 6
      %752 = vrot.lane.b32.xlu0 %v750, 110
      %v753 = vpop.permute.xlu0 %752
      %754 = vrot.lane.b32.xlu0 %v751, 110
      %v755 = vpop.permute.xlu0 %754
      %v756 = vrot.slane %v753, 4
      %v757 = vrot.slane %v755, 4
      %v758 = vsel %vm489, %v756, %v757
      %v759 = vsel %vm589, %v753, %v758
      %761 = vst [vmem:[#allocation3 + $0x48] sm:$0xcc] %v759
      %v762 = vld [vmem:[%s674] sm:$0x33]
      %v763 = vld [vmem:[%s674 + $0x8] sm:$0x3]
      %v764 = vsel %vm600, %v762, 0
      %v765 = vsel %vm601, %v763, 0
      %768 = vrot.lane.b32.xlu0 %v764, 96
      %v769 = vpop.permute.xlu0 %768
      %770 = vrot.lane.b32.xlu0 %v765, 96
      %v771 = vpop.permute.xlu0 %770
      %v772 = vrot.slane %v769, 4
      %v773 = vrot.slane %v771, 4
      %v774 = vsel %vm489, %v772, %v773
      %v775 = vsel %vm613, %v769, %v774
      %777 = vst [vmem:[#allocation3 + $0x68] sm:$0x33] %v775
      %v778 = vld [vmem:[%s674] sm:$0x33]
      %v779 = vld [vmem:[%s674 + $0x8] sm:$0x3]
      %v782 = vrot.slane %v778, 6
      %v783 = vrot.slane %v779, 6
      %784 = vrot.lane.b32.xlu0 %v782, 95
      %v785 = vpop.permute.xlu0 %784
      %786 = vrot.lane.b32.xlu0 %v783, 95
      %v787 = vpop.permute.xlu0 %786
      %v788 = vrot.slane %v785, 4
      %v789 = vrot.slane %v787, 4
      %v790 = vsel %vm489, %v788, %v789
      %v791 = vsel %vm630, %v785, %v790
      %793 = vst [vmem:[#allocation3 + $0x68] sm:$0xcc] %v791
      %v794 = vld [vmem:[%s674] sm:$0x33]
      %v795 = vld [vmem:[%s674 + $0x8] sm:$0x3]
      %v796 = vsel %vm641, %v794, 0
      %v797 = vsel %vm642, %v795, 0
      %800 = vrot.lane.b32.xlu0 %v796, 94
      %v801 = vpop.permute.xlu0 %800
      %802 = vrot.lane.b32.xlu0 %v797, 94
      %v803 = vpop.permute.xlu0 %802
      %v804 = vrot.slane %v801, 4
      %v805 = vrot.slane %v803, 4
      %v806 = vsel %vm489, %v804, %v805
      %v807 = vsel %vm654, %v801, %v806
      %809 = vst [vmem:[#allocation3 + $0x88] sm:$0x33] %v807
      %s810 = scalar_lea.vmem %s386, 8
      %v811 = vld [vmem:[%s810] sm:$0xf]
      %v814 = vunpack.c.l.s4 1983009808
      %v815 = vunpack.c.0.s8 %v814
      %v816 = vlaneseq
      %v817 = vshrl.u32 %v816, 7
      %v818 = vsub.s32 %v815, %v817
      %v819 = vrot.slane %v811, %v818
      %820 = vrot.lane.b32.xlu0 %v819, 17
      %v821 = vpop.permute.xlu0 %820
      %v822 = vrot.slane %v821, 4
      %v823 = vsel %vm459, %v822, %v821
      %s826 = scalar_lea.vmem [#allocation2], 48
      %827 = vst.msk [vmem:[%s826] sm:$0x33] %vm465, %v823
      %828 = vst.msk [vmem:[%s826 + $0x8] sm:$0x3] %vm467, %v822
      %v829 = vld [vmem:[%s826] sm:$0x33]
      %v830 = vsel %vm474, %v829, 0
      %831 = vst [vmem:[#allocation3 + $0x10] sm:$0x33] %v830
      %v832 = vld [vmem:[%s826] sm:$0x33]
      %v833 = vld [vmem:[%s826 + $0x8] sm:$0x3]
      %v836 = vrot.slane %v832, 6
      %v837 = vrot.slane %v833, 6
      %838 = vrot.lane.b32.xlu0 %v836, 127
      %v839 = vpop.permute.xlu0 %838
      %840 = vrot.lane.b32.xlu0 %v837, 127
      %v841 = vpop.permute.xlu0 %840
      %v842 = vrot.slane %v839, 4
      %v843 = vrot.slane %v841, 4
      %v844 = vsel %vm489, %v842, %v843
      %v845 = vsel %vm491, %v839, %v844
      %847 = vst [vmem:[#allocation3 + $0x10] sm:$0xcc] %v845
      %v848 = vld [vmem:[%s826] sm:$0x33]
      %v849 = vld [vmem:[%s826 + $0x8] sm:$0x3]
      %v850 = vsel %vm508, %v848, 0
      %v851 = vsel %vm509, %v849, 0
      %854 = vrot.lane.b32.xlu0 %v850, 126
      %v855 = vpop.permute.xlu0 %854
      %856 = vrot.lane.b32.xlu0 %v851, 126
      %v857 = vpop.permute.xlu0 %856
      %v858 = vrot.slane %v855, 4
      %v859 = vrot.slane %v857, 4
      %v860 = vsel %vm489, %v858, %v859
      %v861 = vsel %vm521, %v855, %v860
      %863 = vst [vmem:[#allocation3 + $0x30] sm:$0x33] %v861
      %v864 = vld [vmem:[%s826] sm:$0x33]
      %v865 = vld [vmem:[%s826 + $0x8] sm:$0x3]
      %v866 = vsel %vm533, %v864, 0
      %v867 = vsel %vm534, %v865, 0
      %v870 = vrot.slane %v866, 6
      %v871 = vrot.slane %v867, 6
      %872 = vrot.lane.b32.xlu0 %v870, 112
      %v873 = vpop.permute.xlu0 %872
      %874 = vrot.lane.b32.xlu0 %v871, 112
      %v875 = vpop.permute.xlu0 %874
      %v876 = vrot.slane %v873, 4
      %v877 = vrot.slane %v875, 4
      %v878 = vsel %vm489, %v876, %v877
      %v879 = vsel %vm548, %v873, %v878
      %881 = vst [vmem:[#allocation3 + $0x30] sm:$0xcc] %v879
      %v882 = vld [vmem:[%s826] sm:$0x33]
      %v883 = vld [vmem:[%s826 + $0x8] sm:$0x3]
      %886 = vrot.lane.b32.xlu0 %v882, 111
      %v887 = vpop.permute.xlu0 %886
      %888 = vrot.lane.b32.xlu0 %v883, 111
      %v889 = vpop.permute.xlu0 %888
      %v890 = vrot.slane %v887, 4
      %v891 = vrot.slane %v889, 4
      %v892 = vsel %vm489, %v890, %v891
      %v893 = vsel %vm563, %v887, %v892
      %895 = vst [vmem:[#allocation3 + $0x50] sm:$0x33] %v893
      %v896 = vld [vmem:[%s826] sm:$0x33]
      %v897 = vld [vmem:[%s826 + $0x8] sm:$0x3]
      %v898 = vsel %vm574, %v896, 0
      %v899 = vsel %vm575, %v897, 0
      %v902 = vrot.slane %v898, 6
      %v903 = vrot.slane %v899, 6
      %904 = vrot.lane.b32.xlu0 %v902, 110
      %v905 = vpop.permute.xlu0 %904
      %906 = vrot.lane.b32.xlu0 %v903, 110
      %v907 = vpop.permute.xlu0 %906
      %v908 = vrot.slane %v905, 4
      %v909 = vrot.slane %v907, 4
      %v910 = vsel %vm489, %v908, %v909
      %v911 = vsel %vm589, %v905, %v910
      %913 = vst [vmem:[#allocation3 + $0x50] sm:$0xcc] %v911
      %v914 = vld [vmem:[%s826] sm:$0x33]
      %v915 = vld [vmem:[%s826 + $0x8] sm:$0x3]
      %v916 = vsel %vm600, %v914, 0
      %v917 = vsel %vm601, %v915, 0
      %920 = vrot.lane.b32.xlu0 %v916, 96
      %v921 = vpop.permute.xlu0 %920
      %922 = vrot.lane.b32.xlu0 %v917, 96
      %v923 = vpop.permute.xlu0 %922
      %v924 = vrot.slane %v921, 4
      %v925 = vrot.slane %v923, 4
      %v926 = vsel %vm489, %v924, %v925
      %v927 = vsel %vm613, %v921, %v926
      %929 = vst [vmem:[#allocation3 + $0x70] sm:$0x33] %v927
      %v930 = vld [vmem:[%s826] sm:$0x33]
      %v931 = vld [vmem:[%s826 + $0x8] sm:$0x3]
      %v934 = vrot.slane %v930, 6
      %v935 = vrot.slane %v931, 6
      %936 = vrot.lane.b32.xlu0 %v934, 95
      %v937 = vpop.permute.xlu0 %936
      %938 = vrot.lane.b32.xlu0 %v935, 95
      %v939 = vpop.permute.xlu0 %938
      %v940 = vrot.slane %v937, 4
      %v941 = vrot.slane %v939, 4
      %v942 = vsel %vm489, %v940, %v941
      %v943 = vsel %vm630, %v937, %v942
      %945 = vst [vmem:[#allocation3 + $0x70] sm:$0xcc] %v943
      %v946 = vld [vmem:[%s826] sm:$0x33]
      %v947 = vld [vmem:[%s826 + $0x8] sm:$0x3]
      %v948 = vsel %vm641, %v946, 0
      %v949 = vsel %vm642, %v947, 0
      %952 = vrot.lane.b32.xlu0 %v948, 94
      %v953 = vpop.permute.xlu0 %952
      %954 = vrot.lane.b32.xlu0 %v949, 94
      %v955 = vpop.permute.xlu0 %954
      %v956 = vrot.slane %v953, 4
      %v957 = vrot.slane %v955, 4
      %v958 = vsel %vm489, %v956, %v957
      %v959 = vsel %vm654, %v953, %v958
      %961 = vst [vmem:[#allocation3 + $0x90] sm:$0x33] %v959
      %s962 = scalar_lea.vmem %s386, 12
      %v963 = vld [vmem:[%s962] sm:$0xf]
      %v966 = vunpack.c.l.s4 1983009808
      %v967 = vunpack.c.0.s8 %v966
      %v968 = vlaneseq
      %v969 = vshrl.u32 %v968, 7
      %v970 = vsub.s32 %v967, %v969
      %v971 = vrot.slane %v963, %v970
      %972 = vrot.lane.b32.xlu0 %v971, 17
      %v973 = vpop.permute.xlu0 %972
      %v974 = vrot.slane %v973, 4
      %v975 = vsel %vm459, %v974, %v973
      %s978 = scalar_lea.vmem [#allocation2], 72
      %979 = vst.msk [vmem:[%s978] sm:$0x33] %vm465, %v975
      %980 = vst.msk [vmem:[%s978 + $0x8] sm:$0x3] %vm467, %v974
      %v981 = vld [vmem:[%s978] sm:$0x33]
      %v982 = vsel %vm474, %v981, 0
      %983 = vst [vmem:[#allocation3 + $0x18] sm:$0x33] %v982
      %v984 = vld [vmem:[%s978] sm:$0x33]
      %v985 = vld [vmem:[%s978 + $0x8] sm:$0x3]
      %v988 = vrot.slane %v984, 6
      %v989 = vrot.slane %v985, 6
      %990 = vrot.lane.b32.xlu0 %v988, 127
      %v991 = vpop.permute.xlu0 %990
      %992 = vrot.lane.b32.xlu0 %v989, 127
      %v993 = vpop.permute.xlu0 %992
      %v994 = vrot.slane %v991, 4
      %v995 = vrot.slane %v993, 4
      %v996 = vsel %vm489, %v994, %v995
      %v997 = vsel %vm491, %v991, %v996
      %999 = vst [vmem:[#allocation3 + $0x18] sm:$0xcc] %v997
      %v1000 = vld [vmem:[%s978] sm:$0x33]
      %v1001 = vld [vmem:[%s978 + $0x8] sm:$0x3]
      %v1002 = vsel %vm508, %v1000, 0
      %v1003 = vsel %vm509, %v1001, 0
      %1006 = vrot.lane.b32.xlu0 %v1002, 126
      %v1007 = vpop.permute.xlu0 %1006
      %1008 = vrot.lane.b32.xlu0 %v1003, 126
      %v1009 = vpop.permute.xlu0 %1008
      %v1010 = vrot.slane %v1007, 4
      %v1011 = vrot.slane %v1009, 4
      %v1012 = vsel %vm489, %v1010, %v1011
      %v1013 = vsel %vm521, %v1007, %v1012
      %1015 = vst [vmem:[#allocation3 + $0x38] sm:$0x33] %v1013
      %v1016 = vld [vmem:[%s978] sm:$0x33]
      %v1017 = vld [vmem:[%s978 + $0x8] sm:$0x3]
      %v1018 = vsel %vm533, %v1016, 0
      %v1019 = vsel %vm534, %v1017, 0
      %v1022 = vrot.slane %v1018, 6
      %v1023 = vrot.slane %v1019, 6
      %1024 = vrot.lane.b32.xlu0 %v1022, 112
      %v1025 = vpop.permute.xlu0 %1024
      %1026 = vrot.lane.b32.xlu0 %v1023, 112
      %v1027 = vpop.permute.xlu0 %1026
      %v1028 = vrot.slane %v1025, 4
      %v1029 = vrot.slane %v1027, 4
      %v1030 = vsel %vm489, %v1028, %v1029
      %v1031 = vsel %vm548, %v1025, %v1030
      %1033 = vst [vmem:[#allocation3 + $0x38] sm:$0xcc] %v1031
      %v1034 = vld [vmem:[%s978] sm:$0x33]
      %v1035 = vld [vmem:[%s978 + $0x8] sm:$0x3]
      %1038 = vrot.lane.b32.xlu0 %v1034, 111
      %v1039 = vpop.permute.xlu0 %1038
      %1040 = vrot.lane.b32.xlu0 %v1035, 111
      %v1041 = vpop.permute.xlu0 %1040
      %v1042 = vrot.slane %v1039, 4
      %v1043 = vrot.slane %v1041, 4
      %v1044 = vsel %vm489, %v1042, %v1043
      %v1045 = vsel %vm563, %v1039, %v1044
      %1047 = vst [vmem:[#allocation3 + $0x58] sm:$0x33] %v1045
      %v1048 = vld [vmem:[%s978] sm:$0x33]
      %v1049 = vld [vmem:[%s978 + $0x8] sm:$0x3]
      %v1050 = vsel %vm574, %v1048, 0
      %v1051 = vsel %vm575, %v1049, 0
      %v1054 = vrot.slane %v1050, 6
      %v1055 = vrot.slane %v1051, 6
      %1056 = vrot.lane.b32.xlu0 %v1054, 110
      %v1057 = vpop.permute.xlu0 %1056
      %1058 = vrot.lane.b32.xlu0 %v1055, 110
      %v1059 = vpop.permute.xlu0 %1058
      %v1060 = vrot.slane %v1057, 4
      %v1061 = vrot.slane %v1059, 4
      %v1062 = vsel %vm489, %v1060, %v1061
      %v1063 = vsel %vm589, %v1057, %v1062
      %1065 = vst [vmem:[#allocation3 + $0x58] sm:$0xcc] %v1063
      %v1066 = vld [vmem:[%s978] sm:$0x33]
      %v1067 = vld [vmem:[%s978 + $0x8] sm:$0x3]
      %v1068 = vsel %vm600, %v1066, 0
      %v1069 = vsel %vm601, %v1067, 0
      %1072 = vrot.lane.b32.xlu0 %v1068, 96
      %v1073 = vpop.permute.xlu0 %1072
      %1074 = vrot.lane.b32.xlu0 %v1069, 96
      %v1075 = vpop.permute.xlu0 %1074
      %v1076 = vrot.slane %v1073, 4
      %v1077 = vrot.slane %v1075, 4
      %v1078 = vsel %vm489, %v1076, %v1077
      %v1079 = vsel %vm613, %v1073, %v1078
      %1081 = vst [vmem:[#allocation3 + $0x78] sm:$0x33] %v1079
      %v1082 = vld [vmem:[%s978] sm:$0x33]
      %v1083 = vld [vmem:[%s978 + $0x8] sm:$0x3]
      %v1086 = vrot.slane %v1082, 6
      %v1087 = vrot.slane %v1083, 6
      %1088 = vrot.lane.b32.xlu0 %v1086, 95
      %v1089 = vpop.permute.xlu0 %1088
      %1090 = vrot.lane.b32.xlu0 %v1087, 95
      %v1091 = vpop.permute.xlu0 %1090
      %v1092 = vrot.slane %v1089, 4
      %v1093 = vrot.slane %v1091, 4
      %v1094 = vsel %vm489, %v1092, %v1093
      %v1095 = vsel %vm630, %v1089, %v1094
      %1097 = vst [vmem:[#allocation3 + $0x78] sm:$0xcc] %v1095
      %v1098 = vld [vmem:[%s978] sm:$0x33]
      %v1099 = vld [vmem:[%s978 + $0x8] sm:$0x3]
      %v1100 = vsel %vm641, %v1098, 0
      %v1101 = vsel %vm642, %v1099, 0
      %1104 = vrot.lane.b32.xlu0 %v1100, 94
      %v1105 = vpop.permute.xlu0 %1104
      %1106 = vrot.lane.b32.xlu0 %v1101, 94
      %v1107 = vpop.permute.xlu0 %1106
      %v1108 = vrot.slane %v1105, 4
      %v1109 = vrot.slane %v1107, 4
      %v1110 = vsel %vm489, %v1108, %v1109
      %v1111 = vsel %vm654, %v1105, %v1110
      %1113 = vst [vmem:[#allocation3 + $0x98] sm:$0x33] %v1111
      %v1114 = vld [vmem:[%s1] sm:$0xf]
      %v1115 = vld [vmem:[%s1 + $0x4] sm:$0xf]
      %v1116 = vld [vmem:[#allocation3] sm:$0xff]
      %v1117 = vld [vmem:[#allocation3 + $0x8] sm:$0xff]
      %v1118 = vld [vmem:[#allocation3 + $0x10] sm:$0xff]
      %v1119 = vld [vmem:[#allocation3 + $0x18] sm:$0xff]
      %v1120 = vld [vmem:[#allocation3 + $0x20] sm:$0xff]
      %v1121 = vld [vmem:[#allocation3 + $0x28] sm:$0xff]
      %v1122 = vld [vmem:[#allocation3 + $0x30] sm:$0xff]
      %v1123 = vld [vmem:[#allocation3 + $0x38] sm:$0xff]
      %v1124 = vld [vmem:[#allocation3 + $0x40] sm:$0xff]
      %v1125 = vld [vmem:[#allocation3 + $0x48] sm:$0xff]
      %v1126 = vld [vmem:[#allocation3 + $0x50] sm:$0xff]
      %v1127 = vld [vmem:[#allocation3 + $0x58] sm:$0xff]
      %v1128 = vld [vmem:[#allocation3 + $0x60] sm:$0xff]
      %v1129 = vld [vmem:[#allocation3 + $0x68] sm:$0xff]
      %v1130 = vld [vmem:[#allocation3 + $0x70] sm:$0xff]
      %v1131 = vld [vmem:[#allocation3 + $0x78] sm:$0xff]
      %v1132 = vld [vmem:[#allocation3 + $0x80] sm:$0x33]
      %v1133 = vld [vmem:[#allocation3 + $0x88] sm:$0x33]
      %v1134 = vld [vmem:[#allocation3 + $0x90] sm:$0x33]
      %v1135 = vld [vmem:[#allocation3 + $0x98] sm:$0x33]
      %v1138 = vunpack.c.l.b16 %v1114
      %v1139 = vunpack.c.l.b16 %v1115
      %v1140 = vpack.c.b16 %v1139, %v1138
      %v1161 = vunpack.c.l.b16 %v1116
      %v1162 = vunpack.c.h.b16 %v1116
      %v1163 = vunpack.c.l.b16 %v1117
      %v1164 = vunpack.c.h.b16 %v1117
      %v1165 = vunpack.c.l.b16 %v1118
      %v1166 = vunpack.c.h.b16 %v1118
      %v1167 = vunpack.c.l.b16 %v1119
      %v1168 = vunpack.c.h.b16 %v1119
      %v1169 = vunpack.c.l.b16 %v1120
      %v1170 = vunpack.c.h.b16 %v1120
      %v1171 = vunpack.c.l.b16 %v1121
      %v1172 = vunpack.c.h.b16 %v1121
      %v1173 = vunpack.c.l.b16 %v1122
      %v1174 = vunpack.c.h.b16 %v1122
      %v1175 = vunpack.c.l.b16 %v1123
      %v1176 = vunpack.c.h.b16 %v1123
      %v1177 = vunpack.c.l.b16 %v1124
      %v1178 = vunpack.c.h.b16 %v1124
      %v1179 = vunpack.c.l.b16 %v1125
      %v1180 = vunpack.c.h.b16 %v1125
      %v1181 = vunpack.c.l.b16 %v1126
      %v1182 = vunpack.c.h.b16 %v1126
      %v1183 = vunpack.c.l.b16 %v1127
      %v1184 = vunpack.c.h.b16 %v1127
      %v1185 = vunpack.c.l.b16 %v1128
      %v1186 = vunpack.c.h.b16 %v1128
      %v1187 = vunpack.c.l.b16 %v1129
      %v1188 = vunpack.c.h.b16 %v1129
      %v1189 = vunpack.c.l.b16 %v1130
      %v1190 = vunpack.c.h.b16 %v1130
      %v1191 = vunpack.c.l.b16 %v1131
      %v1192 = vunpack.c.h.b16 %v1131
      %v1193 = vunpack.c.l.b16 %v1132
      %v1194 = vunpack.c.h.b16 %v1132
      %v1195 = vunpack.c.l.b16 %v1133
      %v1196 = vunpack.c.h.b16 %v1133
      %v1197 = vunpack.c.l.b16 %v1134
      %v1198 = vunpack.c.h.b16 %v1134
      %v1199 = vunpack.c.l.b16 %v1135
      %v1200 = vunpack.c.h.b16 %v1135
      %v1201 = vpack.c.b16 %v1169, %v1161
      %v1202 = vpack.c.b16 %v1170, %v1162
      %v1203 = vpack.c.b16 %v1171, %v1163
      %v1204 = vpack.c.b16 %v1172, %v1164
      %v1205 = vpack.c.b16 %v1173, %v1165
      %v1206 = vpack.c.b16 %v1174, %v1166
      %v1207 = vpack.c.b16 %v1175, %v1167
      %v1208 = vpack.c.b16 %v1176, %v1168
      %v1209 = vpack.c.b16 %v1185, %v1177
      %v1210 = vpack.c.b16 %v1186, %v1178
      %v1211 = vpack.c.b16 %v1187, %v1179
      %v1212 = vpack.c.b16 %v1188, %v1180
      %v1213 = vpack.c.b16 %v1189, %v1181
      %v1214 = vpack.c.b16 %v1190, %v1182
      %v1215 = vpack.c.b16 %v1191, %v1183
      %v1216 = vpack.c.b16 %v1192, %v1184
      %v1217 = vpack.c.b16 %v1193, %v1193
      %v1218 = vpack.c.b16 %v1194, %v1194
      %v1219 = vpack.c.b16 %v1195, %v1195
      %v1220 = vpack.c.b16 %v1196, %v1196
      %v1221 = vpack.c.b16 %v1197, %v1197
      %v1222 = vpack.c.b16 %v1198, %v1198
      %v1223 = vpack.c.b16 %v1199, %v1199
      %v1224 = vpack.c.b16 %v1200, %v1200
      %vm1241 = vcmask 293888
      %v1243 = vsel %vm1241, %v1140, 0
      %vm1245 = vcmask 1041408
      %v1247 = vsel %vm1245, %v1217, 0
      %v1250 = vsel %vm1245, %v1218, 0
      %v1253 = vsel %vm1245, %v1219, 0
      %v1256 = vsel %vm1245, %v1220, 0
      %v1259 = vsel %vm1245, %v1221, 0
      %v1262 = vsel %vm1245, %v1222, 0
      %v1265 = vsel %vm1245, %v1223, 0
      %v1268 = vsel %vm1245, %v1224, 0
      %1270 = vmatprep.subr.bf16.mxu0 0
      %1271 = vmatpush1.bf16.msra.mxu0 0
      %1272 = vmatprep.subr.bf16.mxu0 0
      %1273 = vmatpush1.bf16.msra.mxu0 0
      %1274 = vmatprep.subr.bf16.mxu0 0
      %1275 = vmatpush1.bf16.msra.mxu0 0
      %1276 = vmatprep.subr.bf16.mxu0 0
      %1277 = vmatpush1.bf16.msra.mxu0 0
      %1278 = vmatprep.subr.bf16.mxu0 0
      %1279 = vmatpush1.bf16.msra.mxu0 0
      %1280 = vmatprep.subr.bf16.mxu0 %v1250
      %1281 = vmatpush1.bf16.msra.mxu0 %v1247
      %1282 = vmatprep.subr.bf16.mxu0 %v1210
      %1283 = vmatpush1.bf16.msra.mxu0 %v1209
      %1284 = vmatprep.subr.bf16.mxu0 %v1202
      %1285 = vmatpush1.bf16.msra.mxu0 %v1201
      %1286 = vmatprep.subr.bf16.mxu0 0
      %1287 = vmatpush2.bf16.msra.mxu0 0
      %1288 = vmatprep.subr.bf16.mxu0 0
      %1289 = vmatpush2.bf16.msra.mxu0 0
      %1290 = vmatprep.subr.bf16.mxu0 0
      %1291 = vmatpush2.bf16.msra.mxu0 0
      %1292 = vmatprep.subr.bf16.mxu0 0
      %1293 = vmatpush2.bf16.msra.mxu0 0
      %1294 = vmatprep.subr.bf16.mxu0 0
      %1295 = vmatpush2.bf16.msra.mxu0 0
      %1296 = vmatprep.subr.bf16.mxu0 0
      %1297 = vmatpush2.bf16.msra.mxu0 0
      %1298 = vmatprep.subr.bf16.mxu0 0
      %1299 = vmatpush2.bf16.msra.mxu0 0
      %1300 = vmatprep.subr.bf16.mxu0 0
      %1301 = vmatpush2.bf16.msra.mxu0 0
      %1302 = vmatprep.mubr.bf16.mxu0 0
      %1303 = vmatmul.mubr.bf16.gmra.mxu0 %v1243
      %v1304 = vpop.f32.mrf.mxu0
      %v1305 = vadd.f32 0.0, %v1304
      %v1306 = vpop.f32.mrf.mxu0
      %v1307 = vadd.f32 0.0, %v1306
      %v1308 = vpop.f32.mrf.mxu0
      %v1309 = vadd.f32 0.0, %v1308
      %v1310 = vpop.f32.mrf.mxu0
      %v1311 = vadd.f32 0.0, %v1310
      %1312 = vdwg.mxu0
      %1313 = vmatprep.subr.bf16.mxu0 0
      %1314 = vmatpush1.bf16.msra.mxu0 0
      %1315 = vmatprep.subr.bf16.mxu0 0
      %1316 = vmatpush1.bf16.msra.mxu0 0
      %1317 = vmatprep.subr.bf16.mxu0 0
      %1318 = vmatpush1.bf16.msra.mxu0 0
      %1319 = vmatprep.subr.bf16.mxu0 0
      %1320 = vmatpush1.bf16.msra.mxu0 0
      %1321 = vmatprep.subr.bf16.mxu0 0
      %1322 = vmatpush1.bf16.msra.mxu0 0
      %1323 = vmatprep.subr.bf16.mxu0 %v1256
      %1324 = vmatpush1.bf16.msra.mxu0 %v1253
      %1325 = vmatprep.subr.bf16.mxu0 %v1212
      %1326 = vmatpush1.bf16.msra.mxu0 %v1211
      %1327 = vmatprep.subr.bf16.mxu0 %v1204
      %1328 = vmatpush1.bf16.msra.mxu0 %v1203
      %1329 = vmatprep.subr.bf16.mxu0 0
      %1330 = vmatpush2.bf16.msra.mxu0 0
      %1331 = vmatprep.subr.bf16.mxu0 0
      %1332 = vmatpush2.bf16.msra.mxu0 0
      %1333 = vmatprep.subr.bf16.mxu0 0
      %1334 = vmatpush2.bf16.msra.mxu0 0
      %1335 = vmatprep.subr.bf16.mxu0 0
      %1336 = vmatpush2.bf16.msra.mxu0 0
      %1337 = vmatprep.subr.bf16.mxu0 0
      %1338 = vmatpush2.bf16.msra.mxu0 0
      %1339 = vmatprep.subr.bf16.mxu0 0
      %1340 = vmatpush2.bf16.msra.mxu0 0
      %1341 = vmatprep.subr.bf16.mxu0 0
      %1342 = vmatpush2.bf16.msra.mxu0 0
      %1343 = vmatprep.subr.bf16.mxu0 0
      %1344 = vmatpush2.bf16.msra.mxu0 0
      %1345 = vmatprep.mubr.bf16.mxu0 0
      %1346 = vmatmul.mubr.bf16.gmra.mxu0 %v1243
      %v1347 = vpop.f32.mrf.mxu0
      %v1348 = vadd.f32 0.0, %v1347
      %v1349 = vpop.f32.mrf.mxu0
      %v1350 = vadd.f32 0.0, %v1349
      %v1351 = vpop.f32.mrf.mxu0
      %v1352 = vadd.f32 0.0, %v1351
      %v1353 = vpop.f32.mrf.mxu0
      %v1354 = vadd.f32 0.0, %v1353
      %1355 = vdwg.mxu0
      %1356 = vmatprep.subr.bf16.mxu0 0
      %1357 = vmatpush1.bf16.msra.mxu0 0
      %1358 = vmatprep.subr.bf16.mxu0 0
      %1359 = vmatpush1.bf16.msra.mxu0 0
      %1360 = vmatprep.subr.bf16.mxu0 0
      %1361 = vmatpush1.bf16.msra.mxu0 0
      %1362 = vmatprep.subr.bf16.mxu0 0
      %1363 = vmatpush1.bf16.msra.mxu0 0
      %1364 = vmatprep.subr.bf16.mxu0 0
      %1365 = vmatpush1.bf16.msra.mxu0 0
      %1366 = vmatprep.subr.bf16.mxu0 %v1262
      %1367 = vmatpush1.bf16.msra.mxu0 %v1259
      %1368 = vmatprep.subr.bf16.mxu0 %v1214
      %1369 = vmatpush1.bf16.msra.mxu0 %v1213
      %1370 = vmatprep.subr.bf16.mxu0 %v1206
      %1371 = vmatpush1.bf16.msra.mxu0 %v1205
      %1372 = vmatprep.subr.bf16.mxu0 0
      %1373 = vmatpush2.bf16.msra.mxu0 0
      %1374 = vmatprep.subr.bf16.mxu0 0
      %1375 = vmatpush2.bf16.msra.mxu0 0
      %1376 = vmatprep.subr.bf16.mxu0 0
      %1377 = vmatpush2.bf16.msra.mxu0 0
      %1378 = vmatprep.subr.bf16.mxu0 0
      %1379 = vmatpush2.bf16.msra.mxu0 0
      %1380 = vmatprep.subr.bf16.mxu0 0
      %1381 = vmatpush2.bf16.msra.mxu0 0
      %1382 = vmatprep.subr.bf16.mxu0 0
      %1383 = vmatpush2.bf16.msra.mxu0 0
      %1384 = vmatprep.subr.bf16.mxu0 0
      %1385 = vmatpush2.bf16.msra.mxu0 0
      %1386 = vmatprep.subr.bf16.mxu0 0
      %1387 = vmatpush2.bf16.msra.mxu0 0
      %1388 = vmatprep.mubr.bf16.mxu0 0
      %1389 = vmatmul.mubr.bf16.gmra.mxu0 %v1243
      %v1390 = vpop.f32.mrf.mxu0
      %v1391 = vadd.f32 0.0, %v1390
      %v1392 = vpop.f32.mrf.mxu0
      %v1393 = vadd.f32 0.0, %v1392
      %v1394 = vpop.f32.mrf.mxu0
      %v1395 = vadd.f32 0.0, %v1394
      %v1396 = vpop.f32.mrf.mxu0
      %v1397 = vadd.f32 0.0, %v1396
      %1398 = vdwg.mxu0
      %1399 = vmatprep.subr.bf16.mxu0 0
      %1400 = vmatpush1.bf16.msra.mxu0 0
      %1401 = vmatprep.subr.bf16.mxu0 0
      %1402 = vmatpush1.bf16.msra.mxu0 0
      %1403 = vmatprep.subr.bf16.mxu0 0
      %1404 = vmatpush1.bf16.msra.mxu0 0
      %1405 = vmatprep.subr.bf16.mxu0 0
      %1406 = vmatpush1.bf16.msra.mxu0 0
      %1407 = vmatprep.subr.bf16.mxu0 0
      %1408 = vmatpush1.bf16.msra.mxu0 0
      %1409 = vmatprep.subr.bf16.mxu0 %v1268
      %1410 = vmatpush1.bf16.msra.mxu0 %v1265
      %1411 = vmatprep.subr.bf16.mxu0 %v1216
      %1412 = vmatpush1.bf16.msra.mxu0 %v1215
      %1413 = vmatprep.subr.bf16.mxu0 %v1208
      %1414 = vmatpush1.bf16.msra.mxu0 %v1207
      %1415 = vmatprep.subr.bf16.mxu0 0
      %1416 = vmatpush2.bf16.msra.mxu0 0
      %1417 = vmatprep.subr.bf16.mxu0 0
      %1418 = vmatpush2.bf16.msra.mxu0 0
      %1419 = vmatprep.subr.bf16.mxu0 0
      %1420 = vmatpush2.bf16.msra.mxu0 0
      %1421 = vmatprep.subr.bf16.mxu0 0
      %1422 = vmatpush2.bf16.msra.mxu0 0
      %1423 = vmatprep.subr.bf16.mxu0 0
      %1424 = vmatpush2.bf16.msra.mxu0 0
      %1425 = vmatprep.subr.bf16.mxu0 0
      %1426 = vmatpush2.bf16.msra.mxu0 0
      %1427 = vmatprep.subr.bf16.mxu0 0
      %1428 = vmatpush2.bf16.msra.mxu0 0
      %1429 = vmatprep.subr.bf16.mxu0 0
      %1430 = vmatpush2.bf16.msra.mxu0 0
      %1431 = vmatprep.mubr.bf16.mxu0 0
      %1432 = vmatmul.mubr.bf16.gmra.mxu0 %v1243
      %v1433 = vpop.f32.mrf.mxu0
      %v1434 = vadd.f32 0.0, %v1433
      %v1435 = vpop.f32.mrf.mxu0
      %v1436 = vadd.f32 0.0, %v1435
      %v1437 = vpop.f32.mrf.mxu0
      %v1438 = vadd.f32 0.0, %v1437
      %v1439 = vpop.f32.mrf.mxu0
      %v1440 = vadd.f32 0.0, %v1439
      %1441 = vdwg.mxu0
      %v1442 = vld [vmem:[%s2] sm:$0xff]
      %v1443 = vld [vmem:[%s2 + $0x8] sm:$0xff]
      %1445 = vset.pattern.permute.xlu0 0
      %1446 = vperm.xlu0 %1445, %v1442
      %v1447 = vpop.permute.xlu0 %1446
      %1450 = vset.pattern.permute.xlu0 0
      %1451 = vperm.xlu0 %1450, %v1443
      %v1452 = vpop.permute.xlu0 %1451
      %v1454 = vmul.f32 %v1305, %v1447
      %v1455 = vmul.f32 %v1307, %v1447
      %v1456 = vmul.f32 %v1348, %v1447
      %v1457 = vmul.f32 %v1350, %v1447
      %v1458 = vmul.f32 %v1391, %v1447
      %v1459 = vmul.f32 %v1393, %v1447
      %v1460 = vmul.f32 %v1434, %v1447
      %v1461 = vmul.f32 %v1436, %v1447
      %v1462 = vmul.f32 %v1309, %v1452
      %v1463 = vmul.f32 %v1311, %v1452
      %v1464 = vmul.f32 %v1352, %v1452
      %v1465 = vmul.f32 %v1354, %v1452
      %v1466 = vmul.f32 %v1395, %v1452
      %v1467 = vmul.f32 %v1397, %v1452
      %v1468 = vmul.f32 %v1438, %v1452
      %v1469 = vmul.f32 %v1440, %v1452
      %v1470 = vld [vmem:[%s3] sm:$0xff]
      %v1471 = vld [vmem:[%s3 + $0x8] sm:$0xff]
      %1473 = vset.pattern.permute.xlu0 0
      %1474 = vperm.xlu0 %1473, %v1470
      %v1475 = vpop.permute.xlu0 %1474
      %1478 = vset.pattern.permute.xlu0 0
      %1479 = vperm.xlu0 %1478, %v1471
      %v1480 = vpop.permute.xlu0 %1479
      %v1482 = vadd.f32 %v1454, %v1475
      %v1483 = vadd.f32 %v1455, %v1475
      %v1484 = vadd.f32 %v1456, %v1475
      %v1485 = vadd.f32 %v1457, %v1475
      %v1486 = vadd.f32 %v1458, %v1475
      %v1487 = vadd.f32 %v1459, %v1475
      %v1488 = vadd.f32 %v1460, %v1475
      %v1489 = vadd.f32 %v1461, %v1475
      %v1490 = vadd.f32 %v1462, %v1480
      %v1491 = vadd.f32 %v1463, %v1480
      %v1492 = vadd.f32 %v1464, %v1480
      %v1493 = vadd.f32 %v1465, %v1480
      %v1494 = vadd.f32 %v1466, %v1480
      %v1495 = vadd.f32 %v1467, %v1480
      %v1496 = vadd.f32 %v1468, %v1480
      %v1497 = vadd.f32 %v1469, %v1480
      %v1498 = vmax.f32 %v1482, 0.0
      %v1499 = vmax.f32 %v1483, 0.0
      %v1500 = vmax.f32 %v1484, 0.0
      %v1501 = vmax.f32 %v1485, 0.0
      %v1502 = vmax.f32 %v1486, 0.0
      %v1503 = vmax.f32 %v1487, 0.0
      %v1504 = vmax.f32 %v1488, 0.0
      %v1505 = vmax.f32 %v1489, 0.0
      %v1506 = vmax.f32 %v1490, 0.0
      %v1507 = vmax.f32 %v1491, 0.0
      %v1508 = vmax.f32 %v1492, 0.0
      %v1509 = vmax.f32 %v1493, 0.0
      %v1510 = vmax.f32 %v1494, 0.0
      %v1511 = vmax.f32 %v1495, 0.0
      %v1512 = vmax.f32 %v1496, 0.0
      %v1513 = vmax.f32 %v1497, 0.0
      %v1514 = vpack.c.bf16 %v1506, %v1498
      %v1515 = vpack.c.bf16 %v1507, %v1499
      %v1516 = vpack.c.bf16 %v1508, %v1500
      %v1517 = vpack.c.bf16 %v1509, %v1501
      %v1518 = vpack.c.bf16 %v1510, %v1502
      %v1519 = vpack.c.bf16 %v1511, %v1503
      %v1520 = vpack.c.bf16 %v1512, %v1504
      %v1521 = vpack.c.bf16 %v1513, %v1505
      %v1524 = vunpack.c.l.b16 %v1514
      %v1525 = vunpack.c.l.b16 %v1515
      %v1526 = vunpack.c.h.b16 %v1514
      %v1527 = vunpack.c.h.b16 %v1515
      %v1528 = vpack.c.b16 %v1525, %v1524
      %v1529 = vpack.c.b16 %v1527, %v1526
      %1530 = vrot.lane.b32.xlu0 %v1528, 17
      %v1531 = vpop.permute.xlu0 %1530
      %1532 = vrot.lane.b32.xlu0 %v1529, 17
      %v1533 = vpop.permute.xlu0 %1532
      %v1534 = vrot.slane %v1531, 4
      %v1535 = vrot.slane %v1533, 4
      %v1536 = vsel %vm459, %v1534, %v1531
      %v1537 = vsel %vm459, %v1535, %v1533
      %vm1542 = vcmask 1043592
      %vm1543 = vcmask 1047556
      %vm1544 = vmor %vm1543, %vm1542
      %1545 = vst.msk [vmem:[#allocation2] sm:$0xff] %vm1544, %v1536
      %1546 = vst.msk [vmem:[#allocation2 + $0x8] sm:$0xf] %vm429, %v1534
      %1547 = vst.msk [vmem:[#allocation2 + $0xc] sm:$0xff] %vm1544, %v1537
      %1548 = vst.msk [vmem:[#allocation2 + $0x14] sm:$0xf] %vm429, %v1535
      %v1549 = vld [vmem:[#allocation2] sm:$0xff]
      %v1550 = vld [vmem:[#allocation2 + $0xc] sm:$0xff]
      %v1551 = vsel %vm474, %v1549, 0
      %v1552 = vsel %vm474, %v1550, 0
      %1553 = vst [vmem:[#allocation3] sm:$0xff] %v1551
      %1554 = vst [vmem:[#allocation3 + $0x20] sm:$0xff] %v1552
      %v1555 = vld [vmem:[#allocation2] sm:$0xff]
      %v1556 = vld [vmem:[#allocation2 + $0x8] sm:$0xf]
      %v1557 = vld [vmem:[#allocation2 + $0xc] sm:$0xff]
      %v1558 = vld [vmem:[#allocation2 + $0x14] sm:$0xf]
      %1563 = vrot.lane.b32.xlu0 %v1555, 127
      %v1564 = vpop.permute.xlu0 %1563
      %1565 = vrot.lane.b32.xlu0 %v1556, 127
      %v1566 = vpop.permute.xlu0 %1565
      %1567 = vrot.lane.b32.xlu0 %v1557, 127
      %v1568 = vpop.permute.xlu0 %1567
      %1569 = vrot.lane.b32.xlu0 %v1558, 127
      %v1570 = vpop.permute.xlu0 %1569
      %v1571 = vrot.slane %v1564, 4
      %v1572 = vrot.slane %v1566, 4
      %v1573 = vrot.slane %v1568, 4
      %v1574 = vrot.slane %v1570, 4
      %v1575 = vsel %vm489, %v1571, %v1572
      %v1576 = vsel %vm491, %v1564, %v1575
      %v1577 = vsel %vm489, %v1573, %v1574
      %v1578 = vsel %vm491, %v1568, %v1577
      %1581 = vst [vmem:[#allocation3 + $0x40] sm:$0xff] %v1576
      %1582 = vst [vmem:[#allocation3 + $0x60] sm:$0xff] %v1578
      %v1583 = vld [vmem:[#allocation2] sm:$0xff]
      %v1584 = vld [vmem:[#allocation2 + $0x8] sm:$0xf]
      %v1585 = vld [vmem:[#allocation2 + $0xc] sm:$0xff]
      %v1586 = vld [vmem:[#allocation2 + $0x14] sm:$0xf]
      %v1587 = vsel %vm508, %v1583, 0
      %v1588 = vsel %vm509, %v1584, 0
      %v1589 = vsel %vm508, %v1585, 0
      %v1590 = vsel %vm509, %v1586, 0
      %1595 = vrot.lane.b32.xlu0 %v1587, 126
      %v1596 = vpop.permute.xlu0 %1595
      %1597 = vrot.lane.b32.xlu0 %v1588, 126
      %v1598 = vpop.permute.xlu0 %1597
      %1599 = vrot.lane.b32.xlu0 %v1589, 126
      %v1600 = vpop.permute.xlu0 %1599
      %1601 = vrot.lane.b32.xlu0 %v1590, 126
      %v1602 = vpop.permute.xlu0 %1601
      %v1603 = vrot.slane %v1596, 4
      %v1604 = vrot.slane %v1598, 4
      %v1605 = vrot.slane %v1600, 4
      %v1606 = vrot.slane %v1602, 4
      %v1607 = vsel %vm489, %v1603, %v1604
      %v1608 = vsel %vm521, %v1596, %v1607
      %v1609 = vsel %vm489, %v1605, %v1606
      %v1610 = vsel %vm521, %v1600, %v1609
      %1613 = vst [vmem:[#allocation3 + $0x80] sm:$0xff] %v1608
      %1614 = vst [vmem:[#allocation3 + $0xa0] sm:$0xff] %v1610
      %v1615 = vld [vmem:[#allocation2] sm:$0xff]
      %v1616 = vld [vmem:[#allocation2 + $0x8] sm:$0xf]
      %v1617 = vld [vmem:[#allocation2 + $0xc] sm:$0xff]
      %v1618 = vld [vmem:[#allocation2 + $0x14] sm:$0xf]
      %v1619 = vsel %vm533, %v1615, 0
      %v1620 = vsel %vm534, %v1616, 0
      %v1621 = vsel %vm533, %v1617, 0
      %v1622 = vsel %vm534, %v1618, 0
      %1627 = vrot.lane.b32.xlu0 %v1619, 112
      %v1628 = vpop.permute.xlu0 %1627
      %1629 = vrot.lane.b32.xlu0 %v1620, 112
      %v1630 = vpop.permute.xlu0 %1629
      %1631 = vrot.lane.b32.xlu0 %v1621, 112
      %v1632 = vpop.permute.xlu0 %1631
      %1633 = vrot.lane.b32.xlu0 %v1622, 112
      %v1634 = vpop.permute.xlu0 %1633
      %v1635 = vrot.slane %v1628, 4
      %v1636 = vrot.slane %v1630, 4
      %v1637 = vrot.slane %v1632, 4
      %v1638 = vrot.slane %v1634, 4
      %v1639 = vsel %vm489, %v1635, %v1636
      %v1640 = vsel %vm548, %v1628, %v1639
      %v1641 = vsel %vm489, %v1637, %v1638
      %v1642 = vsel %vm548, %v1632, %v1641
      %1645 = vst [vmem:[#allocation3 + $0xc0] sm:$0xff] %v1640
      %1646 = vst [vmem:[#allocation3 + $0xe0] sm:$0xff] %v1642
      %v1647 = vld [vmem:[#allocation2] sm:$0xff]
      %v1648 = vld [vmem:[#allocation2 + $0x8] sm:$0xf]
      %v1649 = vld [vmem:[#allocation2 + $0xc] sm:$0xff]
      %v1650 = vld [vmem:[#allocation2 + $0x14] sm:$0xf]
      %1655 = vrot.lane.b32.xlu0 %v1647, 111
      %v1656 = vpop.permute.xlu0 %1655
      %1657 = vrot.lane.b32.xlu0 %v1648, 111
      %v1658 = vpop.permute.xlu0 %1657
      %1659 = vrot.lane.b32.xlu0 %v1649, 111
      %v1660 = vpop.permute.xlu0 %1659
      %1661 = vrot.lane.b32.xlu0 %v1650, 111
      %v1662 = vpop.permute.xlu0 %1661
      %v1663 = vrot.slane %v1656, 4
      %v1664 = vrot.slane %v1658, 4
      %v1665 = vrot.slane %v1660, 4
      %v1666 = vrot.slane %v1662, 4
      %v1667 = vsel %vm489, %v1663, %v1664
      %v1668 = vsel %vm563, %v1656, %v1667
      %v1669 = vsel %vm489, %v1665, %v1666
      %v1670 = vsel %vm563, %v1660, %v1669
      %1673 = vst [vmem:[#allocation3 + $0x100] sm:$0xff] %v1668
      %1674 = vst [vmem:[#allocation3 + $0x120] sm:$0xff] %v1670
      %v1675 = vld [vmem:[#allocation2] sm:$0xff]
      %v1676 = vld [vmem:[#allocation2 + $0x8] sm:$0xf]
      %v1677 = vld [vmem:[#allocation2 + $0xc] sm:$0xff]
      %v1678 = vld [vmem:[#allocation2 + $0x14] sm:$0xf]
      %v1679 = vsel %vm574, %v1675, 0
      %v1680 = vsel %vm575, %v1676, 0
      %v1681 = vsel %vm574, %v1677, 0
      %v1682 = vsel %vm575, %v1678, 0
      %1687 = vrot.lane.b32.xlu0 %v1679, 110
      %v1688 = vpop.permute.xlu0 %1687
      %1689 = vrot.lane.b32.xlu0 %v1680, 110
      %v1690 = vpop.permute.xlu0 %1689
      %1691 = vrot.lane.b32.xlu0 %v1681, 110
      %v1692 = vpop.permute.xlu0 %1691
      %1693 = vrot.lane.b32.xlu0 %v1682, 110
      %v1694 = vpop.permute.xlu0 %1693
      %v1695 = vrot.slane %v1688, 4
      %v1696 = vrot.slane %v1690, 4
      %v1697 = vrot.slane %v1692, 4
      %v1698 = vrot.slane %v1694, 4
      %v1699 = vsel %vm489, %v1695, %v1696
      %v1700 = vsel %vm589, %v1688, %v1699
      %v1701 = vsel %vm489, %v1697, %v1698
      %v1702 = vsel %vm589, %v1692, %v1701
      %1705 = vst [vmem:[#allocation3 + $0x140] sm:$0xff] %v1700
      %1706 = vst [vmem:[#allocation3 + $0x160] sm:$0xff] %v1702
      %v1707 = vld [vmem:[#allocation2] sm:$0xff]
      %v1708 = vld [vmem:[#allocation2 + $0x8] sm:$0xf]
      %v1709 = vld [vmem:[#allocation2 + $0xc] sm:$0xff]
      %v1710 = vld [vmem:[#allocation2 + $0x14] sm:$0xf]
      %v1711 = vsel %vm600, %v1707, 0
      %v1712 = vsel %vm601, %v1708, 0
      %v1713 = vsel %vm600, %v1709, 0
      %v1714 = vsel %vm601, %v1710, 0
      %1719 = vrot.lane.b32.xlu0 %v1711, 96
      %v1720 = vpop.permute.xlu0 %1719
      %1721 = vrot.lane.b32.xlu0 %v1712, 96
      %v1722 = vpop.permute.xlu0 %1721
      %1723 = vrot.lane.b32.xlu0 %v1713, 96
      %v1724 = vpop.permute.xlu0 %1723
      %1725 = vrot.lane.b32.xlu0 %v1714, 96
      %v1726 = vpop.permute.xlu0 %1725
      %v1727 = vrot.slane %v1720, 4
      %v1728 = vrot.slane %v1722, 4
      %v1729 = vrot.slane %v1724, 4
      %v1730 = vrot.slane %v1726, 4
      %v1731 = vsel %vm489, %v1727, %v1728
      %v1732 = vsel %vm613, %v1720, %v1731
      %v1733 = vsel %vm489, %v1729, %v1730
      %v1734 = vsel %vm613, %v1724, %v1733
      %1737 = vst [vmem:[#allocation3 + $0x180] sm:$0xff] %v1732
      %1738 = vst [vmem:[#allocation3 + $0x1a0] sm:$0xff] %v1734
      %v1739 = vld [vmem:[#allocation2] sm:$0xff]
      %v1740 = vld [vmem:[#allocation2 + $0x8] sm:$0xf]
      %v1741 = vld [vmem:[#allocation2 + $0xc] sm:$0xff]
      %v1742 = vld [vmem:[#allocation2 + $0x14] sm:$0xf]
      %1747 = vrot.lane.b32.xlu0 %v1739, 95
      %v1748 = vpop.permute.xlu0 %1747
      %1749 = vrot.lane.b32.xlu0 %v1740, 95
      %v1750 = vpop.permute.xlu0 %1749
      %1751 = vrot.lane.b32.xlu0 %v1741, 95
      %v1752 = vpop.permute.xlu0 %1751
      %1753 = vrot.lane.b32.xlu0 %v1742, 95
      %v1754 = vpop.permute.xlu0 %1753
      %v1755 = vrot.slane %v1748, 4
      %v1756 = vrot.slane %v1750, 4
      %v1757 = vrot.slane %v1752, 4
      %v1758 = vrot.slane %v1754, 4
      %v1759 = vsel %vm489, %v1755, %v1756
      %v1760 = vsel %vm630, %v1748, %v1759
      %v1761 = vsel %vm489, %v1757, %v1758
      %v1762 = vsel %vm630, %v1752, %v1761
      %1765 = vst [vmem:[#allocation3 + $0x1c0] sm:$0xff] %v1760
      %1766 = vst [vmem:[#allocation3 + $0x1e0] sm:$0xff] %v1762
      %v1767 = vld [vmem:[#allocation2] sm:$0xff]
      %v1768 = vld [vmem:[#allocation2 + $0x8] sm:$0xf]
      %v1769 = vld [vmem:[#allocation2 + $0xc] sm:$0xff]
      %v1770 = vld [vmem:[#allocation2 + $0x14] sm:$0xf]
      %v1771 = vsel %vm641, %v1767, 0
      %v1772 = vsel %vm642, %v1768, 0
      %v1773 = vsel %vm641, %v1769, 0
      %v1774 = vsel %vm642, %v1770, 0
      %1779 = vrot.lane.b32.xlu0 %v1771, 94
      %v1780 = vpop.permute.xlu0 %1779
      %1781 = vrot.lane.b32.xlu0 %v1772, 94
      %v1782 = vpop.permute.xlu0 %1781
      %1783 = vrot.lane.b32.xlu0 %v1773, 94
      %v1784 = vpop.permute.xlu0 %1783
      %1785 = vrot.lane.b32.xlu0 %v1774, 94
      %v1786 = vpop.permute.xlu0 %1785
      %v1787 = vrot.slane %v1780, 4
      %v1788 = vrot.slane %v1782, 4
      %v1789 = vrot.slane %v1784, 4
      %v1790 = vrot.slane %v1786, 4
      %v1791 = vsel %vm489, %v1787, %v1788
      %v1792 = vsel %vm654, %v1780, %v1791
      %v1793 = vsel %vm489, %v1789, %v1790
      %v1794 = vsel %vm654, %v1784, %v1793
      %1797 = vst [vmem:[#allocation3 + $0x200] sm:$0xff] %v1792
      %1798 = vst [vmem:[#allocation3 + $0x220] sm:$0xff] %v1794
      %v1801 = vunpack.c.l.b16 %v1516
      %v1802 = vunpack.c.l.b16 %v1517
      %v1803 = vunpack.c.h.b16 %v1516
      %v1804 = vunpack.c.h.b16 %v1517
      %v1805 = vpack.c.b16 %v1802, %v1801
      %v1806 = vpack.c.b16 %v1804, %v1803
      %1807 = vrot.lane.b32.xlu0 %v1805, 17
      %v1808 = vpop.permute.xlu0 %1807
      %1809 = vrot.lane.b32.xlu0 %v1806, 17
      %v1810 = vpop.permute.xlu0 %1809
      %v1811 = vrot.slane %v1808, 4
      %v1812 = vrot.slane %v1810, 4
      %v1813 = vsel %vm459, %v1811, %v1808
      %v1814 = vsel %vm459, %v1812, %v1810
      %1819 = vst.msk [vmem:[%s674] sm:$0xff] %vm1544, %v1813
      %1820 = vst.msk [vmem:[%s674 + $0x8] sm:$0xf] %vm429, %v1811
      %1821 = vst.msk [vmem:[%s674 + $0xc] sm:$0xff] %vm1544, %v1814
      %1822 = vst.msk [vmem:[%s674 + $0x14] sm:$0xf] %vm429, %v1812
      %v1823 = vld [vmem:[%s674] sm:$0xff]
      %v1824 = vld [vmem:[%s674 + $0xc] sm:$0xff]
      %v1825 = vsel %vm474, %v1823, 0
      %v1826 = vsel %vm474, %v1824, 0
      %1827 = vst [vmem:[#allocation3 + $0x8] sm:$0xff] %v1825
      %1828 = vst [vmem:[#allocation3 + $0x28] sm:$0xff] %v1826
      %v1829 = vld [vmem:[%s674] sm:$0xff]
      %v1830 = vld [vmem:[%s674 + $0x8] sm:$0xf]
      %v1831 = vld [vmem:[%s674 + $0xc] sm:$0xff]
      %v1832 = vld [vmem:[%s674 + $0x14] sm:$0xf]
      %1837 = vrot.lane.b32.xlu0 %v1829, 127
      %v1838 = vpop.permute.xlu0 %1837
      %1839 = vrot.lane.b32.xlu0 %v1830, 127
      %v1840 = vpop.permute.xlu0 %1839
      %1841 = vrot.lane.b32.xlu0 %v1831, 127
      %v1842 = vpop.permute.xlu0 %1841
      %1843 = vrot.lane.b32.xlu0 %v1832, 127
      %v1844 = vpop.permute.xlu0 %1843
      %v1845 = vrot.slane %v1838, 4
      %v1846 = vrot.slane %v1840, 4
      %v1847 = vrot.slane %v1842, 4
      %v1848 = vrot.slane %v1844, 4
      %v1849 = vsel %vm489, %v1845, %v1846
      %v1850 = vsel %vm491, %v1838, %v1849
      %v1851 = vsel %vm489, %v1847, %v1848
      %v1852 = vsel %vm491, %v1842, %v1851
      %1855 = vst [vmem:[#allocation3 + $0x48] sm:$0xff] %v1850
      %1856 = vst [vmem:[#allocation3 + $0x68] sm:$0xff] %v1852
      %v1857 = vld [vmem:[%s674] sm:$0xff]
      %v1858 = vld [vmem:[%s674 + $0x8] sm:$0xf]
      %v1859 = vld [vmem:[%s674 + $0xc] sm:$0xff]
      %v1860 = vld [vmem:[%s674 + $0x14] sm:$0xf]
      %v1861 = vsel %vm508, %v1857, 0
      %v1862 = vsel %vm509, %v1858, 0
      %v1863 = vsel %vm508, %v1859, 0
      %v1864 = vsel %vm509, %v1860, 0
      %1869 = vrot.lane.b32.xlu0 %v1861, 126
      %v1870 = vpop.permute.xlu0 %1869
      %1871 = vrot.lane.b32.xlu0 %v1862, 126
      %v1872 = vpop.permute.xlu0 %1871
      %1873 = vrot.lane.b32.xlu0 %v1863, 126
      %v1874 = vpop.permute.xlu0 %1873
      %1875 = vrot.lane.b32.xlu0 %v1864, 126
      %v1876 = vpop.permute.xlu0 %1875
      %v1877 = vrot.slane %v1870, 4
      %v1878 = vrot.slane %v1872, 4
      %v1879 = vrot.slane %v1874, 4
      %v1880 = vrot.slane %v1876, 4
      %v1881 = vsel %vm489, %v1877, %v1878
      %v1882 = vsel %vm521, %v1870, %v1881
      %v1883 = vsel %vm489, %v1879, %v1880
      %v1884 = vsel %vm521, %v1874, %v1883
      %1887 = vst [vmem:[#allocation3 + $0x88] sm:$0xff] %v1882
      %1888 = vst [vmem:[#allocation3 + $0xa8] sm:$0xff] %v1884
      %v1889 = vld [vmem:[%s674] sm:$0xff]
      %v1890 = vld [vmem:[%s674 + $0x8] sm:$0xf]
      %v1891 = vld [vmem:[%s674 + $0xc] sm:$0xff]
      %v1892 = vld [vmem:[%s674 + $0x14] sm:$0xf]
      %v1893 = vsel %vm533, %v1889, 0
      %v1894 = vsel %vm534, %v1890, 0
      %v1895 = vsel %vm533, %v1891, 0
      %v1896 = vsel %vm534, %v1892, 0
      %1901 = vrot.lane.b32.xlu0 %v1893, 112
      %v1902 = vpop.permute.xlu0 %1901
      %1903 = vrot.lane.b32.xlu0 %v1894, 112
      %v1904 = vpop.permute.xlu0 %1903
      %1905 = vrot.lane.b32.xlu0 %v1895, 112
      %v1906 = vpop.permute.xlu0 %1905
      %1907 = vrot.lane.b32.xlu0 %v1896, 112
      %v1908 = vpop.permute.xlu0 %1907
      %v1909 = vrot.slane %v1902, 4
      %v1910 = vrot.slane %v1904, 4
      %v1911 = vrot.slane %v1906, 4
      %v1912 = vrot.slane %v1908, 4
      %v1913 = vsel %vm489, %v1909, %v1910
      %v1914 = vsel %vm548, %v1902, %v1913
      %v1915 = vsel %vm489, %v1911, %v1912
      %v1916 = vsel %vm548, %v1906, %v1915
      %1919 = vst [vmem:[#allocation3 + $0xc8] sm:$0xff] %v1914
      %1920 = vst [vmem:[#allocation3 + $0xe8] sm:$0xff] %v1916
      %v1921 = vld [vmem:[%s674] sm:$0xff]
      %v1922 = vld [vmem:[%s674 + $0x8] sm:$0xf]
      %v1923 = vld [vmem:[%s674 + $0xc] sm:$0xff]
      %v1924 = vld [vmem:[%s674 + $0x14] sm:$0xf]
      %1929 = vrot.lane.b32.xlu0 %v1921, 111
      %v1930 = vpop.permute.xlu0 %1929
      %1931 = vrot.lane.b32.xlu0 %v1922, 111
      %v1932 = vpop.permute.xlu0 %1931
      %1933 = vrot.lane.b32.xlu0 %v1923, 111
      %v1934 = vpop.permute.xlu0 %1933
      %1935 = vrot.lane.b32.xlu0 %v1924, 111
      %v1936 = vpop.permute.xlu0 %1935
      %v1937 = vrot.slane %v1930, 4
      %v1938 = vrot.slane %v1932, 4
      %v1939 = vrot.slane %v1934, 4
      %v1940 = vrot.slane %v1936, 4
      %v1941 = vsel %vm489, %v1937, %v1938
      %v1942 = vsel %vm563, %v1930, %v1941
      %v1943 = vsel %vm489, %v1939, %v1940
      %v1944 = vsel %vm563, %v1934, %v1943
      %1947 = vst [vmem:[#allocation3 + $0x108] sm:$0xff] %v1942
      %1948 = vst [vmem:[#allocation3 + $0x128] sm:$0xff] %v1944
      %v1949 = vld [vmem:[%s674] sm:$0xff]
      %v1950 = vld [vmem:[%s674 + $0x8] sm:$0xf]
      %v1951 = vld [vmem:[%s674 + $0xc] sm:$0xff]
      %v1952 = vld [vmem:[%s674 + $0x14] sm:$0xf]
      %v1953 = vsel %vm574, %v1949, 0
      %v1954 = vsel %vm575, %v1950, 0
      %v1955 = vsel %vm574, %v1951, 0
      %v1956 = vsel %vm575, %v1952, 0
      %1961 = vrot.lane.b32.xlu0 %v1953, 110
      %v1962 = vpop.permute.xlu0 %1961
      %1963 = vrot.lane.b32.xlu0 %v1954, 110
      %v1964 = vpop.permute.xlu0 %1963
      %1965 = vrot.lane.b32.xlu0 %v1955, 110
      %v1966 = vpop.permute.xlu0 %1965
      %1967 = vrot.lane.b32.xlu0 %v1956, 110
      %v1968 = vpop.permute.xlu0 %1967
      %v1969 = vrot.slane %v1962, 4
      %v1970 = vrot.slane %v1964, 4
      %v1971 = vrot.slane %v1966, 4
      %v1972 = vrot.slane %v1968, 4
      %v1973 = vsel %vm489, %v1969, %v1970
      %v1974 = vsel %vm589, %v1962, %v1973
      %v1975 = vsel %vm489, %v1971, %v1972
      %v1976 = vsel %vm589, %v1966, %v1975
      %1979 = vst [vmem:[#allocation3 + $0x148] sm:$0xff] %v1974
      %1980 = vst [vmem:[#allocation3 + $0x168] sm:$0xff] %v1976
      %v1981 = vld [vmem:[%s674] sm:$0xff]
      %v1982 = vld [vmem:[%s674 + $0x8] sm:$0xf]
      %v1983 = vld [vmem:[%s674 + $0xc] sm:$0xff]
      %v1984 = vld [vmem:[%s674 + $0x14] sm:$0xf]
      %v1985 = vsel %vm600, %v1981, 0
      %v1986 = vsel %vm601, %v1982, 0
      %v1987 = vsel %vm600, %v1983, 0
      %v1988 = vsel %vm601, %v1984, 0
      %1993 = vrot.lane.b32.xlu0 %v1985, 96
      %v1994 = vpop.permute.xlu0 %1993
      %1995 = vrot.lane.b32.xlu0 %v1986, 96
      %v1996 = vpop.permute.xlu0 %1995
      %1997 = vrot.lane.b32.xlu0 %v1987, 96
      %v1998 = vpop.permute.xlu0 %1997
      %1999 = vrot.lane.b32.xlu0 %v1988, 96
      %v2000 = vpop.permute.xlu0 %1999
      %v2001 = vrot.slane %v1994, 4
      %v2002 = vrot.slane %v1996, 4
      %v2003 = vrot.slane %v1998, 4
      %v2004 = vrot.slane %v2000, 4
      %v2005 = vsel %vm489, %v2001, %v2002
      %v2006 = vsel %vm613, %v1994, %v2005
      %v2007 = vsel %vm489, %v2003, %v2004
      %v2008 = vsel %vm613, %v1998, %v2007
      %2011 = vst [vmem:[#allocation3 + $0x188] sm:$0xff] %v2006
      %2012 = vst [vmem:[#allocation3 + $0x1a8] sm:$0xff] %v2008
      %v2013 = vld [vmem:[%s674] sm:$0xff]
      %v2014 = vld [vmem:[%s674 + $0x8] sm:$0xf]
      %v2015 = vld [vmem:[%s674 + $0xc] sm:$0xff]
      %v2016 = vld [vmem:[%s674 + $0x14] sm:$0xf]
      %2021 = vrot.lane.b32.xlu0 %v2013, 95
      %v2022 = vpop.permute.xlu0 %2021
      %2023 = vrot.lane.b32.xlu0 %v2014, 95
      %v2024 = vpop.permute.xlu0 %2023
      %2025 = vrot.lane.b32.xlu0 %v2015, 95
      %v2026 = vpop.permute.xlu0 %2025
      %2027 = vrot.lane.b32.xlu0 %v2016, 95
      %v2028 = vpop.permute.xlu0 %2027
      %v2029 = vrot.slane %v2022, 4
      %v2030 = vrot.slane %v2024, 4
      %v2031 = vrot.slane %v2026, 4
      %v2032 = vrot.slane %v2028, 4
      %v2033 = vsel %vm489, %v2029, %v2030
      %v2034 = vsel %vm630, %v2022, %v2033
      %v2035 = vsel %vm489, %v2031, %v2032
      %v2036 = vsel %vm630, %v2026, %v2035
      %2039 = vst [vmem:[#allocation3 + $0x1c8] sm:$0xff] %v2034
      %2040 = vst [vmem:[#allocation3 + $0x1e8] sm:$0xff] %v2036
      %v2041 = vld [vmem:[%s674] sm:$0xff]
      %v2042 = vld [vmem:[%s674 + $0x8] sm:$0xf]
      %v2043 = vld [vmem:[%s674 + $0xc] sm:$0xff]
      %v2044 = vld [vmem:[%s674 + $0x14] sm:$0xf]
      %v2045 = vsel %vm641, %v2041, 0
      %v2046 = vsel %vm642, %v2042, 0
      %v2047 = vsel %vm641, %v2043, 0
      %v2048 = vsel %vm642, %v2044, 0
      %2053 = vrot.lane.b32.xlu0 %v2045, 94
      %v2054 = vpop.permute.xlu0 %2053
      %2055 = vrot.lane.b32.xlu0 %v2046, 94
      %v2056 = vpop.permute.xlu0 %2055
      %2057 = vrot.lane.b32.xlu0 %v2047, 94
      %v2058 = vpop.permute.xlu0 %2057
      %2059 = vrot.lane.b32.xlu0 %v2048, 94
      %v2060 = vpop.permute.xlu0 %2059
      %v2061 = vrot.slane %v2054, 4
      %v2062 = vrot.slane %v2056, 4
      %v2063 = vrot.slane %v2058, 4
      %v2064 = vrot.slane %v2060, 4
      %v2065 = vsel %vm489, %v2061, %v2062
      %v2066 = vsel %vm654, %v2054, %v2065
      %v2067 = vsel %vm489, %v2063, %v2064
      %v2068 = vsel %vm654, %v2058, %v2067
      %2071 = vst [vmem:[#allocation3 + $0x208] sm:$0xff] %v2066
      %2072 = vst [vmem:[#allocation3 + $0x228] sm:$0xff] %v2068
      %v2075 = vunpack.c.l.b16 %v1518
      %v2076 = vunpack.c.l.b16 %v1519
      %v2077 = vunpack.c.h.b16 %v1518
      %v2078 = vunpack.c.h.b16 %v1519
      %v2079 = vpack.c.b16 %v2076, %v2075
      %v2080 = vpack.c.b16 %v2078, %v2077
      %2081 = vrot.lane.b32.xlu0 %v2079, 17
      %v2082 = vpop.permute.xlu0 %2081
      %2083 = vrot.lane.b32.xlu0 %v2080, 17
      %v2084 = vpop.permute.xlu0 %2083
      %v2085 = vrot.slane %v2082, 4
      %v2086 = vrot.slane %v2084, 4
      %v2087 = vsel %vm459, %v2085, %v2082
      %v2088 = vsel %vm459, %v2086, %v2084
      %2093 = vst.msk [vmem:[%s826] sm:$0xff] %vm1544, %v2087
      %2094 = vst.msk [vmem:[%s826 + $0x8] sm:$0xf] %vm429, %v2085
      %2095 = vst.msk [vmem:[%s826 + $0xc] sm:$0xff] %vm1544, %v2088
      %2096 = vst.msk [vmem:[%s826 + $0x14] sm:$0xf] %vm429, %v2086
      %v2097 = vld [vmem:[%s826] sm:$0xff]
      %v2098 = vld [vmem:[%s826 + $0xc] sm:$0xff]
      %v2099 = vsel %vm474, %v2097, 0
      %v2100 = vsel %vm474, %v2098, 0
      %2101 = vst [vmem:[#allocation3 + $0x10] sm:$0xff] %v2099
      %2102 = vst [vmem:[#allocation3 + $0x30] sm:$0xff] %v2100
      %v2103 = vld [vmem:[%s826] sm:$0xff]
      %v2104 = vld [vmem:[%s826 + $0x8] sm:$0xf]
      %v2105 = vld [vmem:[%s826 + $0xc] sm:$0xff]
      %v2106 = vld [vmem:[%s826 + $0x14] sm:$0xf]
      %2111 = vrot.lane.b32.xlu0 %v2103, 127
      %v2112 = vpop.permute.xlu0 %2111
      %2113 = vrot.lane.b32.xlu0 %v2104, 127
      %v2114 = vpop.permute.xlu0 %2113
      %2115 = vrot.lane.b32.xlu0 %v2105, 127
      %v2116 = vpop.permute.xlu0 %2115
      %2117 = vrot.lane.b32.xlu0 %v2106, 127
      %v2118 = vpop.permute.xlu0 %2117
      %v2119 = vrot.slane %v2112, 4
      %v2120 = vrot.slane %v2114, 4
      %v2121 = vrot.slane %v2116, 4
      %v2122 = vrot.slane %v2118, 4
      %v2123 = vsel %vm489, %v2119, %v2120
      %v2124 = vsel %vm491, %v2112, %v2123
      %v2125 = vsel %vm489, %v2121, %v2122
      %v2126 = vsel %vm491, %v2116, %v2125
      %2129 = vst [vmem:[#allocation3 + $0x50] sm:$0xff] %v2124
      %2130 = vst [vmem:[#allocation3 + $0x70] sm:$0xff] %v2126
      %v2131 = vld [vmem:[%s826] sm:$0xff]
      %v2132 = vld [vmem:[%s826 + $0x8] sm:$0xf]
      %v2133 = vld [vmem:[%s826 + $0xc] sm:$0xff]
      %v2134 = vld [vmem:[%s826 + $0x14] sm:$0xf]
      %v2135 = vsel %vm508, %v2131, 0
      %v2136 = vsel %vm509, %v2132, 0
      %v2137 = vsel %vm508, %v2133, 0
      %v2138 = vsel %vm509, %v2134, 0
      %2143 = vrot.lane.b32.xlu0 %v2135, 126
      %v2144 = vpop.permute.xlu0 %2143
      %2145 = vrot.lane.b32.xlu0 %v2136, 126
      %v2146 = vpop.permute.xlu0 %2145
      %2147 = vrot.lane.b32.xlu0 %v2137, 126
      %v2148 = vpop.permute.xlu0 %2147
      %2149 = vrot.lane.b32.xlu0 %v2138, 126
      %v2150 = vpop.permute.xlu0 %2149
      %v2151 = vrot.slane %v2144, 4
      %v2152 = vrot.slane %v2146, 4
      %v2153 = vrot.slane %v2148, 4
      %v2154 = vrot.slane %v2150, 4
      %v2155 = vsel %vm489, %v2151, %v2152
      %v2156 = vsel %vm521, %v2144, %v2155
      %v2157 = vsel %vm489, %v2153, %v2154
      %v2158 = vsel %vm521, %v2148, %v2157
      %2161 = vst [vmem:[#allocation3 + $0x90] sm:$0xff] %v2156
      %2162 = vst [vmem:[#allocation3 + $0xb0] sm:$0xff] %v2158
      %v2163 = vld [vmem:[%s826] sm:$0xff]
      %v2164 = vld [vmem:[%s826 + $0x8] sm:$0xf]
      %v2165 = vld [vmem:[%s826 + $0xc] sm:$0xff]
      %v2166 = vld [vmem:[%s826 + $0x14] sm:$0xf]
      %v2167 = vsel %vm533, %v2163, 0
      %v2168 = vsel %vm534, %v2164, 0
      %v2169 = vsel %vm533, %v2165, 0
      %v2170 = vsel %vm534, %v2166, 0
      %2175 = vrot.lane.b32.xlu0 %v2167, 112
      %v2176 = vpop.permute.xlu0 %2175
      %2177 = vrot.lane.b32.xlu0 %v2168, 112
      %v2178 = vpop.permute.xlu0 %2177
      %2179 = vrot.lane.b32.xlu0 %v2169, 112
      %v2180 = vpop.permute.xlu0 %2179
      %2181 = vrot.lane.b32.xlu0 %v2170, 112
      %v2182 = vpop.permute.xlu0 %2181
      %v2183 = vrot.slane %v2176, 4
      %v2184 = vrot.slane %v2178, 4
      %v2185 = vrot.slane %v2180, 4
      %v2186 = vrot.slane %v2182, 4
      %v2187 = vsel %vm489, %v2183, %v2184
      %v2188 = vsel %vm548, %v2176, %v2187
      %v2189 = vsel %vm489, %v2185, %v2186
      %v2190 = vsel %vm548, %v2180, %v2189
      %2193 = vst [vmem:[#allocation3 + $0xd0] sm:$0xff] %v2188
      %2194 = vst [vmem:[#allocation3 + $0xf0] sm:$0xff] %v2190
      %v2195 = vld [vmem:[%s826] sm:$0xff]
      %v2196 = vld [vmem:[%s826 + $0x8] sm:$0xf]
      %v2197 = vld [vmem:[%s826 + $0xc] sm:$0xff]
      %v2198 = vld [vmem:[%s826 + $0x14] sm:$0xf]
      %2203 = vrot.lane.b32.xlu0 %v2195, 111
      %v2204 = vpop.permute.xlu0 %2203
      %2205 = vrot.lane.b32.xlu0 %v2196, 111
      %v2206 = vpop.permute.xlu0 %2205
      %2207 = vrot.lane.b32.xlu0 %v2197, 111
      %v2208 = vpop.permute.xlu0 %2207
      %2209 = vrot.lane.b32.xlu0 %v2198, 111
      %v2210 = vpop.permute.xlu0 %2209
      %v2211 = vrot.slane %v2204, 4
      %v2212 = vrot.slane %v2206, 4
      %v2213 = vrot.slane %v2208, 4
      %v2214 = vrot.slane %v2210, 4
      %v2215 = vsel %vm489, %v2211, %v2212
      %v2216 = vsel %vm563, %v2204, %v2215
      %v2217 = vsel %vm489, %v2213, %v2214
      %v2218 = vsel %vm563, %v2208, %v2217
      %2221 = vst [vmem:[#allocation3 + $0x110] sm:$0xff] %v2216
      %2222 = vst [vmem:[#allocation3 + $0x130] sm:$0xff] %v2218
      %v2223 = vld [vmem:[%s826] sm:$0xff]
      %v2224 = vld [vmem:[%s826 + $0x8] sm:$0xf]
      %v2225 = vld [vmem:[%s826 + $0xc] sm:$0xff]
      %v2226 = vld [vmem:[%s826 + $0x14] sm:$0xf]
      %v2227 = vsel %vm574, %v2223, 0
      %v2228 = vsel %vm575, %v2224, 0
      %v2229 = vsel %vm574, %v2225, 0
      %v2230 = vsel %vm575, %v2226, 0
      %2235 = vrot.lane.b32.xlu0 %v2227, 110
      %v2236 = vpop.permute.xlu0 %2235
      %2237 = vrot.lane.b32.xlu0 %v2228, 110
      %v2238 = vpop.permute.xlu0 %2237
      %2239 = vrot.lane.b32.xlu0 %v2229, 110
      %v2240 = vpop.permute.xlu0 %2239
      %2241 = vrot.lane.b32.xlu0 %v2230, 110
      %v2242 = vpop.permute.xlu0 %2241
      %v2243 = vrot.slane %v2236, 4
      %v2244 = vrot.slane %v2238, 4
      %v2245 = vrot.slane %v2240, 4
      %v2246 = vrot.slane %v2242, 4
      %v2247 = vsel %vm489, %v2243, %v2244
      %v2248 = vsel %vm589, %v2236, %v2247
      %v2249 = vsel %vm489, %v2245, %v2246
      %v2250 = vsel %vm589, %v2240, %v2249
      %2253 = vst [vmem:[#allocation3 + $0x150] sm:$0xff] %v2248
      %2254 = vst [vmem:[#allocation3 + $0x170] sm:$0xff] %v2250
      %v2255 = vld [vmem:[%s826] sm:$0xff]
      %v2256 = vld [vmem:[%s826 + $0x8] sm:$0xf]
      %v2257 = vld [vmem:[%s826 + $0xc] sm:$0xff]
      %v2258 = vld [vmem:[%s826 + $0x14] sm:$0xf]
      %v2259 = vsel %vm600, %v2255, 0
      %v2260 = vsel %vm601, %v2256, 0
      %v2261 = vsel %vm600, %v2257, 0
      %v2262 = vsel %vm601, %v2258, 0
      %2267 = vrot.lane.b32.xlu0 %v2259, 96
      %v2268 = vpop.permute.xlu0 %2267
      %2269 = vrot.lane.b32.xlu0 %v2260, 96
      %v2270 = vpop.permute.xlu0 %2269
      %2271 = vrot.lane.b32.xlu0 %v2261, 96
      %v2272 = vpop.permute.xlu0 %2271
      %2273 = vrot.lane.b32.xlu0 %v2262, 96
      %v2274 = vpop.permute.xlu0 %2273
      %v2275 = vrot.slane %v2268, 4
      %v2276 = vrot.slane %v2270, 4
      %v2277 = vrot.slane %v2272, 4
      %v2278 = vrot.slane %v2274, 4
      %v2279 = vsel %vm489, %v2275, %v2276
      %v2280 = vsel %vm613, %v2268, %v2279
      %v2281 = vsel %vm489, %v2277, %v2278
      %v2282 = vsel %vm613, %v2272, %v2281
      %2285 = vst [vmem:[#allocation3 + $0x190] sm:$0xff] %v2280
      %2286 = vst [vmem:[#allocation3 + $0x1b0] sm:$0xff] %v2282
      %v2287 = vld [vmem:[%s826] sm:$0xff]
      %v2288 = vld [vmem:[%s826 + $0x8] sm:$0xf]
      %v2289 = vld [vmem:[%s826 + $0xc] sm:$0xff]
      %v2290 = vld [vmem:[%s826 + $0x14] sm:$0xf]
      %2295 = vrot.lane.b32.xlu0 %v2287, 95
      %v2296 = vpop.permute.xlu0 %2295
      %2297 = vrot.lane.b32.xlu0 %v2288, 95
      %v2298 = vpop.permute.xlu0 %2297
      %2299 = vrot.lane.b32.xlu0 %v2289, 95
      %v2300 = vpop.permute.xlu0 %2299
      %2301 = vrot.lane.b32.xlu0 %v2290, 95
      %v2302 = vpop.permute.xlu0 %2301
      %v2303 = vrot.slane %v2296, 4
      %v2304 = vrot.slane %v2298, 4
      %v2305 = vrot.slane %v2300, 4
      %v2306 = vrot.slane %v2302, 4
      %v2307 = vsel %vm489, %v2303, %v2304
      %v2308 = vsel %vm630, %v2296, %v2307
      %v2309 = vsel %vm489, %v2305, %v2306
      %v2310 = vsel %vm630, %v2300, %v2309
      %2313 = vst [vmem:[#allocation3 + $0x1d0] sm:$0xff] %v2308
      %2314 = vst [vmem:[#allocation3 + $0x1f0] sm:$0xff] %v2310
      %v2315 = vld [vmem:[%s826] sm:$0xff]
      %v2316 = vld [vmem:[%s826 + $0x8] sm:$0xf]
      %v2317 = vld [vmem:[%s826 + $0xc] sm:$0xff]
      %v2318 = vld [vmem:[%s826 + $0x14] sm:$0xf]
      %v2319 = vsel %vm641, %v2315, 0
      %v2320 = vsel %vm642, %v2316, 0
      %v2321 = vsel %vm641, %v2317, 0
      %v2322 = vsel %vm642, %v2318, 0
      %2327 = vrot.lane.b32.xlu0 %v2319, 94
      %v2328 = vpop.permute.xlu0 %2327
      %2329 = vrot.lane.b32.xlu0 %v2320, 94
      %v2330 = vpop.permute.xlu0 %2329
      %2331 = vrot.lane.b32.xlu0 %v2321, 94
      %v2332 = vpop.permute.xlu0 %2331
      %2333 = vrot.lane.b32.xlu0 %v2322, 94
      %v2334 = vpop.permute.xlu0 %2333
      %v2335 = vrot.slane %v2328, 4
      %v2336 = vrot.slane %v2330, 4
      %v2337 = vrot.slane %v2332, 4
      %v2338 = vrot.slane %v2334, 4
      %v2339 = vsel %vm489, %v2335, %v2336
      %v2340 = vsel %vm654, %v2328, %v2339
      %v2341 = vsel %vm489, %v2337, %v2338
      %v2342 = vsel %vm654, %v2332, %v2341
      %2345 = vst [vmem:[#allocation3 + $0x210] sm:$0xff] %v2340
      %2346 = vst [vmem:[#allocation3 + $0x230] sm:$0xff] %v2342
      %v2349 = vunpack.c.l.b16 %v1520
      %v2350 = vunpack.c.l.b16 %v1521
      %v2351 = vunpack.c.h.b16 %v1520
      %v2352 = vunpack.c.h.b16 %v1521
      %v2353 = vpack.c.b16 %v2350, %v2349
      %v2354 = vpack.c.b16 %v2352, %v2351
      %2355 = vrot.lane.b32.xlu0 %v2353, 17
      %v2356 = vpop.permute.xlu0 %2355
      %2357 = vrot.lane.b32.xlu0 %v2354, 17
      %v2358 = vpop.permute.xlu0 %2357
      %v2359 = vrot.slane %v2356, 4
      %v2360 = vrot.slane %v2358, 4
      %v2361 = vsel %vm459, %v2359, %v2356
      %v2362 = vsel %vm459, %v2360, %v2358
      %2367 = vst.msk [vmem:[%s978] sm:$0xff] %vm1544, %v2361
      %2368 = vst.msk [vmem:[%s978 + $0x8] sm:$0xf] %vm429, %v2359
      %2369 = vst.msk [vmem:[%s978 + $0xc] sm:$0xff] %vm1544, %v2362
      %2370 = vst.msk [vmem:[%s978 + $0x14] sm:$0xf] %vm429, %v2360
      %v2371 = vld [vmem:[%s978] sm:$0xff]
      %v2372 = vld [vmem:[%s978 + $0xc] sm:$0xff]
      %v2373 = vsel %vm474, %v2371, 0
      %v2374 = vsel %vm474, %v2372, 0
      %2375 = vst [vmem:[#allocation3 + $0x18] sm:$0xff] %v2373
      %2376 = vst [vmem:[#allocation3 + $0x38] sm:$0xff] %v2374
      %v2377 = vld [vmem:[%s978] sm:$0xff]
      %v2378 = vld [vmem:[%s978 + $0x8] sm:$0xf]
      %v2379 = vld [vmem:[%s978 + $0xc] sm:$0xff]
      %v2380 = vld [vmem:[%s978 + $0x14] sm:$0xf]
      %2385 = vrot.lane.b32.xlu0 %v2377, 127
      %v2386 = vpop.permute.xlu0 %2385
      %2387 = vrot.lane.b32.xlu0 %v2378, 127
      %v2388 = vpop.permute.xlu0 %2387
      %2389 = vrot.lane.b32.xlu0 %v2379, 127
      %v2390 = vpop.permute.xlu0 %2389
      %2391 = vrot.lane.b32.xlu0 %v2380, 127
      %v2392 = vpop.permute.xlu0 %2391
      %v2393 = vrot.slane %v2386, 4
      %v2394 = vrot.slane %v2388, 4
      %v2395 = vrot.slane %v2390, 4
      %v2396 = vrot.slane %v2392, 4
      %v2397 = vsel %vm489, %v2393, %v2394
      %v2398 = vsel %vm491, %v2386, %v2397
      %v2399 = vsel %vm489, %v2395, %v2396
      %v2400 = vsel %vm491, %v2390, %v2399
      %2403 = vst [vmem:[#allocation3 + $0x58] sm:$0xff] %v2398
      %2404 = vst [vmem:[#allocation3 + $0x78] sm:$0xff] %v2400
      %v2405 = vld [vmem:[%s978] sm:$0xff]
      %v2406 = vld [vmem:[%s978 + $0x8] sm:$0xf]
      %v2407 = vld [vmem:[%s978 + $0xc] sm:$0xff]
      %v2408 = vld [vmem:[%s978 + $0x14] sm:$0xf]
      %v2409 = vsel %vm508, %v2405, 0
      %v2410 = vsel %vm509, %v2406, 0
      %v2411 = vsel %vm508, %v2407, 0
      %v2412 = vsel %vm509, %v2408, 0
      %2417 = vrot.lane.b32.xlu0 %v2409, 126
      %v2418 = vpop.permute.xlu0 %2417
      %2419 = vrot.lane.b32.xlu0 %v2410, 126
      %v2420 = vpop.permute.xlu0 %2419
      %2421 = vrot.lane.b32.xlu0 %v2411, 126
      %v2422 = vpop.permute.xlu0 %2421
      %2423 = vrot.lane.b32.xlu0 %v2412, 126
      %v2424 = vpop.permute.xlu0 %2423
      %v2425 = vrot.slane %v2418, 4
      %v2426 = vrot.slane %v2420, 4
      %v2427 = vrot.slane %v2422, 4
      %v2428 = vrot.slane %v2424, 4
      %v2429 = vsel %vm489, %v2425, %v2426
      %v2430 = vsel %vm521, %v2418, %v2429
      %v2431 = vsel %vm489, %v2427, %v2428
      %v2432 = vsel %vm521, %v2422, %v2431
      %2435 = vst [vmem:[#allocation3 + $0x98] sm:$0xff] %v2430
      %2436 = vst [vmem:[#allocation3 + $0xb8] sm:$0xff] %v2432
      %v2437 = vld [vmem:[%s978] sm:$0xff]
      %v2438 = vld [vmem:[%s978 + $0x8] sm:$0xf]
      %v2439 = vld [vmem:[%s978 + $0xc] sm:$0xff]
      %v2440 = vld [vmem:[%s978 + $0x14] sm:$0xf]
      %v2441 = vsel %vm533, %v2437, 0
      %v2442 = vsel %vm534, %v2438, 0
      %v2443 = vsel %vm533, %v2439, 0
      %v2444 = vsel %vm534, %v2440, 0
      %2449 = vrot.lane.b32.xlu0 %v2441, 112
      %v2450 = vpop.permute.xlu0 %2449
      %2451 = vrot.lane.b32.xlu0 %v2442, 112
      %v2452 = vpop.permute.xlu0 %2451
      %2453 = vrot.lane.b32.xlu0 %v2443, 112
      %v2454 = vpop.permute.xlu0 %2453
      %2455 = vrot.lane.b32.xlu0 %v2444, 112
      %v2456 = vpop.permute.xlu0 %2455
      %v2457 = vrot.slane %v2450, 4
      %v2458 = vrot.slane %v2452, 4
      %v2459 = vrot.slane %v2454, 4
      %v2460 = vrot.slane %v2456, 4
      %v2461 = vsel %vm489, %v2457, %v2458
      %v2462 = vsel %vm548, %v2450, %v2461
      %v2463 = vsel %vm489, %v2459, %v2460
      %v2464 = vsel %vm548, %v2454, %v2463
      %2467 = vst [vmem:[#allocation3 + $0xd8] sm:$0xff] %v2462
      %2468 = vst [vmem:[#allocation3 + $0xf8] sm:$0xff] %v2464
      %v2469 = vld [vmem:[%s978] sm:$0xff]
      %v2470 = vld [vmem:[%s978 + $0x8] sm:$0xf]
      %v2471 = vld [vmem:[%s978 + $0xc] sm:$0xff]
      %v2472 = vld [vmem:[%s978 + $0x14] sm:$0xf]
      %2477 = vrot.lane.b32.xlu0 %v2469, 111
      %v2478 = vpop.permute.xlu0 %2477
      %2479 = vrot.lane.b32.xlu0 %v2470, 111
      %v2480 = vpop.permute.xlu0 %2479
      %2481 = vrot.lane.b32.xlu0 %v2471, 111
      %v2482 = vpop.permute.xlu0 %2481
      %2483 = vrot.lane.b32.xlu0 %v2472, 111
      %v2484 = vpop.permute.xlu0 %2483
      %v2485 = vrot.slane %v2478, 4
      %v2486 = vrot.slane %v2480, 4
      %v2487 = vrot.slane %v2482, 4
      %v2488 = vrot.slane %v2484, 4
      %v2489 = vsel %vm489, %v2485, %v2486
      %v2490 = vsel %vm563, %v2478, %v2489
      %v2491 = vsel %vm489, %v2487, %v2488
      %v2492 = vsel %vm563, %v2482, %v2491
      %2495 = vst [vmem:[#allocation3 + $0x118] sm:$0xff] %v2490
      %2496 = vst [vmem:[#allocation3 + $0x138] sm:$0xff] %v2492
      %v2497 = vld [vmem:[%s978] sm:$0xff]
      %v2498 = vld [vmem:[%s978 + $0x8] sm:$0xf]
      %v2499 = vld [vmem:[%s978 + $0xc] sm:$0xff]
      %v2500 = vld [vmem:[%s978 + $0x14] sm:$0xf]
      %v2501 = vsel %vm574, %v2497, 0
      %v2502 = vsel %vm575, %v2498, 0
      %v2503 = vsel %vm574, %v2499, 0
      %v2504 = vsel %vm575, %v2500, 0
      %2509 = vrot.lane.b32.xlu0 %v2501, 110
      %v2510 = vpop.permute.xlu0 %2509
      %2511 = vrot.lane.b32.xlu0 %v2502, 110
      %v2512 = vpop.permute.xlu0 %2511
      %2513 = vrot.lane.b32.xlu0 %v2503, 110
      %v2514 = vpop.permute.xlu0 %2513
      %2515 = vrot.lane.b32.xlu0 %v2504, 110
      %v2516 = vpop.permute.xlu0 %2515
      %v2517 = vrot.slane %v2510, 4
      %v2518 = vrot.slane %v2512, 4
      %v2519 = vrot.slane %v2514, 4
      %v2520 = vrot.slane %v2516, 4
      %v2521 = vsel %vm489, %v2517, %v2518
      %v2522 = vsel %vm589, %v2510, %v2521
      %v2523 = vsel %vm489, %v2519, %v2520
      %v2524 = vsel %vm589, %v2514, %v2523
      %2527 = vst [vmem:[#allocation3 + $0x158] sm:$0xff] %v2522
      %2528 = vst [vmem:[#allocation3 + $0x178] sm:$0xff] %v2524
      %v2529 = vld [vmem:[%s978] sm:$0xff]
      %v2530 = vld [vmem:[%s978 + $0x8] sm:$0xf]
      %v2531 = vld [vmem:[%s978 + $0xc] sm:$0xff]
      %v2532 = vld [vmem:[%s978 + $0x14] sm:$0xf]
      %v2533 = vsel %vm600, %v2529, 0
      %v2534 = vsel %vm601, %v2530, 0
      %v2535 = vsel %vm600, %v2531, 0
      %v2536 = vsel %vm601, %v2532, 0
      %2541 = vrot.lane.b32.xlu0 %v2533, 96
      %v2542 = vpop.permute.xlu0 %2541
      %2543 = vrot.lane.b32.xlu0 %v2534, 96
      %v2544 = vpop.permute.xlu0 %2543
      %2545 = vrot.lane.b32.xlu0 %v2535, 96
      %v2546 = vpop.permute.xlu0 %2545
      %2547 = vrot.lane.b32.xlu0 %v2536, 96
      %v2548 = vpop.permute.xlu0 %2547
      %v2549 = vrot.slane %v2542, 4
      %v2550 = vrot.slane %v2544, 4
      %v2551 = vrot.slane %v2546, 4
      %v2552 = vrot.slane %v2548, 4
      %v2553 = vsel %vm489, %v2549, %v2550
      %v2554 = vsel %vm613, %v2542, %v2553
      %v2555 = vsel %vm489, %v2551, %v2552
      %v2556 = vsel %vm613, %v2546, %v2555
      %2559 = vst [vmem:[#allocation3 + $0x198] sm:$0xff] %v2554
      %2560 = vst [vmem:[#allocation3 + $0x1b8] sm:$0xff] %v2556
      %v2561 = vld [vmem:[%s978] sm:$0xff]
      %v2562 = vld [vmem:[%s978 + $0x8] sm:$0xf]
      %v2563 = vld [vmem:[%s978 + $0xc] sm:$0xff]
      %v2564 = vld [vmem:[%s978 + $0x14] sm:$0xf]
      %2569 = vrot.lane.b32.xlu0 %v2561, 95
      %v2570 = vpop.permute.xlu0 %2569
      %2571 = vrot.lane.b32.xlu0 %v2562, 95
      %v2572 = vpop.permute.xlu0 %2571
      %2573 = vrot.lane.b32.xlu0 %v2563, 95
      %v2574 = vpop.permute.xlu0 %2573
      %2575 = vrot.lane.b32.xlu0 %v2564, 95
      %v2576 = vpop.permute.xlu0 %2575
      %v2577 = vrot.slane %v2570, 4
      %v2578 = vrot.slane %v2572, 4
      %v2579 = vrot.slane %v2574, 4
      %v2580 = vrot.slane %v2576, 4
      %v2581 = vsel %vm489, %v2577, %v2578
      %v2582 = vsel %vm630, %v2570, %v2581
      %v2583 = vsel %vm489, %v2579, %v2580
      %v2584 = vsel %vm630, %v2574, %v2583
      %2587 = vst [vmem:[#allocation3 + $0x1d8] sm:$0xff] %v2582
      %2588 = vst [vmem:[#allocation3 + $0x1f8] sm:$0xff] %v2584
      %v2589 = vld [vmem:[%s978] sm:$0xff]
      %v2590 = vld [vmem:[%s978 + $0x8] sm:$0xf]
      %v2591 = vld [vmem:[%s978 + $0xc] sm:$0xff]
      %v2592 = vld [vmem:[%s978 + $0x14] sm:$0xf]
      %v2593 = vsel %vm641, %v2589, 0
      %v2594 = vsel %vm642, %v2590, 0
      %v2595 = vsel %vm641, %v2591, 0
      %v2596 = vsel %vm642, %v2592, 0
      %2601 = vrot.lane.b32.xlu0 %v2593, 94
      %v2602 = vpop.permute.xlu0 %2601
      %2603 = vrot.lane.b32.xlu0 %v2594, 94
      %v2604 = vpop.permute.xlu0 %2603
      %2605 = vrot.lane.b32.xlu0 %v2595, 94
      %v2606 = vpop.permute.xlu0 %2605
      %2607 = vrot.lane.b32.xlu0 %v2596, 94
      %v2608 = vpop.permute.xlu0 %2607
      %v2609 = vrot.slane %v2602, 4
      %v2610 = vrot.slane %v2604, 4
      %v2611 = vrot.slane %v2606, 4
      %v2612 = vrot.slane %v2608, 4
      %v2613 = vsel %vm489, %v2609, %v2610
      %v2614 = vsel %vm654, %v2602, %v2613
      %v2615 = vsel %vm489, %v2611, %v2612
      %v2616 = vsel %vm654, %v2606, %v2615
      %2619 = vst [vmem:[#allocation3 + $0x218] sm:$0xff] %v2614
      %2620 = vst [vmem:[#allocation3 + $0x238] sm:$0xff] %v2616
      %v2621 = vld [vmem:[%s4] sm:$0xff]
      %v2622 = vld [vmem:[%s4 + $0x8] sm:$0xff]
      %v2623 = vld [vmem:[#allocation3] sm:$0xff]
      %v2624 = vld [vmem:[#allocation3 + $0x8] sm:$0xff]
      %v2625 = vld [vmem:[#allocation3 + $0x10] sm:$0xff]
      %v2626 = vld [vmem:[#allocation3 + $0x18] sm:$0xff]
      %v2627 = vld [vmem:[#allocation3 + $0x20] sm:$0xff]
      %v2628 = vld [vmem:[#allocation3 + $0x28] sm:$0xff]
      %v2629 = vld [vmem:[#allocation3 + $0x30] sm:$0xff]
      %v2630 = vld [vmem:[#allocation3 + $0x38] sm:$0xff]
      %v2631 = vld [vmem:[#allocation3 + $0x40] sm:$0xff]
      %v2632 = vld [vmem:[#allocation3 + $0x48] sm:$0xff]
      %v2633 = vld [vmem:[#allocation3 + $0x50] sm:$0xff]
      %v2634 = vld [vmem:[#allocation3 + $0x58] sm:$0xff]
      %v2635 = vld [vmem:[#allocation3 + $0x60] sm:$0xff]
      %v2636 = vld [vmem:[#allocation3 + $0x68] sm:$0xff]
      %v2637 = vld [vmem:[#allocation3 + $0x70] sm:$0xff]
      %v2638 = vld [vmem:[#allocation3 + $0x78] sm:$0xff]
      %v2639 = vld [vmem:[#allocation3 + $0x80] sm:$0xff]
      %v2640 = vld [vmem:[#allocation3 + $0x88] sm:$0xff]
      %v2641 = vld [vmem:[#allocation3 + $0x90] sm:$0xff]
      %v2642 = vld [vmem:[#allocation3 + $0x98] sm:$0xff]
      %v2643 = vld [vmem:[#allocation3 + $0xa0] sm:$0xff]
      %v2644 = vld [vmem:[#allocation3 + $0xa8] sm:$0xff]
      %v2645 = vld [vmem:[#allocation3 + $0xb0] sm:$0xff]
      %v2646 = vld [vmem:[#allocation3 + $0xb8] sm:$0xff]
      %v2647 = vld [vmem:[#allocation3 + $0xc0] sm:$0xff]
      %v2648 = vld [vmem:[#allocation3 + $0xc8] sm:$0xff]
      %v2649 = vld [vmem:[#allocation3 + $0xd0] sm:$0xff]
      %v2650 = vld [vmem:[#allocation3 + $0xd8] sm:$0xff]
      %v2651 = vld [vmem:[#allocation3 + $0xe0] sm:$0xff]
      %v2652 = vld [vmem:[#allocation3 + $0xe8] sm:$0xff]
      %v2653 = vld [vmem:[#allocation3 + $0xf0] sm:$0xff]
      %v2654 = vld [vmem:[#allocation3 + $0xf8] sm:$0xff]
      %v2655 = vld [vmem:[#allocation3 + $0x100] sm:$0xff]
      %v2656 = vld [vmem:[#allocation3 + $0x108] sm:$0xff]
      %v2657 = vld [vmem:[#allocation3 + $0x110] sm:$0xff]
      %v2658 = vld [vmem:[#allocation3 + $0x118] sm:$0xff]
      %v2659 = vld [vmem:[#allocation3 + $0x120] sm:$0xff]
      %v2660 = vld [vmem:[#allocation3 + $0x128] sm:$0xff]
      %v2661 = vld [vmem:[#allocation3 + $0x130] sm:$0xff]
      %v2662 = vld [vmem:[#allocation3 + $0x138] sm:$0xff]
      %v2663 = vld [vmem:[#allocation3 + $0x140] sm:$0xff]
      %v2664 = vld [vmem:[#allocation3 + $0x148] sm:$0xff]
      %v2665 = vld [vmem:[#allocation3 + $0x150] sm:$0xff]
      %v2666 = vld [vmem:[#allocation3 + $0x158] sm:$0xff]
      %v2667 = vld [vmem:[#allocation3 + $0x160] sm:$0xff]
      %v2668 = vld [vmem:[#allocation3 + $0x168] sm:$0xff]
      %v2669 = vld [vmem:[#allocation3 + $0x170] sm:$0xff]
      %v2670 = vld [vmem:[#allocation3 + $0x178] sm:$0xff]
      %v2671 = vld [vmem:[#allocation3 + $0x180] sm:$0xff]
      %v2672 = vld [vmem:[#allocation3 + $0x188] sm:$0xff]
      %v2673 = vld [vmem:[#allocation3 + $0x190] sm:$0xff]
      %v2674 = vld [vmem:[#allocation3 + $0x198] sm:$0xff]
      %v2675 = vld [vmem:[#allocation3 + $0x1a0] sm:$0xff]
      %v2676 = vld [vmem:[#allocation3 + $0x1a8] sm:$0xff]
      %v2677 = vld [vmem:[#allocation3 + $0x1b0] sm:$0xff]
      %v2678 = vld [vmem:[#allocation3 + $0x1b8] sm:$0xff]
      %v2679 = vld [vmem:[#allocation3 + $0x1c0] sm:$0xff]
      %v2680 = vld [vmem:[#allocation3 + $0x1c8] sm:$0xff]
      %v2681 = vld [vmem:[#allocation3 + $0x1d0] sm:$0xff]
      %v2682 = vld [vmem:[#allocation3 + $0x1d8] sm:$0xff]
      %v2683 = vld [vmem:[#allocation3 + $0x1e0] sm:$0xff]
      %v2684 = vld [vmem:[#allocation3 + $0x1e8] sm:$0xff]
      %v2685 = vld [vmem:[#allocation3 + $0x1f0] sm:$0xff]
      %v2686 = vld [vmem:[#allocation3 + $0x1f8] sm:$0xff]
      %v2687 = vld [vmem:[#allocation3 + $0x200] sm:$0xff]
      %v2688 = vld [vmem:[#allocation3 + $0x208] sm:$0xff]
      %v2689 = vld [vmem:[#allocation3 + $0x210] sm:$0xff]
      %v2690 = vld [vmem:[#allocation3 + $0x218] sm:$0xff]
      %v2691 = vld [vmem:[#allocation3 + $0x220] sm:$0xff]
      %v2692 = vld [vmem:[#allocation3 + $0x228] sm:$0xff]
      %v2693 = vld [vmem:[#allocation3 + $0x230] sm:$0xff]
      %v2694 = vld [vmem:[#allocation3 + $0x238] sm:$0xff]
      %v2697 = vunpack.c.l.b16 %v2621
      %v2698 = vunpack.c.h.b16 %v2621
      %v2699 = vunpack.c.l.b16 %v2622
      %v2700 = vunpack.c.h.b16 %v2622
      %v2701 = vpack.c.b16 %v2699, %v2697
      %v2702 = vpack.c.b16 %v2700, %v2698
      %v2776 = vunpack.c.l.b16 %v2623
      %v2777 = vunpack.c.h.b16 %v2623
      %v2778 = vunpack.c.l.b16 %v2624
      %v2779 = vunpack.c.h.b16 %v2624
      %v2780 = vunpack.c.l.b16 %v2625
      %v2781 = vunpack.c.h.b16 %v2625
      %v2782 = vunpack.c.l.b16 %v2626
      %v2783 = vunpack.c.h.b16 %v2626
      %v2784 = vunpack.c.l.b16 %v2627
      %v2785 = vunpack.c.h.b16 %v2627
      %v2786 = vunpack.c.l.b16 %v2628
      %v2787 = vunpack.c.h.b16 %v2628
      %v2788 = vunpack.c.l.b16 %v2629
      %v2789 = vunpack.c.h.b16 %v2629
      %v2790 = vunpack.c.l.b16 %v2630
      %v2791 = vunpack.c.h.b16 %v2630
      %v2792 = vunpack.c.l.b16 %v2631
      %v2793 = vunpack.c.h.b16 %v2631
      %v2794 = vunpack.c.l.b16 %v2632
      %v2795 = vunpack.c.h.b16 %v2632
      %v2796 = vunpack.c.l.b16 %v2633
      %v2797 = vunpack.c.h.b16 %v2633
      %v2798 = vunpack.c.l.b16 %v2634
      %v2799 = vunpack.c.h.b16 %v2634
      %v2800 = vunpack.c.l.b16 %v2635
      %v2801 = vunpack.c.h.b16 %v2635
      %v2802 = vunpack.c.l.b16 %v2636
      %v2803 = vunpack.c.h.b16 %v2636
      %v2804 = vunpack.c.l.b16 %v2637
      %v2805 = vunpack.c.h.b16 %v2637
      %v2806 = vunpack.c.l.b16 %v2638
      %v2807 = vunpack.c.h.b16 %v2638
      %v2808 = vunpack.c.l.b16 %v2639
      %v2809 = vunpack.c.h.b16 %v2639
      %v2810 = vunpack.c.l.b16 %v2640
      %v2811 = vunpack.c.h.b16 %v2640
      %v2812 = vunpack.c.l.b16 %v2641
      %v2813 = vunpack.c.h.b16 %v2641
      %v2814 = vunpack.c.l.b16 %v2642
      %v2815 = vunpack.c.h.b16 %v2642
      %v2816 = vunpack.c.l.b16 %v2643
      %v2817 = vunpack.c.h.b16 %v2643
      %v2818 = vunpack.c.l.b16 %v2644
      %v2819 = vunpack.c.h.b16 %v2644
      %v2820 = vunpack.c.l.b16 %v2645
      %v2821 = vunpack.c.h.b16 %v2645
      %v2822 = vunpack.c.l.b16 %v2646
      %v2823 = vunpack.c.h.b16 %v2646
      %v2824 = vunpack.c.l.b16 %v2647
      %v2825 = vunpack.c.h.b16 %v2647
      %v2826 = vunpack.c.l.b16 %v2648
      %v2827 = vunpack.c.h.b16 %v2648
      %v2828 = vunpack.c.l.b16 %v2649
      %v2829 = vunpack.c.h.b16 %v2649
      %v2830 = vunpack.c.l.b16 %v2650
      %v2831 = vunpack.c.h.b16 %v2650
      %v2832 = vunpack.c.l.b16 %v2651
      %v2833 = vunpack.c.h.b16 %v2651
      %v2834 = vunpack.c.l.b16 %v2652
      %v2835 = vunpack.c.h.b16 %v2652
      %v2836 = vunpack.c.l.b16 %v2653
      %v2837 = vunpack.c.h.b16 %v2653
      %v2838 = vunpack.c.l.b16 %v2654
      %v2839 = vunpack.c.h.b16 %v2654
      %v2840 = vunpack.c.l.b16 %v2655
      %v2841 = vunpack.c.h.b16 %v2655
      %v2842 = vunpack.c.l.b16 %v2656
      %v2843 = vunpack.c.h.b16 %v2656
      %v2844 = vunpack.c.l.b16 %v2657
      %v2845 = vunpack.c.h.b16 %v2657
      %v2846 = vunpack.c.l.b16 %v2658
      %v2847 = vunpack.c.h.b16 %v2658
      %v2848 = vunpack.c.l.b16 %v2659
      %v2849 = vunpack.c.h.b16 %v2659
      %v2850 = vunpack.c.l.b16 %v2660
      %v2851 = vunpack.c.h.b16 %v2660
      %v2852 = vunpack.c.l.b16 %v2661
      %v2853 = vunpack.c.h.b16 %v2661
      %v2854 = vunpack.c.l.b16 %v2662
      %v2855 = vunpack.c.h.b16 %v2662
      %v2856 = vunpack.c.l.b16 %v2663
      %v2857 = vunpack.c.h.b16 %v2663
      %v2858 = vunpack.c.l.b16 %v2664
      %v2859 = vunpack.c.h.b16 %v2664
      %v2860 = vunpack.c.l.b16 %v2665
      %v2861 = vunpack.c.h.b16 %v2665
      %v2862 = vunpack.c.l.b16 %v2666
      %v2863 = vunpack.c.h.b16 %v2666
      %v2864 = vunpack.c.l.b16 %v2667
      %v2865 = vunpack.c.h.b16 %v2667
      %v2866 = vunpack.c.l.b16 %v2668
      %v2867 = vunpack.c.h.b16 %v2668
      %v2868 = vunpack.c.l.b16 %v2669
      %v2869 = vunpack.c.h.b16 %v2669
      %v2870 = vunpack.c.l.b16 %v2670
      %v2871 = vunpack.c.h.b16 %v2670
      %v2872 = vunpack.c.l.b16 %v2671
      %v2873 = vunpack.c.h.b16 %v2671
      %v2874 = vunpack.c.l.b16 %v2672
      %v2875 = vunpack.c.h.b16 %v2672
      %v2876 = vunpack.c.l.b16 %v2673
      %v2877 = vunpack.c.h.b16 %v2673
      %v2878 = vunpack.c.l.b16 %v2674
      %v2879 = vunpack.c.h.b16 %v2674
      %v2880 = vunpack.c.l.b16 %v2675
      %v2881 = vunpack.c.h.b16 %v2675
      %v2882 = vunpack.c.l.b16 %v2676
      %v2883 = vunpack.c.h.b16 %v2676
      %v2884 = vunpack.c.l.b16 %v2677
      %v2885 = vunpack.c.h.b16 %v2677
      %v2886 = vunpack.c.l.b16 %v2678
      %v2887 = vunpack.c.h.b16 %v2678
      %v2888 = vunpack.c.l.b16 %v2679
      %v2889 = vunpack.c.h.b16 %v2679
      %v2890 = vunpack.c.l.b16 %v2680
      %v2891 = vunpack.c.h.b16 %v2680
      %v2892 = vunpack.c.l.b16 %v2681
      %v2893 = vunpack.c.h.b16 %v2681
      %v2894 = vunpack.c.l.b16 %v2682
      %v2895 = vunpack.c.h.b16 %v2682
      %v2896 = vunpack.c.l.b16 %v2683
      %v2897 = vunpack.c.h.b16 %v2683
      %v2898 = vunpack.c.l.b16 %v2684
      %v2899 = vunpack.c.h.b16 %v2684
      %v2900 = vunpack.c.l.b16 %v2685
      %v2901 = vunpack.c.h.b16 %v2685
      %v2902 = vunpack.c.l.b16 %v2686
      %v2903 = vunpack.c.h.b16 %v2686
      %v2904 = vunpack.c.l.b16 %v2687
      %v2905 = vunpack.c.h.b16 %v2687
      %v2906 = vunpack.c.l.b16 %v2688
      %v2907 = vunpack.c.h.b16 %v2688
      %v2908 = vunpack.c.l.b16 %v2689
      %v2909 = vunpack.c.h.b16 %v2689
      %v2910 = vunpack.c.l.b16 %v2690
      %v2911 = vunpack.c.h.b16 %v2690
      %v2912 = vunpack.c.l.b16 %v2691
      %v2913 = vunpack.c.h.b16 %v2691
      %v2914 = vunpack.c.l.b16 %v2692
      %v2915 = vunpack.c.h.b16 %v2692
      %v2916 = vunpack.c.l.b16 %v2693
      %v2917 = vunpack.c.h.b16 %v2693
      %v2918 = vunpack.c.l.b16 %v2694
      %v2919 = vunpack.c.h.b16 %v2694
      %v2920 = vpack.c.b16 %v2784, %v2776
      %v2921 = vpack.c.b16 %v2785, %v2777
      %v2922 = vpack.c.b16 %v2786, %v2778
      %v2923 = vpack.c.b16 %v2787, %v2779
      %v2924 = vpack.c.b16 %v2788, %v2780
      %v2925 = vpack.c.b16 %v2789, %v2781
      %v2926 = vpack.c.b16 %v2790, %v2782
      %v2927 = vpack.c.b16 %v2791, %v2783
      %v2928 = vpack.c.b16 %v2800, %v2792
      %v2929 = vpack.c.b16 %v2801, %v2793
      %v2930 = vpack.c.b16 %v2802, %v2794
      %v2931 = vpack.c.b16 %v2803, %v2795
      %v2932 = vpack.c.b16 %v2804, %v2796
      %v2933 = vpack.c.b16 %v2805, %v2797
      %v2934 = vpack.c.b16 %v2806, %v2798
      %v2935 = vpack.c.b16 %v2807, %v2799
      %v2936 = vpack.c.b16 %v2816, %v2808
      %v2937 = vpack.c.b16 %v2817, %v2809
      %v2938 = vpack.c.b16 %v2818, %v2810
      %v2939 = vpack.c.b16 %v2819, %v2811
      %v2940 = vpack.c.b16 %v2820, %v2812
      %v2941 = vpack.c.b16 %v2821, %v2813
      %v2942 = vpack.c.b16 %v2822, %v2814
      %v2943 = vpack.c.b16 %v2823, %v2815
      %v2944 = vpack.c.b16 %v2832, %v2824
      %v2945 = vpack.c.b16 %v2833, %v2825
      %v2946 = vpack.c.b16 %v2834, %v2826
      %v2947 = vpack.c.b16 %v2835, %v2827
      %v2948 = vpack.c.b16 %v2836, %v2828
      %v2949 = vpack.c.b16 %v2837, %v2829
      %v2950 = vpack.c.b16 %v2838, %v2830
      %v2951 = vpack.c.b16 %v2839, %v2831
      %v2952 = vpack.c.b16 %v2848, %v2840
      %v2953 = vpack.c.b16 %v2849, %v2841
      %v2954 = vpack.c.b16 %v2850, %v2842
      %v2955 = vpack.c.b16 %v2851, %v2843
      %v2956 = vpack.c.b16 %v2852, %v2844
      %v2957 = vpack.c.b16 %v2853, %v2845
      %v2958 = vpack.c.b16 %v2854, %v2846
      %v2959 = vpack.c.b16 %v2855, %v2847
      %v2960 = vpack.c.b16 %v2864, %v2856
      %v2961 = vpack.c.b16 %v2865, %v2857
      %v2962 = vpack.c.b16 %v2866, %v2858
      %v2963 = vpack.c.b16 %v2867, %v2859
      %v2964 = vpack.c.b16 %v2868, %v2860
      %v2965 = vpack.c.b16 %v2869, %v2861
      %v2966 = vpack.c.b16 %v2870, %v2862
      %v2967 = vpack.c.b16 %v2871, %v2863
      %v2968 = vpack.c.b16 %v2880, %v2872
      %v2969 = vpack.c.b16 %v2881, %v2873
      %v2970 = vpack.c.b16 %v2882, %v2874
      %v2971 = vpack.c.b16 %v2883, %v2875
      %v2972 = vpack.c.b16 %v2884, %v2876
      %v2973 = vpack.c.b16 %v2885, %v2877
      %v2974 = vpack.c.b16 %v2886, %v2878
      %v2975 = vpack.c.b16 %v2887, %v2879
      %v2976 = vpack.c.b16 %v2896, %v2888
      %v2977 = vpack.c.b16 %v2897, %v2889
      %v2978 = vpack.c.b16 %v2898, %v2890
      %v2979 = vpack.c.b16 %v2899, %v2891
      %v2980 = vpack.c.b16 %v2900, %v2892
      %v2981 = vpack.c.b16 %v2901, %v2893
      %v2982 = vpack.c.b16 %v2902, %v2894
      %v2983 = vpack.c.b16 %v2903, %v2895
      %v2984 = vpack.c.b16 %v2912, %v2904
      %v2985 = vpack.c.b16 %v2913, %v2905
      %v2986 = vpack.c.b16 %v2914, %v2906
      %v2987 = vpack.c.b16 %v2915, %v2907
      %v2988 = vpack.c.b16 %v2916, %v2908
      %v2989 = vpack.c.b16 %v2917, %v2909
      %v2990 = vpack.c.b16 %v2918, %v2910
      %v2991 = vpack.c.b16 %v2919, %v2911
      %vm3064 = vcmask 130048
      %v3066 = vsel %vm3064, %v2702, 0
      %3068 = vmatprep.subr.bf16.mxu0 %v2977
      %3069 = vmatpush1.bf16.msra.mxu0 %v2976
      %3070 = vmatprep.subr.bf16.mxu0 %v2969
      %3071 = vmatpush1.bf16.msra.mxu0 %v2968
      %3072 = vmatprep.subr.bf16.mxu0 %v2961
      %3073 = vmatpush1.bf16.msra.mxu0 %v2960
      %3074 = vmatprep.subr.bf16.mxu0 %v2953
      %3075 = vmatpush1.bf16.msra.mxu0 %v2952
      %3076 = vmatprep.subr.bf16.mxu0 %v2945
      %3077 = vmatpush1.bf16.msra.mxu0 %v2944
      %3078 = vmatprep.subr.bf16.mxu0 %v2937
      %3079 = vmatpush1.bf16.msra.mxu0 %v2936
      %3080 = vmatprep.subr.bf16.mxu0 %v2929
      %3081 = vmatpush1.bf16.msra.mxu0 %v2928
      %3082 = vmatprep.subr.bf16.mxu0 %v2921
      %3083 = vmatpush1.bf16.msra.mxu0 %v2920
      %3084 = vmatprep.subr.bf16.mxu0 0
      %3085 = vmatpush2.bf16.msra.mxu0 0
      %3086 = vmatprep.subr.bf16.mxu0 0
      %3087 = vmatpush2.bf16.msra.mxu0 0
      %3088 = vmatprep.subr.bf16.mxu0 0
      %3089 = vmatpush2.bf16.msra.mxu0 0
      %3090 = vmatprep.subr.bf16.mxu0 0
      %3091 = vmatpush2.bf16.msra.mxu0 0
      %3092 = vmatprep.subr.bf16.mxu0 0
      %3093 = vmatpush2.bf16.msra.mxu0 0
      %3094 = vmatprep.subr.bf16.mxu0 0
      %3095 = vmatpush2.bf16.msra.mxu0 0
      %3096 = vmatprep.subr.bf16.mxu0 0
      %3097 = vmatpush2.bf16.msra.mxu0 0
      %3098 = vmatprep.subr.bf16.mxu0 %v2985
      %3099 = vmatpush2.bf16.msra.mxu0 %v2984
      %3100 = vmatprep.mubr.bf16.mxu0 %v3066
      %3101 = vmatmul.mubr.bf16.gmra.mxu0 %v2701
      %v3102 = vpop.f32.mrf.mxu0
      %v3103 = vadd.f32 0.0, %v3102
      %v3104 = vpop.f32.mrf.mxu0
      %v3105 = vadd.f32 0.0, %v3104
      %v3106 = vpop.f32.mrf.mxu0
      %v3107 = vadd.f32 0.0, %v3106
      %v3108 = vpop.f32.mrf.mxu0
      %v3109 = vadd.f32 0.0, %v3108
      %3110 = vdwg.mxu0
      %3111 = vmatprep.subr.bf16.mxu0 %v2979
      %3112 = vmatpush1.bf16.msra.mxu0 %v2978
      %3113 = vmatprep.subr.bf16.mxu0 %v2971
      %3114 = vmatpush1.bf16.msra.mxu0 %v2970
      %3115 = vmatprep.subr.bf16.mxu0 %v2963
      %3116 = vmatpush1.bf16.msra.mxu0 %v2962
      %3117 = vmatprep.subr.bf16.mxu0 %v2955
      %3118 = vmatpush1.bf16.msra.mxu0 %v2954
      %3119 = vmatprep.subr.bf16.mxu0 %v2947
      %3120 = vmatpush1.bf16.msra.mxu0 %v2946
      %3121 = vmatprep.subr.bf16.mxu0 %v2939
      %3122 = vmatpush1.bf16.msra.mxu0 %v2938
      %3123 = vmatprep.subr.bf16.mxu0 %v2931
      %3124 = vmatpush1.bf16.msra.mxu0 %v2930
      %3125 = vmatprep.subr.bf16.mxu0 %v2923
      %3126 = vmatpush1.bf16.msra.mxu0 %v2922
      %3127 = vmatprep.subr.bf16.mxu0 0
      %3128 = vmatpush2.bf16.msra.mxu0 0
      %3129 = vmatprep.subr.bf16.mxu0 0
      %3130 = vmatpush2.bf16.msra.mxu0 0
      %3131 = vmatprep.subr.bf16.mxu0 0
      %3132 = vmatpush2.bf16.msra.mxu0 0
      %3133 = vmatprep.subr.bf16.mxu0 0
      %3134 = vmatpush2.bf16.msra.mxu0 0
      %3135 = vmatprep.subr.bf16.mxu0 0
      %3136 = vmatpush2.bf16.msra.mxu0 0
      %3137 = vmatprep.subr.bf16.mxu0 0
      %3138 = vmatpush2.bf16.msra.mxu0 0
      %3139 = vmatprep.subr.bf16.mxu0 0
      %3140 = vmatpush2.bf16.msra.mxu0 0
      %3141 = vmatprep.subr.bf16.mxu0 %v2987
      %3142 = vmatpush2.bf16.msra.mxu0 %v2986
      %3143 = vmatprep.mubr.bf16.mxu0 %v3066
      %3144 = vmatmul.mubr.bf16.gmra.mxu0 %v2701
      %v3145 = vpop.f32.mrf.mxu0
      %v3146 = vadd.f32 0.0, %v3145
      %v3147 = vpop.f32.mrf.mxu0
      %v3148 = vadd.f32 0.0, %v3147
      %v3149 = vpop.f32.mrf.mxu0
      %v3150 = vadd.f32 0.0, %v3149
      %v3151 = vpop.f32.mrf.mxu0
      %v3152 = vadd.f32 0.0, %v3151
      %3153 = vdwg.mxu0
      %3154 = vmatprep.subr.bf16.mxu0 %v2981
      %3155 = vmatpush1.bf16.msra.mxu0 %v2980
      %3156 = vmatprep.subr.bf16.mxu0 %v2973
      %3157 = vmatpush1.bf16.msra.mxu0 %v2972
      %3158 = vmatprep.subr.bf16.mxu0 %v2965
      %3159 = vmatpush1.bf16.msra.mxu0 %v2964
      %3160 = vmatprep.subr.bf16.mxu0 %v2957
      %3161 = vmatpush1.bf16.msra.mxu0 %v2956
      %3162 = vmatprep.subr.bf16.mxu0 %v2949
      %3163 = vmatpush1.bf16.msra.mxu0 %v2948
      %3164 = vmatprep.subr.bf16.mxu0 %v2941
      %3165 = vmatpush1.bf16.msra.mxu0 %v2940
      %3166 = vmatprep.subr.bf16.mxu0 %v2933
      %3167 = vmatpush1.bf16.msra.mxu0 %v2932
      %3168 = vmatprep.subr.bf16.mxu0 %v2925
      %3169 = vmatpush1.bf16.msra.mxu0 %v2924
      %3170 = vmatprep.subr.bf16.mxu0 0
      %3171 = vmatpush2.bf16.msra.mxu0 0
      %3172 = vmatprep.subr.bf16.mxu0 0
      %3173 = vmatpush2.bf16.msra.mxu0 0
      %3174 = vmatprep.subr.bf16.mxu0 0
      %3175 = vmatpush2.bf16.msra.mxu0 0
      %3176 = vmatprep.subr.bf16.mxu0 0
      %3177 = vmatpush2.bf16.msra.mxu0 0
      %3178 = vmatprep.subr.bf16.mxu0 0
      %3179 = vmatpush2.bf16.msra.mxu0 0
      %3180 = vmatprep.subr.bf16.mxu0 0
      %3181 = vmatpush2.bf16.msra.mxu0 0
      %3182 = vmatprep.subr.bf16.mxu0 0
      %3183 = vmatpush2.bf16.msra.mxu0 0
      %3184 = vmatprep.subr.bf16.mxu0 %v2989
      %3185 = vmatpush2.bf16.msra.mxu0 %v2988
      %3186 = vmatprep.mubr.bf16.mxu0 %v3066
      %3187 = vmatmul.mubr.bf16.gmra.mxu0 %v2701
      %v3188 = vpop.f32.mrf.mxu0
      %v3189 = vadd.f32 0.0, %v3188
      %v3190 = vpop.f32.mrf.mxu0
      %v3191 = vadd.f32 0.0, %v3190
      %v3192 = vpop.f32.mrf.mxu0
      %v3193 = vadd.f32 0.0, %v3192
      %v3194 = vpop.f32.mrf.mxu0
      %v3195 = vadd.f32 0.0, %v3194
      %3196 = vdwg.mxu0
      %3197 = vmatprep.subr.bf16.mxu0 %v2983
      %3198 = vmatpush1.bf16.msra.mxu0 %v2982
      %3199 = vmatprep.subr.bf16.mxu0 %v2975
      %3200 = vmatpush1.bf16.msra.mxu0 %v2974
      %3201 = vmatprep.subr.bf16.mxu0 %v2967
      %3202 = vmatpush1.bf16.msra.mxu0 %v2966
      %3203 = vmatprep.subr.bf16.mxu0 %v2959
      %3204 = vmatpush1.bf16.msra.mxu0 %v2958
      %3205 = vmatprep.subr.bf16.mxu0 %v2951
      %3206 = vmatpush1.bf16.msra.mxu0 %v2950
      %3207 = vmatprep.subr.bf16.mxu0 %v2943
      %3208 = vmatpush1.bf16.msra.mxu0 %v2942
      %3209 = vmatprep.subr.bf16.mxu0 %v2935
      %3210 = vmatpush1.bf16.msra.mxu0 %v2934
      %3211 = vmatprep.subr.bf16.mxu0 %v2927
      %3212 = vmatpush1.bf16.msra.mxu0 %v2926
      %3213 = vmatprep.subr.bf16.mxu0 0
      %3214 = vmatpush2.bf16.msra.mxu0 0
      %3215 = vmatprep.subr.bf16.mxu0 0
      %3216 = vmatpush2.bf16.msra.mxu0 0
      %3217 = vmatprep.subr.bf16.mxu0 0
      %3218 = vmatpush2.bf16.msra.mxu0 0
      %3219 = vmatprep.subr.bf16.mxu0 0
      %3220 = vmatpush2.bf16.msra.mxu0 0
      %3221 = vmatprep.subr.bf16.mxu0 0
      %3222 = vmatpush2.bf16.msra.mxu0 0
      %3223 = vmatprep.subr.bf16.mxu0 0
      %3224 = vmatpush2.bf16.msra.mxu0 0
      %3225 = vmatprep.subr.bf16.mxu0 0
      %3226 = vmatpush2.bf16.msra.mxu0 0
      %3227 = vmatprep.subr.bf16.mxu0 %v2991
      %3228 = vmatpush2.bf16.msra.mxu0 %v2990
      %3229 = vmatprep.mubr.bf16.mxu0 %v3066
      %3230 = vmatmul.mubr.bf16.gmra.mxu0 %v2701
      %v3231 = vpop.f32.mrf.mxu0
      %v3232 = vadd.f32 0.0, %v3231
      %v3233 = vpop.f32.mrf.mxu0
      %v3234 = vadd.f32 0.0, %v3233
      %v3235 = vpop.f32.mrf.mxu0
      %v3236 = vadd.f32 0.0, %v3235
      %v3237 = vpop.f32.mrf.mxu0
      %v3238 = vadd.f32 0.0, %v3237
      %3239 = vdwg.mxu0
      %v3240 = vld [vmem:[%s5] sm:$0xff]
      %v3241 = vld [vmem:[%s5 + $0x8] sm:$0xff]
      %3243 = vset.pattern.permute.xlu0 0
      %3244 = vperm.xlu0 %3243, %v3240
      %v3245 = vpop.permute.xlu0 %3244
      %3248 = vset.pattern.permute.xlu0 0
      %3249 = vperm.xlu0 %3248, %v3241
      %v3250 = vpop.permute.xlu0 %3249
      %v3252 = vmul.f32 %v3103, %v3245
      %v3253 = vmul.f32 %v3105, %v3245
      %v3254 = vmul.f32 %v3146, %v3245
      %v3255 = vmul.f32 %v3148, %v3245
      %v3256 = vmul.f32 %v3189, %v3245
      %v3257 = vmul.f32 %v3191, %v3245
      %v3258 = vmul.f32 %v3232, %v3245
      %v3259 = vmul.f32 %v3234, %v3245
      %v3260 = vmul.f32 %v3107, %v3250
      %v3261 = vmul.f32 %v3109, %v3250
      %v3262 = vmul.f32 %v3150, %v3250
      %v3263 = vmul.f32 %v3152, %v3250
      %v3264 = vmul.f32 %v3193, %v3250
      %v3265 = vmul.f32 %v3195, %v3250
      %v3266 = vmul.f32 %v3236, %v3250
      %v3267 = vmul.f32 %v3238, %v3250
      %v3268 = vld [vmem:[%s6] sm:$0xff]
      %v3269 = vld [vmem:[%s6 + $0x8] sm:$0xff]
      %3271 = vset.pattern.permute.xlu0 0
      %3272 = vperm.xlu0 %3271, %v3268
      %v3273 = vpop.permute.xlu0 %3272
      %3276 = vset.pattern.permute.xlu0 0
      %3277 = vperm.xlu0 %3276, %v3269
      %v3278 = vpop.permute.xlu0 %3277
      %v3280 = vadd.f32 %v3252, %v3273
      %v3281 = vadd.f32 %v3253, %v3273
      %v3282 = vadd.f32 %v3254, %v3273
      %v3283 = vadd.f32 %v3255, %v3273
      %v3284 = vadd.f32 %v3256, %v3273
      %v3285 = vadd.f32 %v3257, %v3273
      %v3286 = vadd.f32 %v3258, %v3273
      %v3287 = vadd.f32 %v3259, %v3273
      %v3288 = vadd.f32 %v3260, %v3278
      %v3289 = vadd.f32 %v3261, %v3278
      %v3290 = vadd.f32 %v3262, %v3278
      %v3291 = vadd.f32 %v3263, %v3278
      %v3292 = vadd.f32 %v3264, %v3278
      %v3293 = vadd.f32 %v3265, %v3278
      %v3294 = vadd.f32 %v3266, %v3278
      %v3295 = vadd.f32 %v3267, %v3278
      %v3296 = vmax.f32 %v3280, 0.0
      %v3297 = vmax.f32 %v3281, 0.0
      %v3298 = vmax.f32 %v3282, 0.0
      %v3299 = vmax.f32 %v3283, 0.0
      %v3300 = vmax.f32 %v3284, 0.0
      %v3301 = vmax.f32 %v3285, 0.0
      %v3302 = vmax.f32 %v3286, 0.0
      %v3303 = vmax.f32 %v3287, 0.0
      %v3304 = vmax.f32 %v3288, 0.0
      %v3305 = vmax.f32 %v3289, 0.0
      %v3306 = vmax.f32 %v3290, 0.0
      %v3307 = vmax.f32 %v3291, 0.0
      %v3308 = vmax.f32 %v3292, 0.0
      %v3309 = vmax.f32 %v3293, 0.0
      %v3310 = vmax.f32 %v3294, 0.0
      %v3311 = vmax.f32 %v3295, 0.0
      %v3312 = vadd.f32 %v3296, %v3297
      %3313 = vadd.xlane.f32.xlu0 %v3312
      %v3314 = vpop.xlane.xlu0 %3313
      %v3315 = vadd.f32 %v3304, %v3305
      %3316 = vadd.xlane.f32.xlu0 %v3315
      %v3317 = vpop.xlane.xlu0 %3316
      %v3318 = vrcp.pop 256.0
      %v3319 = vmul.f32 %v3314, %v3318
      %v3320 = vmul.f32 %v3317, %v3318
      %v3321 = vld [vmem:[%s7] sm:$0xff]
      %v3322 = vld [vmem:[%s7 + $0x8] sm:$0xff]
      %v3323 = vmul.f32 %v3321, %v3319
      %v3324 = vmul.f32 %v3322, %v3320
      %vm3325 = vcmask 15360
      %v3326 = vsel %vm3325, %v3323, 0.0
      %v3327 = vsel %vm3325, %v3324, 0.0
      %v3328 = vadd.f32 %v3326, %v3327
      %v3329 = vrot.slane %v3328, 4
      %v3330 = vadd.f32 %v3328, %v3329
      %v3331 = vrot.slane %v3330, 2
      %v3332 = vadd.f32 %v3330, %v3331
      %v3333 = vrot.slane %v3332, 1
      %v3334 = vadd.f32 %v3332, %v3333
      %v3335 = vld [vmem:[%s8] sm:$0x1]
      %v3336 = vadd.f32 %v3334, %v3335
      %v3337 = vmax.f32 %v3336, 0.0
      %v3338 = vld [vmem:[%s9] sm:$0xff]
      %v3339 = vld [vmem:[%s9 + $0x8] sm:$0xff]
      %v3340 = vlaneseq
      %v3341 = vshrl.u32 %v3340, 7
      %v3342 = vsub.s32 0, %v3341
      %v3343 = vrot.slane %v3337, %v3342
      %v3344 = vmul.f32 %v3338, %v3343
      %v3345 = vmul.f32 %v3339, %v3343
      %v3346 = vsel %vm3325, %v3344, 0.0
      %3347 = vadd.xlane.f32.xlu0 %v3346
      %v3348 = vpop.xlane.xlu0 %3347
      %v3349 = vsel %vm3325, %v3345, 0.0
      %3350 = vadd.xlane.f32.xlu0 %v3349
      %v3351 = vpop.xlane.xlu0 %3350
      %v3352 = vld [vmem:[%s10] sm:$0xff]
      %v3353 = vld [vmem:[%s10 + $0x8] sm:$0xff]
      %v3354 = vadd.f32 %v3348, %v3352
      %v3355 = vadd.f32 %v3351, %v3353
      %v3356 = vxor.u32 %v3354, 2147483648
      %v3357 = vxor.u32 %v3355, 2147483648
      %v3358 = vmul.f32 %v3356, 1.442695
      %v3359 = vpow.pop %v3358
      %v3360 = vmul.f32 %v3357, 1.442695
      %v3361 = vpow.pop %v3360
      %v3362 = vadd.f32 %v3359, 1.0
      %v3363 = vadd.f32 %v3361, 1.0
      %v3364 = vrcp.pop %v3362
      %v3365 = vmul.f32 1.0, %v3364
      %v3366 = vrcp.pop %v3363
      %v3367 = vmul.f32 1.0, %v3366
      %3369 = vset.pattern.permute.xlu0 0
      %3370 = vperm.xlu0 %3369, %v3365
      %v3371 = vpop.permute.xlu0 %3370
      %3374 = vset.pattern.permute.xlu0 0
      %3375 = vperm.xlu0 %3374, %v3367
      %v3376 = vpop.permute.xlu0 %3375
      %v3378 = vmul.f32 %v3296, %v3371
      %v3379 = vmul.f32 %v3297, %v3371
      %v3380 = vmul.f32 %v3304, %v3376
      %v3381 = vmul.f32 %v3305, %v3376
      %3382 = vst [vmem:[%s393] sm:$0xff] %v3378
      %3383 = vst [vmem:[%s393 + $0x8] sm:$0xff] %v3379
      %3384 = vst [vmem:[%s393 + $0x10] sm:$0xff] %v3380
      %3385 = vst [vmem:[%s393 + $0x18] sm:$0xff] %v3381
      %v3386 = vadd.f32 %v3298, %v3299
      %3387 = vadd.xlane.f32.xlu0 %v3386
      %v3388 = vpop.xlane.xlu0 %3387
      %v3389 = vadd.f32 %v3306, %v3307
      %3390 = vadd.xlane.f32.xlu0 %v3389
      %v3391 = vpop.xlane.xlu0 %3390
      %v3392 = vmul.f32 %v3388, %v3318
      %v3393 = vmul.f32 %v3391, %v3318
      %v3394 = vld [vmem:[%s7] sm:$0xff]
      %v3395 = vld [vmem:[%s7 + $0x8] sm:$0xff]
      %v3396 = vmul.f32 %v3394, %v3392
      %v3397 = vmul.f32 %v3395, %v3393
      %v3398 = vsel %vm3325, %v3396, 0.0
      %v3399 = vsel %vm3325, %v3397, 0.0
      %v3400 = vadd.f32 %v3398, %v3399
      %v3401 = vrot.slane %v3400, 4
      %v3402 = vadd.f32 %v3400, %v3401
      %v3403 = vrot.slane %v3402, 2
      %v3404 = vadd.f32 %v3402, %v3403
      %v3405 = vrot.slane %v3404, 1
      %v3406 = vadd.f32 %v3404, %v3405
      %v3407 = vld [vmem:[%s8] sm:$0x1]
      %v3408 = vadd.f32 %v3406, %v3407
      %v3409 = vmax.f32 %v3408, 0.0
      %v3410 = vld [vmem:[%s9] sm:$0xff]
      %v3411 = vld [vmem:[%s9 + $0x8] sm:$0xff]
      %v3412 = vlaneseq
      %v3413 = vshrl.u32 %v3412, 7
      %v3414 = vsub.s32 0, %v3413
      %v3415 = vrot.slane %v3409, %v3414
      %v3416 = vmul.f32 %v3410, %v3415
      %v3417 = vmul.f32 %v3411, %v3415
      %v3418 = vsel %vm3325, %v3416, 0.0
      %3419 = vadd.xlane.f32.xlu0 %v3418
      %v3420 = vpop.xlane.xlu0 %3419
      %v3421 = vsel %vm3325, %v3417, 0.0
      %3422 = vadd.xlane.f32.xlu0 %v3421
      %v3423 = vpop.xlane.xlu0 %3422
      %v3424 = vld [vmem:[%s10] sm:$0xff]
      %v3425 = vld [vmem:[%s10 + $0x8] sm:$0xff]
      %v3426 = vadd.f32 %v3420, %v3424
      %v3427 = vadd.f32 %v3423, %v3425
      %v3428 = vxor.u32 %v3426, 2147483648
      %v3429 = vxor.u32 %v3427, 2147483648
      %v3430 = vmul.f32 %v3428, 1.442695
      %v3431 = vpow.pop %v3430
      %v3432 = vmul.f32 %v3429, 1.442695
      %v3433 = vpow.pop %v3432
      %v3434 = vadd.f32 %v3431, 1.0
      %v3435 = vadd.f32 %v3433, 1.0
      %v3436 = vrcp.pop %v3434
      %v3437 = vmul.f32 1.0, %v3436
      %v3438 = vrcp.pop %v3435
      %v3439 = vmul.f32 1.0, %v3438
      %3441 = vset.pattern.permute.xlu0 0
      %3442 = vperm.xlu0 %3441, %v3437
      %v3443 = vpop.permute.xlu0 %3442
      %3446 = vset.pattern.permute.xlu0 0
      %3447 = vperm.xlu0 %3446, %v3439
      %v3448 = vpop.permute.xlu0 %3447
      %v3450 = vmul.f32 %v3298, %v3443
      %v3451 = vmul.f32 %v3299, %v3443
      %v3452 = vmul.f32 %v3306, %v3448
      %v3453 = vmul.f32 %v3307, %v3448
      %s3454 = scalar_lea.vmem %s393, 32
      %3455 = vst [vmem:[%s3454] sm:$0xff] %v3450
      %3456 = vst [vmem:[%s3454 + $0x8] sm:$0xff] %v3451
      %3457 = vst [vmem:[%s3454 + $0x10] sm:$0xff] %v3452
      %3458 = vst [vmem:[%s3454 + $0x18] sm:$0xff] %v3453
      %v3459 = vadd.f32 %v3300, %v3301
      %3460 = vadd.xlane.f32.xlu0 %v3459
      %v3461 = vpop.xlane.xlu0 %3460
      %v3462 = vadd.f32 %v3308, %v3309
      %3463 = vadd.xlane.f32.xlu0 %v3462
      %v3464 = vpop.xlane.xlu0 %3463
      %v3465 = vmul.f32 %v3461, %v3318
      %v3466 = vmul.f32 %v3464, %v3318
      %v3467 = vld [vmem:[%s7] sm:$0xff]
      %v3468 = vld [vmem:[%s7 + $0x8] sm:$0xff]
      %v3469 = vmul.f32 %v3467, %v3465
      %v3470 = vmul.f32 %v3468, %v3466
      %v3471 = vsel %vm3325, %v3469, 0.0
      %v3472 = vsel %vm3325, %v3470, 0.0
      %v3473 = vadd.f32 %v3471, %v3472
      %v3474 = vrot.slane %v3473, 4
      %v3475 = vadd.f32 %v3473, %v3474
      %v3476 = vrot.slane %v3475, 2
      %v3477 = vadd.f32 %v3475, %v3476
      %v3478 = vrot.slane %v3477, 1
      %v3479 = vadd.f32 %v3477, %v3478
      %v3480 = vld [vmem:[%s8] sm:$0x1]
      %v3481 = vadd.f32 %v3479, %v3480
      %v3482 = vmax.f32 %v3481, 0.0
      %v3483 = vld [vmem:[%s9] sm:$0xff]
      %v3484 = vld [vmem:[%s9 + $0x8] sm:$0xff]
      %v3485 = vlaneseq
      %v3486 = vshrl.u32 %v3485, 7
      %v3487 = vsub.s32 0, %v3486
      %v3488 = vrot.slane %v3482, %v3487
      %v3489 = vmul.f32 %v3483, %v3488
      %v3490 = vmul.f32 %v3484, %v3488
      %v3491 = vsel %vm3325, %v3489, 0.0
      %3492 = vadd.xlane.f32.xlu0 %v3491
      %v3493 = vpop.xlane.xlu0 %3492
      %v3494 = vsel %vm3325, %v3490, 0.0
      %3495 = vadd.xlane.f32.xlu0 %v3494
      %v3496 = vpop.xlane.xlu0 %3495
      %v3497 = vld [vmem:[%s10] sm:$0xff]
      %v3498 = vld [vmem:[%s10 + $0x8] sm:$0xff]
      %v3499 = vadd.f32 %v3493, %v3497
      %v3500 = vadd.f32 %v3496, %v3498
      %v3501 = vxor.u32 %v3499, 2147483648
      %v3502 = vxor.u32 %v3500, 2147483648
      %v3503 = vmul.f32 %v3501, 1.442695
      %v3504 = vpow.pop %v3503
      %v3505 = vmul.f32 %v3502, 1.442695
      %v3506 = vpow.pop %v3505
      %v3507 = vadd.f32 %v3504, 1.0
      %v3508 = vadd.f32 %v3506, 1.0
      %v3509 = vrcp.pop %v3507
      %v3510 = vmul.f32 1.0, %v3509
      %v3511 = vrcp.pop %v3508
      %v3512 = vmul.f32 1.0, %v3511
      %3514 = vset.pattern.permute.xlu0 0
      %3515 = vperm.xlu0 %3514, %v3510
      %v3516 = vpop.permute.xlu0 %3515
      %3519 = vset.pattern.permute.xlu0 0
      %3520 = vperm.xlu0 %3519, %v3512
      %v3521 = vpop.permute.xlu0 %3520
      %v3523 = vmul.f32 %v3300, %v3516
      %v3524 = vmul.f32 %v3301, %v3516
      %v3525 = vmul.f32 %v3308, %v3521
      %v3526 = vmul.f32 %v3309, %v3521
      %s3527 = scalar_lea.vmem %s393, 64
      %3528 = vst [vmem:[%s3527] sm:$0xff] %v3523
      %3529 = vst [vmem:[%s3527 + $0x8] sm:$0xff] %v3524
      %3530 = vst [vmem:[%s3527 + $0x10] sm:$0xff] %v3525
      %3531 = vst [vmem:[%s3527 + $0x18] sm:$0xff] %v3526
      %v3532 = vadd.f32 %v3302, %v3303
      %3533 = vadd.xlane.f32.xlu0 %v3532
      %v3534 = vpop.xlane.xlu0 %3533
      %v3535 = vadd.f32 %v3310, %v3311
      %3536 = vadd.xlane.f32.xlu0 %v3535
      %v3537 = vpop.xlane.xlu0 %3536
      %v3538 = vmul.f32 %v3534, %v3318
      %v3539 = vmul.f32 %v3537, %v3318
      %v3540 = vld [vmem:[%s7] sm:$0xff]
      %v3541 = vld [vmem:[%s7 + $0x8] sm:$0xff]
      %v3542 = vmul.f32 %v3540, %v3538
      %v3543 = vmul.f32 %v3541, %v3539
      %v3544 = vsel %vm3325, %v3542, 0.0
      %v3545 = vsel %vm3325, %v3543, 0.0
      %v3546 = vadd.f32 %v3544, %v3545
      %v3547 = vrot.slane %v3546, 4
      %v3548 = vadd.f32 %v3546, %v3547
      %v3549 = vrot.slane %v3548, 2
      %v3550 = vadd.f32 %v3548, %v3549
      %v3551 = vrot.slane %v3550, 1
      %v3552 = vadd.f32 %v3550, %v3551
      %v3553 = vld [vmem:[%s8] sm:$0x1]
      %v3554 = vadd.f32 %v3552, %v3553
      %v3555 = vmax.f32 %v3554, 0.0
      %v3556 = vld [vmem:[%s9] sm:$0xff]
      %v3557 = vld [vmem:[%s9 + $0x8] sm:$0xff]
      %v3558 = vlaneseq
      %v3559 = vshrl.u32 %v3558, 7
      %v3560 = vsub.s32 0, %v3559
      %v3561 = vrot.slane %v3555, %v3560
      %v3562 = vmul.f32 %v3556, %v3561
      %v3563 = vmul.f32 %v3557, %v3561
      %v3564 = vsel %vm3325, %v3562, 0.0
      %3565 = vadd.xlane.f32.xlu0 %v3564
      %v3566 = vpop.xlane.xlu0 %3565
      %v3567 = vsel %vm3325, %v3563, 0.0
      %3568 = vadd.xlane.f32.xlu0 %v3567
      %v3569 = vpop.xlane.xlu0 %3568
      %v3570 = vld [vmem:[%s10] sm:$0xff]
      %v3571 = vld [vmem:[%s10 + $0x8] sm:$0xff]
      %v3572 = vadd.f32 %v3566, %v3570
      %v3573 = vadd.f32 %v3569, %v3571
      %v3574 = vxor.u32 %v3572, 2147483648
      %v3575 = vxor.u32 %v3573, 2147483648
      %v3576 = vmul.f32 %v3574, 1.442695
      %v3577 = vpow.pop %v3576
      %v3578 = vmul.f32 %v3575, 1.442695
      %v3579 = vpow.pop %v3578
      %v3580 = vadd.f32 %v3577, 1.0
      %v3581 = vadd.f32 %v3579, 1.0
      %v3582 = vrcp.pop %v3580
      %v3583 = vmul.f32 1.0, %v3582
      %v3584 = vrcp.pop %v3581
      %v3585 = vmul.f32 1.0, %v3584
      %3587 = vset.pattern.permute.xlu0 0
      %3588 = vperm.xlu0 %3587, %v3583
      %v3589 = vpop.permute.xlu0 %3588
      %3592 = vset.pattern.permute.xlu0 0
      %3593 = vperm.xlu0 %3592, %v3585
      %v3594 = vpop.permute.xlu0 %3593
      %v3596 = vmul.f32 %v3302, %v3589
      %v3597 = vmul.f32 %v3303, %v3589
      %v3598 = vmul.f32 %v3310, %v3594
      %v3599 = vmul.f32 %v3311, %v3594
      %s3600 = scalar_lea.vmem %s393, 96
      %3601 = vst [vmem:[%s3600] sm:$0xff] %v3596
      %3602 = vst [vmem:[%s3600 + $0x8] sm:$0xff] %v3597
      %3603 = vst [vmem:[%s3600 + $0x10] sm:$0xff] %v3598
      %3604 = vst [vmem:[%s3600 + $0x18] sm:$0xff] %v3599
      %s3605 = smul.u32 4, %s22
      %p3606 = scmp.lt.s32.totalorder %s3605, 7
      %s3607 = scalar_select %p3606, %s3605, 7
      %s3608 = smul.addr %s3607, 4
      %s3609 = smul.addr %s3608, 8
      %s3610 = scalar_lea.vmem %s11, %s3609
      // Predicated region
      $region65: #{middle_block_pallas.1} parent=63 // pred_check
        %p3611 = pneg %p276
      $region66: #{middle_block_pallas.1} parent=63 // pred_check_branch
        %3613 = sbr.rel (%p3611) target = $region68
      $region67: #{middle_block_pallas.1} parent=63 // pred_region
        %s3614 = smul.u32 4, %s22
      $region68: #{middle_block_pallas.1} parent=63 // pred_fallthru
        _
    $region64: #{middle_block_pallas.1} parent=5 // pred_fallthru
      _
    %p3615 = scmp.le.s32.totalorder 2, %s17
    // Predicated region
    $region69: #{middle_block_pallas.1} parent=5 // pred_check
      %p3616 = pneg %p3615
    $region70: #{middle_block_pallas.1} parent=5 // pred_check_branch
      %3618 = sbr.rel (%p3616) target = $region72
    $region71: #{middle_block_pallas.1} parent=5 // pred_region
      %s3619 = ssub.s32 %s17, 2
      // Predicated region
      $region73: #{middle_block_pallas.1} parent=71 // pred_check
        %p3620 = pneg %p282
      $region74: #{middle_block_pallas.1} parent=71 // pred_check_branch
        %3622 = sbr.rel (%p3620) target = $region76
      $region75: #{middle_block_pallas.1} parent=71 // pred_region
        %s3623 = smul.u32 4, %s23
        %p3624 = scmp.lt.s32.totalorder %s3623, 7
        %s3625 = scalar_select %p3624, %s3623, 7
        %s3626 = smul.addr %s3625, 4
        %s3627 = smul.addr %s3626, 8
        %s3628 = scalar_lea.vmem %s11, %s3627
      $region76: #{middle_block_pallas.1} parent=71 // pred_fallthru
        _
    $region72: #{middle_block_pallas.1} parent=5 // pred_fallthru
      _
  $region6: #{middle_block_pallas.1} parent=0 // loop_footer
    %s21 = sadd.s32 1, %s17
  $region7: #{middle_block_pallas.1} parent=0 // loop_footer_branch
    %16 = sbr.rel target = $region3
  $region8: #{middle_block_pallas.1} parent=0 // loop_exit
    _

</llo_original>
